<compile_context>
chip_gen: v7x
topology: tpu7x:2x2x1
jax: 0.10.0
libtpu: 0.0.40
codegen_flags: <defaults>
</compile_context>

<pallas_src>
import functools

import numpy as np
import jax
import jax.numpy as jnp
from jax.experimental import pallas as pl
from jax.experimental.pallas import tpu as pltpu


# ---------------------------------------------------------------------------
# Pallas kernels
# ---------------------------------------------------------------------------
def _conv_relu_pool_kernel(x_ref, b_ref, bias_ref, r_ref, sa_ref, sb_ref,
                           o_ref, *, lr):
    """Fused 5x5 conv (5 row-tap Toeplitz matmuls) + bias + ReLU + 2x2 maxpool
    + repack into the next stage's (zero padded) input layout.

    x_ref   : (Rin, Wp*C)   activation, rows=(n,hp), lanes=(wp,c)
    b_ref   : (5, Wp*C, O*W) bf16 Toeplitz-banded conv weights (one per row tap)
    bias_ref: (1, O*W)       bias broadcast along lanes (o major, w minor)
    r_ref   : (Rout, Lr-1)   0/1 row selector (pool anchor rows -> output rows)
    sa_ref  : (O*W, Cout)    0/1 lane selector picking (o, 2w')
    sb_ref  : (O*W, Cout)    0/1 lane selector picking (o, 2w'+1)
    o_ref   : (Rout, Cout)   pooled + repacked output
    """
    x = x_ref[...]                                    # f32 load
    taps = b_ref.shape[0]
    acc = jnp.zeros((lr, b_ref.shape[2]), jnp.float32)
    for di in range(taps):                            # unrolled at trace time
        a = x[di:di + lr, :].astype(jnp.bfloat16)     # row tap (sublane slice)
        acc = acc + jnp.dot(a, b_ref[di], preferred_element_type=jnp.float32)
    y = jnp.maximum(acc + bias_ref[...], 0.0)         # conv + bias + ReLU
    z = jnp.maximum(y[:-1, :], y[1:, :])              # max over the h-pair
    # max over the w-pair + stride-2 decimation + layout repack (0/1 matmuls)
    p = jnp.maximum(
        jnp.dot(z, sa_ref[...], preferred_element_type=jnp.float32),
        jnp.dot(z, sb_ref[...], preferred_element_type=jnp.float32))
    # anchor-row selection + repack (also inserts the next conv's zero pad rows)
    o_ref[...] = jnp.dot(r_ref[...], p, preferred_element_type=jnp.float32)


def _fc_kernel(x_ref, w1_ref, b1_ref, w2_ref, b2_ref, o_ref, *, n_batch):
    """Fused fc1 + bias (+ dropout-as-identity) + fc2 + bias.

    x_ref : (7*N, 56)       pooled conv2 activation, rows=(h', n), lanes=(o, w')
    w1_ref: (7, 56, 1000)   fc1 weights, pre-permuted per h' block, bf16
    w2_ref: (1000, 10)      fc2 weights, pre-transposed, bf16
    """
    x = x_ref[...]
    nblk = w1_ref.shape[0]
    acc = jnp.zeros((n_batch, w1_ref.shape[2]), jnp.float32)
    for h in range(nblk):                             # fc1 as 7 accumulating dots
        xs = x[h * n_batch:(h + 1) * n_batch, :].astype(jnp.bfloat16)
        acc = acc + jnp.dot(xs, w1_ref[h], preferred_element_type=jnp.float32)
    acc = acc + b1_ref[...]
    # TODO(synk): nn.Dropout() is stochastic in train mode; identity here (eval semantics).
    out = jnp.dot(acc.astype(jnp.bfloat16), w2_ref[...],
                  preferred_element_type=jnp.float32) + b2_ref[...]
    o_ref[...] = out


def conv_relu_pool_pallas(xp, b_toep, bias_row, r_sel, s_sel_a, s_sel_b):
    lr = r_sel.shape[1] + 1
    rout = r_sel.shape[0]
    cout = s_sel_a.shape[1]
    return pl.pallas_call(
        functools.partial(_conv_relu_pool_kernel, lr=lr),
        out_shape=jax.ShapeDtypeStruct((rout, cout), jnp.float32),
        in_specs=[pl.BlockSpec(memory_space=pltpu.MemorySpace.VMEM)] * 6,
        out_specs=pl.BlockSpec(memory_space=pltpu.MemorySpace.VMEM),
    )(xp, b_toep, bias_row, r_sel, s_sel_a, s_sel_b)


def fc_pallas(x, w1blk, b1, w2t, b2):
    n_batch = w1blk.shape[0] and x.shape[0] // w1blk.shape[0]
    return pl.pallas_call(
        functools.partial(_fc_kernel, n_batch=n_batch),
        out_shape=jax.ShapeDtypeStruct((n_batch, w2t.shape[1]), jnp.float32),
        in_specs=[pl.BlockSpec(memory_space=pltpu.MemorySpace.VMEM)] * 5,
        out_specs=pl.BlockSpec(memory_space=pltpu.MemorySpace.VMEM),
    )(x, w1blk, b1, w2t, b2)


# ---------------------------------------------------------------------------
# One-time (outside jit) preparation of kernel-ready operands
# ---------------------------------------------------------------------------
def _toeplitz_weights(w_oihw, w_out, wp):
    """B[di, wp*C + c, o*w_out + w] = w[o, c, di, wp - w] for 0 <= wp - w < 5."""
    o_ch, c_in, kh, kw = w_oihw.shape
    w_np = np.asarray(w_oihw, np.float32)
    band = np.zeros((kh, wp * c_in, o_ch * w_out), np.float32)
    for di in range(kh):
        for o in range(o_ch):
            for c in range(c_in):
                for w in range(w_out):
                    for dj in range(kw):
                        band[di, (w + dj) * c_in + c, o * w_out + w] = w_np[o, c, di, dj]
    return band


def prepare_params(params, batch):
    """Build Toeplitz conv bands, pooling/repack selection matrices and
    pre-permuted / pre-transposed / bf16-cast fc weights, outside jit."""
    n = batch
    hw1, hwp1, o1 = 28, 32, 4          # layer 1: 28x28, C=1, O=4
    hw2, hwp2, o2 = 14, 18, 8          # layer 2: 14x14, C=4, O=8
    hw3 = 7                            # pooled conv2 spatial size
    lr1 = n * hwp1 - 4                 # conv1 output rows (incl. junk rows)
    lr2 = n * hwp2 - 4                 # conv2 output rows

    # Layer 1: output goes straight into conv2's padded (N*18, 18*4) layout.
    r1 = np.zeros((n * hwp2, lr1 - 1), np.float32)
    for nn in range(n):
        for hq in range(hw2):
            r1[nn * hwp2 + hq + 2, nn * hwp1 + 2 * hq] = 1.0
    s1a = np.zeros((o1 * hw1, hwp2 * o1), np.float32)
    s1b = np.zeros_like(s1a)
    for o in range(o1):
        for wq in range(hw2):
            s1a[o * hw1 + 2 * wq, (wq + 2) * o1 + o] = 1.0
            s1b[o * hw1 + 2 * wq + 1, (wq + 2) * o1 + o] = 1.0

    # Layer 2: output rows (h', n), lanes (o, w') -- the fc kernel's layout.
    r2 = np.zeros((hw3 * n, lr2 - 1), np.float32)
    for hq in range(hw3):
        for nn in range(n):
            r2[hq * n + nn, nn * hwp2 + 2 * hq] = 1.0
    s2a = np.zeros((o2 * hw2, o2 * hw3), np.float32)
    s2b = np.zeros_like(s2a)
    for o in range(o2):
        for wq in range(hw3):
            s2a[o * hw2 + 2 * wq, o * hw3 + wq] = 1.0
            s2b[o * hw2 + 2 * wq + 1, o * hw3 + wq] = 1.0

    # fc1: pre-permute the (o, h', w') PyTorch-flatten input order into
    # per-h' blocks of (o*7 + w', feature); fc2: pre-transpose.
    fc1_w = np.asarray(params["fc1_w"], np.float32)            # (1000, 392)
    w1blk = fc1_w.reshape(1000, o2, hw3, hw3)                  # (f, o, h', w')
    w1blk = w1blk.transpose(2, 1, 3, 0).reshape(hw3, o2 * hw3, 1000)
    w2t = np.asarray(params["fc2_w"], np.float32).T            # (1000, 10)

    return {
        "b1": jnp.asarray(_toeplitz_weights(np.asarray(params["conv1_w"]), hw1, hwp1),
                          jnp.bfloat16),
        "bias1": jnp.asarray(np.repeat(np.asarray(params["conv1_b"], np.float32), hw1)[None, :]),
        "r1": jnp.asarray(r1), "s1a": jnp.asarray(s1a), "s1b": jnp.asarray(s1b),
        "b2": jnp.asarray(_toeplitz_weights(np.asarray(params["conv2_w"]), hw2, hwp2),
                          jnp.bfloat16),
        "bias2": jnp.asarray(np.repeat(np.asarray(params["conv2_b"], np.float32), hw2)[None, :]),
        "r2": jnp.asarray(r2), "s2a": jnp.asarray(s2a), "s2b": jnp.asarray(s2b),
        "w1blk": jnp.asarray(w1blk, jnp.bfloat16),
        "fb1": jnp.asarray(np.asarray(params["fc1_b"], np.float32)[None, :]),
        "w2t": jnp.asarray(w2t, jnp.bfloat16),
        "fb2": jnp.asarray(np.asarray(params["fc2_b"], np.float32)[None, :]),
    }


# ---------------------------------------------------------------------------
# Forward pass: 3 pallas_calls, no intermediate XLA relayouts
# ---------------------------------------------------------------------------
def convnet_forward(prep, x_nchw):
    n = x_nchw.shape[0]
    hwp1 = 32
    xp = jnp.pad(x_nchw[:, 0, :, :], ((0, 0), (2, 2), (2, 2)))   # (N, 32, 32)
    xp = xp.reshape(n * hwp1, hwp1)                              # rows=(n,hp), lanes=wp (C=1)
    a1 = conv_relu_pool_pallas(xp, prep["b1"], prep["bias1"],
                               prep["r1"], prep["s1a"], prep["s1b"])   # (N*18, 72)
    a2 = conv_relu_pool_pallas(a1, prep["b2"], prep["bias2"],
                               prep["r2"], prep["s2a"], prep["s2b"])   # (7N, 56)
    return fc_pallas(a2, prep["w1blk"], prep["fb1"], prep["w2t"], prep["fb2"])  # (N, 10)


# ---------------------------------------------------------------------------
# Parameter init (PyTorch layout) and pure-JAX reference
# ---------------------------------------------------------------------------
def init_params(key):
    ks = jax.random.split(key, 8)

    def rn(k, shape, scale):
        return jax.random.normal(k, shape, jnp.float32) * scale

    return {
        "conv1_w": rn(ks[0], (4, 1, 5, 5), 0.1),    # (O, I, KH, KW)
        "conv1_b": rn(ks[1], (4,), 0.1),
        "conv2_w": rn(ks[2], (8, 4, 5, 5), 0.05),
        "conv2_b": rn(ks[3], (8,), 0.05),
        "fc1_w":   rn(ks[4], (1000, 392), 0.02),    # (out, in) like nn.Linear
        "fc1_b":   rn(ks[5], (1000,), 0.02),
        "fc2_w":   rn(ks[6], (10, 1000), 0.02),
        "fc2_b":   rn(ks[7], (10,), 0.02),
    }


def reference_forward(params, x):
    def conv(x, w, b):
        y = jax.lax.conv_general_dilated(
            x, w, (1, 1), ((2, 2), (2, 2)),
            dimension_numbers=("NCHW", "OIHW", "NCHW"))
        return jax.nn.relu(y + b[None, :, None, None])

    def pool(x):
        return jax.lax.reduce_window(
            x, -jnp.inf, jax.lax.max, (1, 1, 2, 2), (1, 1, 2, 2), "VALID")

    out = pool(conv(x, params["conv1_w"], params["conv1_b"]))
    out = pool(conv(out, params["conv2_w"], params["conv2_b"]))
    out = out.reshape(out.shape[0], -1)
    out = out @ params["fc1_w"].T + params["fc1_b"]
    out = out @ params["fc2_w"].T + params["fc2_b"]
    return out


if __name__ == "__main__":
    key = jax.random.PRNGKey(0)
    pkey, xkey = jax.random.split(key)
    params = init_params(pkey)
    x = jax.random.normal(xkey, (2, 1, 28, 28), jnp.float32)   # MNIST-shaped input

    prep = prepare_params(params, batch=x.shape[0])            # one-time, outside jit

    fwd = jax.jit(convnet_forward)
    out = fwd(prep, x)
    jax.block_until_ready(out)

    assert out.shape == (2, 10), out.shape
    ref = reference_forward(params, x)
    max_err = float(jnp.max(jnp.abs(out - ref)))
    assert jnp.allclose(out, ref, rtol=2e-3, atol=2e-2), max_err

    print("KERNEL_OK")
</pallas_src>

<mosaic_0001>
module attributes {stable_mosaic.version = 11 : i64} {
  func.func @_conv_relu_pool_kernel(%arg0: memref<64x32xf32, #tpu.memory_space<vmem>>, %arg1: memref<5x32x112xbf16, #tpu.memory_space<vmem>>, %arg2: memref<1x112xf32, #tpu.memory_space<vmem>>, %arg3: memref<36x59xf32, #tpu.memory_space<vmem>>, %arg4: memref<112x72xf32, #tpu.memory_space<vmem>>, %arg5: memref<112x72xf32, #tpu.memory_space<vmem>>, %arg6: memref<36x72xf32, #tpu.memory_space<vmem>>) attributes {dimension_semantics = [], scalar_prefetch = 0 : i64, scratch_operands = 0 : i64, tpu.core_type = #tpu.core_type<tc>} {
    %c0 = arith.constant 0 : index
    %c0_0 = arith.constant 0 : index
    %0 = vector.load %arg0[%c0, %c0_0] : memref<64x32xf32, #tpu.memory_space<vmem>>, vector<64x32xf32>
    %cst = arith.constant 0.000000e+00 : f32
    %1 = vector.broadcast %cst : f32 to vector<60x112xf32>
    %2 = vector.extract_strided_slice %0 {offsets = [0, 0], sizes = [60, 32], strides = [1, 1]} : vector<64x32xf32> to vector<60x32xf32>
    %3 = arith.truncf %2 : vector<60x32xf32> to vector<60x32xbf16>
    %c0_1 = arith.constant 0 : index
    %c0_2 = arith.constant 0 : index
    %c0_3 = arith.constant 0 : index
    %4 = vector.load %arg1[%c0_1, %c0_2, %c0_3] : memref<5x32x112xbf16, #tpu.memory_space<vmem>>, vector<1x32x112xbf16>
    %5 = vector.shape_cast %4 : vector<1x32x112xbf16> to vector<32x112xbf16>
    %cst_4 = arith.constant dense<0.000000e+00> : vector<60x112xf32>
    %6 = tpu.matmul %3, %5, %cst_4 {dimension_numbers = #tpu.dot_dimension_numbers<[1], [0], [0], [1], [0, 0, 1, 1], [], []>} : vector<60x32xbf16>, vector<32x112xbf16>, vector<60x112xf32> -> vector<60x112xf32>
    %7 = arith.addf %1, %6 : vector<60x112xf32>
    %8 = vector.extract_strided_slice %0 {offsets = [1, 0], sizes = [60, 32], strides = [1, 1]} : vector<64x32xf32> to vector<60x32xf32>
    %9 = arith.truncf %8 : vector<60x32xf32> to vector<60x32xbf16>
    %c1 = arith.constant 1 : index
    %c0_5 = arith.constant 0 : index
    %c0_6 = arith.constant 0 : index
    %10 = vector.load %arg1[%c1, %c0_5, %c0_6] : memref<5x32x112xbf16, #tpu.memory_space<vmem>>, vector<1x32x112xbf16>
    %11 = vector.shape_cast %10 : vector<1x32x112xbf16> to vector<32x112xbf16>
    %cst_7 = arith.constant dense<0.000000e+00> : vector<60x112xf32>
    %12 = tpu.matmul %9, %11, %cst_7 {dimension_numbers = #tpu.dot_dimension_numbers<[1], [0], [0], [1], [0, 0, 1, 1], [], []>} : vector<60x32xbf16>, vector<32x112xbf16>, vector<60x112xf32> -> vector<60x112xf32>
    %13 = arith.addf %7, %12 : vector<60x112xf32>
    %14 = vector.extract_strided_slice %0 {offsets = [2, 0], sizes = [60, 32], strides = [1, 1]} : vector<64x32xf32> to vector<60x32xf32>
    %15 = arith.truncf %14 : vector<60x32xf32> to vector<60x32xbf16>
    %c2 = arith.constant 2 : index
    %c0_8 = arith.constant 0 : index
    %c0_9 = arith.constant 0 : index
    %16 = vector.load %arg1[%c2, %c0_8, %c0_9] : memref<5x32x112xbf16, #tpu.memory_space<vmem>>, vector<1x32x112xbf16>
    %17 = vector.shape_cast %16 : vector<1x32x112xbf16> to vector<32x112xbf16>
    %cst_10 = arith.constant dense<0.000000e+00> : vector<60x112xf32>
    %18 = tpu.matmul %15, %17, %cst_10 {dimension_numbers = #tpu.dot_dimension_numbers<[1], [0], [0], [1], [0, 0, 1, 1], [], []>} : vector<60x32xbf16>, vector<32x112xbf16>, vector<60x112xf32> -> vector<60x112xf32>
    %19 = arith.addf %13, %18 : vector<60x112xf32>
    %20 = vector.extract_strided_slice %0 {offsets = [3, 0], sizes = [60, 32], strides = [1, 1]} : vector<64x32xf32> to vector<60x32xf32>
    %21 = arith.truncf %20 : vector<60x32xf32> to vector<60x32xbf16>
    %c3 = arith.constant 3 : index
    %c0_11 = arith.constant 0 : index
    %c0_12 = arith.constant 0 : index
    %22 = vector.load %arg1[%c3, %c0_11, %c0_12] : memref<5x32x112xbf16, #tpu.memory_space<vmem>>, vector<1x32x112xbf16>
    %23 = vector.shape_cast %22 : vector<1x32x112xbf16> to vector<32x112xbf16>
    %cst_13 = arith.constant dense<0.000000e+00> : vector<60x112xf32>
    %24 = tpu.matmul %21, %23, %cst_13 {dimension_numbers = #tpu.dot_dimension_numbers<[1], [0], [0], [1], [0, 0, 1, 1], [], []>} : vector<60x32xbf16>, vector<32x112xbf16>, vector<60x112xf32> -> vector<60x112xf32>
    %25 = arith.addf %19, %24 : vector<60x112xf32>
    %26 = vector.extract_strided_slice %0 {offsets = [4, 0], sizes = [60, 32], strides = [1, 1]} : vector<64x32xf32> to vector<60x32xf32>
    %27 = arith.truncf %26 : vector<60x32xf32> to vector<60x32xbf16>
    %c4 = arith.constant 4 : index
    %c0_14 = arith.constant 0 : index
    %c0_15 = arith.constant 0 : index
    %28 = vector.load %arg1[%c4, %c0_14, %c0_15] : memref<5x32x112xbf16, #tpu.memory_space<vmem>>, vector<1x32x112xbf16>
    %29 = vector.shape_cast %28 : vector<1x32x112xbf16> to vector<32x112xbf16>
    %cst_16 = arith.constant dense<0.000000e+00> : vector<60x112xf32>
    %30 = tpu.matmul %27, %29, %cst_16 {dimension_numbers = #tpu.dot_dimension_numbers<[1], [0], [0], [1], [0, 0, 1, 1], [], []>} : vector<60x32xbf16>, vector<32x112xbf16>, vector<60x112xf32> -> vector<60x112xf32>
    %31 = arith.addf %25, %30 : vector<60x112xf32>
    %c0_17 = arith.constant 0 : index
    %c0_18 = arith.constant 0 : index
    %32 = vector.load %arg2[%c0_17, %c0_18] : memref<1x112xf32, #tpu.memory_space<vmem>>, vector<1x112xf32>
    %33 = vector.broadcast %32 : vector<1x112xf32> to vector<60x112xf32>
    %34 = arith.addf %31, %33 : vector<60x112xf32>
    %cst_19 = arith.constant 0.000000e+00 : f32
    %35 = vector.broadcast %cst_19 : f32 to vector<60x112xf32>
    %36 = arith.maximumf %34, %35 : vector<60x112xf32>
    %37 = vector.extract_strided_slice %36 {offsets = [0, 0], sizes = [59, 112], strides = [1, 1]} : vector<60x112xf32> to vector<59x112xf32>
    %38 = vector.extract_strided_slice %36 {offsets = [1, 0], sizes = [59, 112], strides = [1, 1]} : vector<60x112xf32> to vector<59x112xf32>
    %39 = arith.maximumf %37, %38 : vector<59x112xf32>
    %c0_20 = arith.constant 0 : index
    %c0_21 = arith.constant 0 : index
    %40 = vector.load %arg4[%c0_20, %c0_21] : memref<112x72xf32, #tpu.memory_space<vmem>>, vector<112x72xf32>
    %cst_22 = arith.constant dense<0.000000e+00> : vector<59x72xf32>
    %41 = tpu.matmul %39, %40, %cst_22 {dimension_numbers = #tpu.dot_dimension_numbers<[1], [0], [0], [1], [0, 0, 1, 1], [], []>} : vector<59x112xf32>, vector<112x72xf32>, vector<59x72xf32> -> vector<59x72xf32>
    %c0_23 = arith.constant 0 : index
    %c0_24 = arith.constant 0 : index
    %42 = vector.load %arg5[%c0_23, %c0_24] : memref<112x72xf32, #tpu.memory_space<vmem>>, vector<112x72xf32>
    %cst_25 = arith.constant dense<0.000000e+00> : vector<59x72xf32>
    %43 = tpu.matmul %39, %42, %cst_25 {dimension_numbers = #tpu.dot_dimension_numbers<[1], [0], [0], [1], [0, 0, 1, 1], [], []>} : vector<59x112xf32>, vector<112x72xf32>, vector<59x72xf32> -> vector<59x72xf32>
    %44 = arith.maximumf %41, %43 : vector<59x72xf32>
    %c0_26 = arith.constant 0 : index
    %c0_27 = arith.constant 0 : index
    %45 = vector.load %arg3[%c0_26, %c0_27] : memref<36x59xf32, #tpu.memory_space<vmem>>, vector<36x59xf32>
    %cst_28 = arith.constant dense<0.000000e+00> : vector<36x72xf32>
    %46 = tpu.matmul %45, %44, %cst_28 {dimension_numbers = #tpu.dot_dimension_numbers<[1], [0], [0], [1], [0, 0, 1, 1], [], []>} : vector<36x59xf32>, vector<59x72xf32>, vector<36x72xf32> -> vector<36x72xf32>
    %c0_29 = arith.constant 0 : index
    %c0_30 = arith.constant 0 : index
    %47 = vector.load %arg6[%c0_29, %c0_30] : memref<36x72xf32, #tpu.memory_space<vmem>>, vector<36x72xf32>
    tpu.vector_store %arg6[%c0_29, %c0_30], %46 {strides = array<i32>} : memref<36x72xf32, #tpu.memory_space<vmem>>, vector<36x72xf32>,
    return
  }
}

module attributes {stable_mosaic.version = 11 : i64} {
  func.func @_conv_relu_pool_kernel(%arg0: memref<36x72xf32, #tpu.memory_space<vmem>>, %arg1: memref<5x72x112xbf16, #tpu.memory_space<vmem>>, %arg2: memref<1x112xf32, #tpu.memory_space<vmem>>, %arg3: memref<14x31xf32, #tpu.memory_space<vmem>>, %arg4: memref<112x56xf32, #tpu.memory_space<vmem>>, %arg5: memref<112x56xf32, #tpu.memory_space<vmem>>, %arg6: memref<14x56xf32, #tpu.memory_space<vmem>>) attributes {dimension_semantics = [], scalar_prefetch = 0 : i64, scratch_operands = 0 : i64, tpu.core_type = #tpu.core_type<tc>} {
    %c0 = arith.constant 0 : index
    %c0_0 = arith.constant 0 : index
    %0 = vector.load %arg0[%c0, %c0_0] : memref<36x72xf32, #tpu.memory_space<vmem>>, vector<36x72xf32>
    %cst = arith.constant 0.000000e+00 : f32
    %1 = vector.broadcast %cst : f32 to vector<32x112xf32>
    %2 = vector.extract_strided_slice %0 {offsets = [0, 0], sizes = [32, 72], strides = [1, 1]} : vector<36x72xf32> to vector<32x72xf32>
    %3 = arith.truncf %2 : vector<32x72xf32> to vector<32x72xbf16>
    %c0_1 = arith.constant 0 : index
    %c0_2 = arith.constant 0 : index
    %c0_3 = arith.constant 0 : index
    %4 = vector.load %arg1[%c0_1, %c0_2, %c0_3] : memref<5x72x112xbf16, #tpu.memory_space<vmem>>, vector<1x72x112xbf16>
    %5 = vector.shape_cast %4 : vector<1x72x112xbf16> to vector<72x112xbf16>
    %cst_4 = arith.constant dense<0.000000e+00> : vector<32x112xf32>
    %6 = tpu.matmul %3, %5, %cst_4 {dimension_numbers = #tpu.dot_dimension_numbers<[1], [0], [0], [1], [0, 0, 1, 1], [], []>} : vector<32x72xbf16>, vector<72x112xbf16>, vector<32x112xf32> -> vector<32x112xf32>
    %7 = arith.addf %1, %6 : vector<32x112xf32>
    %8 = vector.extract_strided_slice %0 {offsets = [1, 0], sizes = [32, 72], strides = [1, 1]} : vector<36x72xf32> to vector<32x72xf32>
    %9 = arith.truncf %8 : vector<32x72xf32> to vector<32x72xbf16>
    %c1 = arith.constant 1 : index
    %c0_5 = arith.constant 0 : index
    %c0_6 = arith.constant 0 : index
    %10 = vector.load %arg1[%c1, %c0_5, %c0_6] : memref<5x72x112xbf16, #tpu.memory_space<vmem>>, vector<1x72x112xbf16>
    %11 = vector.shape_cast %10 : vector<1x72x112xbf16> to vector<72x112xbf16>
    %cst_7 = arith.constant dense<0.000000e+00> : vector<32x112xf32>
    %12 = tpu.matmul %9, %11, %cst_7 {dimension_numbers = #tpu.dot_dimension_numbers<[1], [0], [0], [1], [0, 0, 1, 1], [], []>} : vector<32x72xbf16>, vector<72x112xbf16>, vector<32x112xf32> -> vector<32x112xf32>
    %13 = arith.addf %7, %12 : vector<32x112xf32>
    %14 = vector.extract_strided_slice %0 {offsets = [2, 0], sizes = [32, 72], strides = [1, 1]} : vector<36x72xf32> to vector<32x72xf32>
    %15 = arith.truncf %14 : vector<32x72xf32> to vector<32x72xbf16>
    %c2 = arith.constant 2 : index
    %c0_8 = arith.constant 0 : index
    %c0_9 = arith.constant 0 : index
    %16 = vector.load %arg1[%c2, %c0_8, %c0_9] : memref<5x72x112xbf16, #tpu.memory_space<vmem>>, vector<1x72x112xbf16>
    %17 = vector.shape_cast %16 : vector<1x72x112xbf16> to vector<72x112xbf16>
    %cst_10 = arith.constant dense<0.000000e+00> : vector<32x112xf32>
    %18 = tpu.matmul %15, %17, %cst_10 {dimension_numbers = #tpu.dot_dimension_numbers<[1], [0], [0], [1], [0, 0, 1, 1], [], []>} : vector<32x72xbf16>, vector<72x112xbf16>, vector<32x112xf32> -> vector<32x112xf32>
    %19 = arith.addf %13, %18 : vector<32x112xf32>
    %20 = vector.extract_strided_slice %0 {offsets = [3, 0], sizes = [32, 72], strides = [1, 1]} : vector<36x72xf32> to vector<32x72xf32>
    %21 = arith.truncf %20 : vector<32x72xf32> to vector<32x72xbf16>
    %c3 = arith.constant 3 : index
    %c0_11 = arith.constant 0 : index
    %c0_12 = arith.constant 0 : index
    %22 = vector.load %arg1[%c3, %c0_11, %c0_12] : memref<5x72x112xbf16, #tpu.memory_space<vmem>>, vector<1x72x112xbf16>
    %23 = vector.shape_cast %22 : vector<1x72x112xbf16> to vector<72x112xbf16>
    %cst_13 = arith.constant dense<0.000000e+00> : vector<32x112xf32>
    %24 = tpu.matmul %21, %23, %cst_13 {dimension_numbers = #tpu.dot_dimension_numbers<[1], [0], [0], [1], [0, 0, 1, 1], [], []>} : vector<32x72xbf16>, vector<72x112xbf16>, vector<32x112xf32> -> vector<32x112xf32>
    %25 = arith.addf %19, %24 : vector<32x112xf32>
    %26 = vector.extract_strided_slice %0 {offsets = [4, 0], sizes = [32, 72], strides = [1, 1]} : vector<36x72xf32> to vector<32x72xf32>
    %27 = arith.truncf %26 : vector<32x72xf32> to vector<32x72xbf16>
    %c4 = arith.constant 4 : index
    %c0_14 = arith.constant 0 : index
    %c0_15 = arith.constant 0 : index
    %28 = vector.load %arg1[%c4, %c0_14, %c0_15] : memref<5x72x112xbf16, #tpu.memory_space<vmem>>, vector<1x72x112xbf16>
    %29 = vector.shape_cast %28 : vector<1x72x112xbf16> to vector<72x112xbf16>
    %cst_16 = arith.constant dense<0.000000e+00> : vector<32x112xf32>
    %30 = tpu.matmul %27, %29, %cst_16 {dimension_numbers = #tpu.dot_dimension_numbers<[1], [0], [0], [1], [0, 0, 1, 1], [], []>} : vector<32x72xbf16>, vector<72x112xbf16>, vector<32x112xf32> -> vector<32x112xf32>
    %31 = arith.addf %25, %30 : vector<32x112xf32>
    %c0_17 = arith.constant 0 : index
    %c0_18 = arith.constant 0 : index
    %32 = vector.load %arg2[%c0_17, %c0_18] : memref<1x112xf32, #tpu.memory_space<vmem>>, vector<1x112xf32>
    %33 = vector.broadcast %32 : vector<1x112xf32> to vector<32x112xf32>
    %34 = arith.addf %31, %33 : vector<32x112xf32>
    %cst_19 = arith.constant 0.000000e+00 : f32
    %35 = vector.broadcast %cst_19 : f32 to vector<32x112xf32>
    %36 = arith.maximumf %34, %35 : vector<32x112xf32>
    %37 = vector.extract_strided_slice %36 {offsets = [0, 0], sizes = [31, 112], strides = [1, 1]} : vector<32x112xf32> to vector<31x112xf32>
    %38 = vector.extract_strided_slice %36 {offsets = [1, 0], sizes = [31, 112], strides = [1, 1]} : vector<32x112xf32> to vector<31x112xf32>
    %39 = arith.maximumf %37, %38 : vector<31x112xf32>
    %c0_20 = arith.constant 0 : index
    %c0_21 = arith.constant 0 : index
    %40 = vector.load %arg4[%c0_20, %c0_21] : memref<112x56xf32, #tpu.memory_space<vmem>>, vector<112x56xf32>
    %cst_22 = arith.constant dense<0.000000e+00> : vector<31x56xf32>
    %41 = tpu.matmul %39, %40, %cst_22 {dimension_numbers = #tpu.dot_dimension_numbers<[1], [0], [0], [1], [0, 0, 1, 1], [], []>} : vector<31x112xf32>, vector<112x56xf32>, vector<31x56xf32> -> vector<31x56xf32>
    %c0_23 = arith.constant 0 : index
    %c0_24 = arith.constant 0 : index
    %42 = vector.load %arg5[%c0_23, %c0_24] : memref<112x56xf32, #tpu.memory_space<vmem>>, vector<112x56xf32>
    %cst_25 = arith.constant dense<0.000000e+00> : vector<31x56xf32>
    %43 = tpu.matmul %39, %42, %cst_25 {dimension_numbers = #tpu.dot_dimension_numbers<[1], [0], [0], [1], [0, 0, 1, 1], [], []>} : vector<31x112xf32>, vector<112x56xf32>, vector<31x56xf32> -> vector<31x56xf32>
    %44 = arith.maximumf %41, %43 : vector<31x56xf32>
    %c0_26 = arith.constant 0 : index
    %c0_27 = arith.constant 0 : index
    %45 = vector.load %arg3[%c0_26, %c0_27] : memref<14x31xf32, #tpu.memory_space<vmem>>, vector<14x31xf32>
    %cst_28 = arith.constant dense<0.000000e+00> : vector<14x56xf32>
    %46 = tpu.matmul %45, %44, %cst_28 {dimension_numbers = #tpu.dot_dimension_numbers<[1], [0], [0], [1], [0, 0, 1, 1], [], []>} : vector<14x31xf32>, vector<31x56xf32>, vector<14x56xf32> -> vector<14x56xf32>
    %c0_29 = arith.constant 0 : index
    %c0_30 = arith.constant 0 : index
    %47 = vector.load %arg6[%c0_29, %c0_30] : memref<14x56xf32, #tpu.memory_space<vmem>>, vector<14x56xf32>
    tpu.vector_store %arg6[%c0_29, %c0_30], %46 {strides = array<i32>} : memref<14x56xf32, #tpu.memory_space<vmem>>, vector<14x56xf32>,
    return
  }
}

module attributes {stable_mosaic.version = 11 : i64} {
  func.func @_fc_kernel(%arg0: memref<14x56xf32, #tpu.memory_space<vmem>>, %arg1: memref<7x56x1000xbf16, #tpu.memory_space<vmem>>, %arg2: memref<1x1000xf32, #tpu.memory_space<vmem>>, %arg3: memref<1000x10xbf16, #tpu.memory_space<vmem>>, %arg4: memref<1x10xf32, #tpu.memory_space<vmem>>, %arg5: memref<2x10xf32, #tpu.memory_space<vmem>>) attributes {dimension_semantics = [], scalar_prefetch = 0 : i64, scratch_operands = 0 : i64, tpu.core_type = #tpu.core_type<tc>} {
    %c0 = arith.constant 0 : index
    %c0_0 = arith.constant 0 : index
    %0 = vector.load %arg0[%c0, %c0_0] : memref<14x56xf32, #tpu.memory_space<vmem>>, vector<14x56xf32>
    %cst = arith.constant 0.000000e+00 : f32
    %1 = vector.broadcast %cst : f32 to vector<2x1000xf32>
    %2 = vector.extract_strided_slice %0 {offsets = [0, 0], sizes = [2, 56], strides = [1, 1]} : vector<14x56xf32> to vector<2x56xf32>
    %3 = arith.truncf %2 : vector<2x56xf32> to vector<2x56xbf16>
    %c0_1 = arith.constant 0 : index
    %c0_2 = arith.constant 0 : index
    %c0_3 = arith.constant 0 : index
    %4 = vector.load %arg1[%c0_1, %c0_2, %c0_3] : memref<7x56x1000xbf16, #tpu.memory_space<vmem>>, vector<1x56x1000xbf16>
    %5 = vector.shape_cast %4 : vector<1x56x1000xbf16> to vector<56x1000xbf16>
    %cst_4 = arith.constant dense<0.000000e+00> : vector<2x1000xf32>
    %6 = tpu.matmul %3, %5, %cst_4 {dimension_numbers = #tpu.dot_dimension_numbers<[1], [0], [0], [1], [0, 0, 1, 1], [], []>} : vector<2x56xbf16>, vector<56x1000xbf16>, vector<2x1000xf32> -> vector<2x1000xf32>
    %7 = arith.addf %1, %6 : vector<2x1000xf32>
    %8 = vector.extract_strided_slice %0 {offsets = [2, 0], sizes = [2, 56], strides = [1, 1]} : vector<14x56xf32> to vector<2x56xf32>
    %9 = arith.truncf %8 : vector<2x56xf32> to vector<2x56xbf16>
    %c1 = arith.constant 1 : index
    %c0_5 = arith.constant 0 : index
    %c0_6 = arith.constant 0 : index
    %10 = vector.load %arg1[%c1, %c0_5, %c0_6] : memref<7x56x1000xbf16, #tpu.memory_space<vmem>>, vector<1x56x1000xbf16>
    %11 = vector.shape_cast %10 : vector<1x56x1000xbf16> to vector<56x1000xbf16>
    %cst_7 = arith.constant dense<0.000000e+00> : vector<2x1000xf32>
    %12 = tpu.matmul %9, %11, %cst_7 {dimension_numbers = #tpu.dot_dimension_numbers<[1], [0], [0], [1], [0, 0, 1, 1], [], []>} : vector<2x56xbf16>, vector<56x1000xbf16>, vector<2x1000xf32> -> vector<2x1000xf32>
    %13 = arith.addf %7, %12 : vector<2x1000xf32>
    %14 = vector.extract_strided_slice %0 {offsets = [4, 0], sizes = [2, 56], strides = [1, 1]} : vector<14x56xf32> to vector<2x56xf32>
    %15 = arith.truncf %14 : vector<2x56xf32> to vector<2x56xbf16>
    %c2 = arith.constant 2 : index
    %c0_8 = arith.constant 0 : index
    %c0_9 = arith.constant 0 : index
    %16 = vector.load %arg1[%c2, %c0_8, %c0_9] : memref<7x56x1000xbf16, #tpu.memory_space<vmem>>, vector<1x56x1000xbf16>
    %17 = vector.shape_cast %16 : vector<1x56x1000xbf16> to vector<56x1000xbf16>
    %cst_10 = arith.constant dense<0.000000e+00> : vector<2x1000xf32>
    %18 = tpu.matmul %15, %17, %cst_10 {dimension_numbers = #tpu.dot_dimension_numbers<[1], [0], [0], [1], [0, 0, 1, 1], [], []>} : vector<2x56xbf16>, vector<56x1000xbf16>, vector<2x1000xf32> -> vector<2x1000xf32>
    %19 = arith.addf %13, %18 : vector<2x1000xf32>
    %20 = vector.extract_strided_slice %0 {offsets = [6, 0], sizes = [2, 56], strides = [1, 1]} : vector<14x56xf32> to vector<2x56xf32>
    %21 = arith.truncf %20 : vector<2x56xf32> to vector<2x56xbf16>
    %c3 = arith.constant 3 : index
    %c0_11 = arith.constant 0 : index
    %c0_12 = arith.constant 0 : index
    %22 = vector.load %arg1[%c3, %c0_11, %c0_12] : memref<7x56x1000xbf16, #tpu.memory_space<vmem>>, vector<1x56x1000xbf16>
    %23 = vector.shape_cast %22 : vector<1x56x1000xbf16> to vector<56x1000xbf16>
    %cst_13 = arith.constant dense<0.000000e+00> : vector<2x1000xf32>
    %24 = tpu.matmul %21, %23, %cst_13 {dimension_numbers = #tpu.dot_dimension_numbers<[1], [0], [0], [1], [0, 0, 1, 1], [], []>} : vector<2x56xbf16>, vector<56x1000xbf16>, vector<2x1000xf32> -> vector<2x1000xf32>
    %25 = arith.addf %19, %24 : vector<2x1000xf32>
    %26 = vector.extract_strided_slice %0 {offsets = [8, 0], sizes = [2, 56], strides = [1, 1]} : vector<14x56xf32> to vector<2x56xf32>
    %27 = arith.truncf %26 : vector<2x56xf32> to vector<2x56xbf16>
    %c4 = arith.constant 4 : index
    %c0_14 = arith.constant 0 : index
    %c0_15 = arith.constant 0 : index
    %28 = vector.load %arg1[%c4, %c0_14, %c0_15] : memref<7x56x1000xbf16, #tpu.memory_space<vmem>>, vector<1x56x1000xbf16>
    %29 = vector.shape_cast %28 : vector<1x56x1000xbf16> to vector<56x1000xbf16>
    %cst_16 = arith.constant dense<0.000000e+00> : vector<2x1000xf32>
    %30 = tpu.matmul %27, %29, %cst_16 {dimension_numbers = #tpu.dot_dimension_numbers<[1], [0], [0], [1], [0, 0, 1, 1], [], []>} : vector<2x56xbf16>, vector<56x1000xbf16>, vector<2x1000xf32> -> vector<2x1000xf32>
    %31 = arith.addf %25, %30 : vector<2x1000xf32>
    %32 = vector.extract_strided_slice %0 {offsets = [10, 0], sizes = [2, 56], strides = [1, 1]} : vector<14x56xf32> to vector<2x56xf32>
    %33 = arith.truncf %32 : vector<2x56xf32> to vector<2x56xbf16>
    %c5 = arith.constant 5 : index
    %c0_17 = arith.constant 0 : index
    %c0_18 = arith.constant 0 : index
    %34 = vector.load %arg1[%c5, %c0_17, %c0_18] : memref<7x56x1000xbf16, #tpu.memory_space<vmem>>, vector<1x56x1000xbf16>
    %35 = vector.shape_cast %34 : vector<1x56x1000xbf16> to vector<56x1000xbf16>
    %cst_19 = arith.constant dense<0.000000e+00> : vector<2x1000xf32>
    %36 = tpu.matmul %33, %35, %cst_19 {dimension_numbers = #tpu.dot_dimension_numbers<[1], [0], [0], [1], [0, 0, 1, 1], [], []>} : vector<2x56xbf16>, vector<56x1000xbf16>, vector<2x1000xf32> -> vector<2x1000xf32>
    %37 = arith.addf %31, %36 : vector<2x1000xf32>
    %38 = vector.extract_strided_slice %0 {offsets = [12, 0], sizes = [2, 56], strides = [1, 1]} : vector<14x56xf32> to vector<2x56xf32>
    %39 = arith.truncf %38 : vector<2x56xf32> to vector<2x56xbf16>
    %c6 = arith.constant 6 : index
    %c0_20 = arith.constant 0 : index
    %c0_21 = arith.constant 0 : index
    %40 = vector.load %arg1[%c6, %c0_20, %c0_21] : memref<7x56x1000xbf16, #tpu.memory_space<vmem>>, vector<1x56x1000xbf16>
    %41 = vector.shape_cast %40 : vector<1x56x1000xbf16> to vector<56x1000xbf16>
    %cst_22 = arith.constant dense<0.000000e+00> : vector<2x1000xf32>
    %42 = tpu.matmul %39, %41, %cst_22 {dimension_numbers = #tpu.dot_dimension_numbers<[1], [0], [0], [1], [0, 0, 1, 1], [], []>} : vector<2x56xbf16>, vector<56x1000xbf16>, vector<2x1000xf32> -> vector<2x1000xf32>
    %43 = arith.addf %37, %42 : vector<2x1000xf32>
    %c0_23 = arith.constant 0 : index
    %c0_24 = arith.constant 0 : index
    %44 = vector.load %arg2[%c0_23, %c0_24] : memref<1x1000xf32, #tpu.memory_space<vmem>>, vector<1x1000xf32>
    %45 = vector.broadcast %44 : vector<1x1000xf32> to vector<2x1000xf32>
    %46 = arith.addf %43, %45 : vector<2x1000xf32>
    %47 = arith.truncf %46 : vector<2x1000xf32> to vector<2x1000xbf16>
    %c0_25 = arith.constant 0 : index
    %c0_26 = arith.constant 0 : index
    %48 = vector.load %arg3[%c0_25, %c0_26] : memref<1000x10xbf16, #tpu.memory_space<vmem>>, vector<1000x10xbf16>
    %cst_27 = arith.constant dense<0.000000e+00> : vector<2x10xf32>
    %49 = tpu.matmul %47, %48, %cst_27 {dimension_numbers = #tpu.dot_dimension_numbers<[1], [0], [0], [1], [0, 0, 1, 1], [], []>} : vector<2x1000xbf16>, vector<1000x10xbf16>, vector<2x10xf32> -> vector<2x10xf32>
    %c0_28 = arith.constant 0 : index
    %c0_29 = arith.constant 0 : index
    %50 = vector.load %arg4[%c0_28, %c0_29] : memref<1x10xf32, #tpu.memory_space<vmem>>, vector<1x10xf32>
    %51 = vector.broadcast %50 : vector<1x10xf32> to vector<2x10xf32>
    %52 = arith.addf %49, %51 : vector<2x10xf32>
    %c0_30 = arith.constant 0 : index
    %c0_31 = arith.constant 0 : index
    %53 = vector.load %arg5[%c0_30, %c0_31] : memref<2x10xf32, #tpu.memory_space<vmem>>, vector<2x10xf32>
    tpu.vector_store %arg5[%c0_30, %c0_31], %52 {strides = array<i32>} : memref<2x10xf32, #tpu.memory_space<vmem>>, vector<2x10xf32>,
    return
  }
}

</mosaic_0001>

<llo_original>
// kernel: convnet_forward.4
$region0: #{convnet_forward.4}
  #allocation0 [shape = 'u32[]', space=smem, size = 0x4, offset = 0x4, fixed_abs, tag = 'smem constant byte address 0x4 - core index']
  #allocation1 [shape = 'u32[144,128]{1,0:T(1,128)}', space=vmem, size = 0x12000, scoped, tag = 'internal scratch']
  %s0 = inlined_call_operand.vmem [shape: f32[36,72], index: 0, kind: input, shape index: {}]
  %s1 = inlined_call_operand.hbm [shape: bf16[5,72,112], index: 1, kind: input, shape index: {}]
  %s2 = inlined_call_operand.hbm [shape: f32[1,112], index: 2, kind: input, shape index: {}]
  %s3 = inlined_call_operand.hbm [shape: f32[14,31], index: 3, kind: input, shape index: {}]
  %s4 = inlined_call_operand.vmem [shape: f32[112,56], index: 4, kind: input, shape index: {}]
  %s5 = inlined_call_operand.vmem [shape: f32[112,56], index: 5, kind: input, shape index: {}]
  %s6 = inlined_call_operand.vmem [shape: f32[14,56], index: 6, kind: output, shape index: {}]
  %s7 = sld [smem:[#allocation0]]
  $region46: #{convnet_forward.4} parent=0
    _
  %s9 = ssub.s32 1, %s7
  %s10 = scalar_select 0, %s9, %s7
  $region1: #{convnet_forward.4} parent=0
    #allocation2 [shape = 'u8[92160]{0}', space=vmem, size = 0x16800, scoped, tag = 'input window, operand 1, single buffered']
    #allocation3 [shape = 's32[1]{0}', space=sflag, size = 0x4, scoped, tag = 'scoped memory for convnet_forward.4']
    #allocation4 [shape = 'u8[512]{0}', space=vmem, size = 0x400, scoped, tag = 'input window, operand 2, single buffered']
    #allocation5 [shape = 's32[1]{0}', space=sflag, size = 0x4, scoped, tag = 'scoped memory for convnet_forward.4']
    #allocation6 [shape = 'u8[8192]{0}', space=vmem, size = 0x2000, scoped, tag = 'input window, operand 3, single buffered']
    %11 = vsyncpa [#allocation3], 0
    %12 = vsyncpa [#allocation5], 0
    // Predicated region
    $region2: #{convnet_forward.4} parent=1 // pred_check
      _
    $region3: #{convnet_forward.4} parent=1 // pred_check_branch
      %14 = sbr.rel (0) target = $region5
    $region4: #{convnet_forward.4} parent=1 // pred_region
      _
    $region5: #{convnet_forward.4} parent=1 // pred_fallthru
      _
    // Predicated region
    $region6: #{convnet_forward.4} parent=1 // pred_check
      _
    $region7: #{convnet_forward.4} parent=1 // pred_check_branch
      %16 = sbr.rel (0) target = $region9
    $region8: #{convnet_forward.4} parent=1 // pred_region
      %s18 = ssub.s32 2880, 2880
      %19 = vsyncadd [#allocation3], %s18
      %s20 = sshll.u32 [#allocation2], 4
      %s21 = int_to_ptr.vmem [resolvable:$true] %s20
      %26 = dma.hbm_to_vmem [thread:$0]  %s1, 2880, %s21, [#allocation3], 64, 64, 4
    $region9: #{convnet_forward.4} parent=1 // pred_fallthru
      _
    // Predicated region
    $region10: #{convnet_forward.4} parent=1 // pred_check
      _
    $region11: #{convnet_forward.4} parent=1 // pred_check_branch
      %28 = sbr.rel (0) target = $region13
    $region12: #{convnet_forward.4} parent=1 // pred_region
      %s30 = ssub.s32 16, 16
      %31 = vsyncadd [#allocation5], %s30
      %s33 = sshll.u32 [#allocation4], 4
      %s34 = int_to_ptr.vmem [resolvable:$true] %s33
      %36 = dma.hbm_to_vmem [thread:$0]  %s2, 16, %s34, [#allocation5]
    $region13: #{convnet_forward.4} parent=1 // pred_fallthru
      _
    // Predicated region
    $region14: #{convnet_forward.4} parent=1 // pred_check
      _
    $region15: #{convnet_forward.4} parent=1 // pred_check_branch
      %38 = sbr.rel (0) target = $region17
    $region16: #{convnet_forward.4} parent=1 // pred_region
      %s40 = ssub.s32 256, 256
      %41 = vsyncadd [#allocation5], %s40
      %s42 = sshll.u32 [#allocation6], 4
      %s43 = int_to_ptr.vmem [resolvable:$true] %s42
      %48 = dma.hbm_to_vmem [thread:$0]  %s3, 256, %s43, [#allocation5], 128, 128, 8
    $region17: #{convnet_forward.4} parent=1 // pred_fallthru
      _
    // Predicated region
    $region18: #{convnet_forward.4} parent=1 // pred_check
      _
    $region19: #{convnet_forward.4} parent=1 // pred_check_branch
      %50 = sbr.rel (0) target = $region21
    $region20: #{convnet_forward.4} parent=1 // pred_region
      _
    $region21: #{convnet_forward.4} parent=1 // pred_fallthru
      _
    // Predicated region
    $region22: #{convnet_forward.4} parent=1 // pred_check
      _
    $region23: #{convnet_forward.4} parent=1 // pred_check_branch
      %52 = sbr.rel (0) target = $region25
    $region24: #{convnet_forward.4} parent=1 // pred_region
      _
    $region25: #{convnet_forward.4} parent=1 // pred_fallthru
      _
    // Predicated region
    $region26: #{convnet_forward.4} parent=1 // pred_check
      _
    $region27: #{convnet_forward.4} parent=1 // pred_check_branch
      %54 = sbr.rel (0) target = $region29
    $region28: #{convnet_forward.4} parent=1 // pred_region
      %55 = dma.done [#allocation3], 2880
    $region29: #{convnet_forward.4} parent=1 // pred_fallthru
      _
    // Predicated region
    $region30: #{convnet_forward.4} parent=1 // pred_check
      _
    $region31: #{convnet_forward.4} parent=1 // pred_check_branch
      %57 = sbr.rel (0) target = $region33
    $region32: #{convnet_forward.4} parent=1 // pred_region
      %58 = dma.done [#allocation5], 16
    $region33: #{convnet_forward.4} parent=1 // pred_fallthru
      _
    // Predicated region
    $region34: #{convnet_forward.4} parent=1 // pred_check
      _
    $region35: #{convnet_forward.4} parent=1 // pred_check_branch
      %60 = sbr.rel (0) target = $region37
    $region36: #{convnet_forward.4} parent=1 // pred_region
      %61 = dma.done [#allocation5], 256
    $region37: #{convnet_forward.4} parent=1 // pred_fallthru
      _
    %v63 = vld [vmem:[%s0] sm:$0xff]
    %v64 = vld [vmem:[%s0 + $0x8] sm:$0xff]
    %v65 = vld [vmem:[%s0 + $0x10] sm:$0xff]
    %v66 = vld [vmem:[%s0 + $0x18] sm:$0xff]
    %v67 = vld [vmem:[%s0 + $0x20] sm:$0xf]
    %v68 = vpack.c.bf16 %v64, %v63
    %v69 = vpack.c.bf16 %v66, %v65
    %v70 = vld [vmem:[#allocation2] sm:$0xf]
    %v71 = vld [vmem:[#allocation2 + $0x4] sm:$0xf]
    %v72 = vld [vmem:[#allocation2 + $0x8] sm:$0xf]
    %v73 = vld [vmem:[#allocation2 + $0xc] sm:$0xf]
    %v74 = vld [vmem:[#allocation2 + $0x10] sm:$0xf]
    %v75 = vld [vmem:[#allocation2 + $0x14] sm:$0xf]
    %v76 = vld [vmem:[#allocation2 + $0x18] sm:$0xf]
    %v77 = vld [vmem:[#allocation2 + $0x1c] sm:$0xf]
    %v78 = vld [vmem:[#allocation2 + $0x20] sm:$0xf]
    %v79 = vpack.c.bf16 %v67, %v67
    %s80 = scalar_lea.vmem [#allocation2], 36
    %v81 = vld [vmem:[%s80] sm:$0xf]
    %v82 = vld [vmem:[%s80 + $0x4] sm:$0xf]
    %v83 = vld [vmem:[%s80 + $0x8] sm:$0xf]
    %v84 = vld [vmem:[%s80 + $0xc] sm:$0xf]
    %v85 = vld [vmem:[%s80 + $0x10] sm:$0xf]
    %v86 = vld [vmem:[%s80 + $0x14] sm:$0xf]
    %v87 = vld [vmem:[%s80 + $0x18] sm:$0xf]
    %v88 = vld [vmem:[%s80 + $0x1c] sm:$0xf]
    %v89 = vld [vmem:[%s80 + $0x20] sm:$0xf]
    %vm90 = vsmask.f32 7424
    %v92 = vshrl.u32 %v68, 16
    %v94 = vshll.u32 %v68, 16
    %v96 = vrot.slane %v94, 1
    %v97 = vor.u32 %v92, %v96
    %v99 = vshll.u32 %v69, 16
    %v101 = vrot.slane %v99, 1
    %v102 = vsel %vm90, %v97, %v101
    %v103 = vshrl.u32 %v69, 16
    %v105 = vor.u32 %v103, %v101
    %v107 = vshll.u32 %v79, 16
    %v109 = vrot.slane %v107, 1
    %v110 = vsel %vm90, %v105, %v109
    %v120 = vunpack.c.l.b16 %v81
    %v121 = vunpack.c.l.b16 %v82
    %v122 = vunpack.c.l.b16 %v83
    %v123 = vunpack.c.l.b16 %v84
    %v124 = vunpack.c.l.b16 %v85
    %v125 = vunpack.c.l.b16 %v86
    %v126 = vunpack.c.l.b16 %v87
    %v127 = vunpack.c.l.b16 %v88
    %v128 = vunpack.c.l.b16 %v89
    %v129 = vpack.c.b16 %v121, %v120
    %v130 = vpack.c.b16 %v123, %v122
    %v131 = vpack.c.b16 %v125, %v124
    %v132 = vpack.c.b16 %v127, %v126
    %v133 = vpack.c.b16 %v128, %v128
    %vm138 = vcmask 588800
    %v140 = vsel %vm138, %v102, 0
    %v143 = vsel %vm138, %v110, 0
    %vm145 = vcmask 1043456
    %v147 = vsel %vm145, %v133, 0
    %149 = vmatprep.subr.bf16.mxu0 0
    %150 = vmatpush1.bf16.msra.mxu0 %v129
    %151 = vmatprep.subr.bf16.mxu0 0
    %152 = vmatpush1.bf16.msra.mxu0 %v130
    %153 = vmatprep.subr.bf16.mxu0 0
    %154 = vmatpush1.bf16.msra.mxu0 %v131
    %155 = vmatprep.subr.bf16.mxu0 0
    %156 = vmatpush1.bf16.msra.mxu0 %v132
    %157 = vmatprep.subr.bf16.mxu0 0
    %158 = vmatpush1.bf16.msra.mxu0 %v147
    %159 = vmatprep.subr.bf16.mxu0 0
    %160 = vmatpush1.bf16.msra.mxu0 0
    %161 = vmatprep.subr.bf16.mxu0 0
    %162 = vmatpush1.bf16.msra.mxu0 0
    %163 = vmatprep.subr.bf16.mxu0 0
    %164 = vmatpush1.bf16.msra.mxu0 0
    %165 = vmatprep.subr.bf16.mxu0 0
    %166 = vmatpush1.bf16.msra.mxu0 0
    %167 = vmatprep.subr.bf16.mxu0 0
    %168 = vmatpush1.bf16.msra.mxu0 0
    %169 = vmatprep.subr.bf16.mxu0 0
    %170 = vmatpush1.bf16.msra.mxu0 0
    %171 = vmatprep.subr.bf16.mxu0 0
    %172 = vmatpush1.bf16.msra.mxu0 0
    %173 = vmatprep.subr.bf16.mxu0 0
    %174 = vmatpush1.bf16.msra.mxu0 0
    %175 = vmatprep.subr.bf16.mxu0 0
    %176 = vmatpush1.bf16.msra.mxu0 0
    %177 = vmatprep.subr.bf16.mxu0 0
    %178 = vmatpush1.bf16.msra.mxu0 0
    %179 = vmatprep.subr.bf16.mxu0 0
    %180 = vmatpush1.bf16.msra.mxu0 0
    %181 = vmatprep.mubr.bf16.mxu0 0
    %182 = vmatmul.mubr.bf16.gmra.mrb[0].mxu0 %v140
    %v183 = vpop.f32.mrb[0].mxu0
    %v184 = vadd.f32 0.0, %v183
    %v185 = vpop.f32.mrb[0].mxu0
    %v186 = vpop.f32.mrb[0].mxu0
    %v187 = vadd.f32 0.0, %v186
    %v188 = vpop.f32.mrb[0].mxu0
    %189 = vmatprep.mubr.bf16.mxu0 0
    %190 = vmatmul.mubr.bf16.gmra.mrb[0].mxu0 %v143
    %v191 = vpop.f32.mrb[0].mxu0
    %v192 = vadd.f32 0.0, %v191
    %v193 = vpop.f32.mrb[0].mxu0
    %v194 = vpop.f32.mrb[0].mxu0
    %v195 = vadd.f32 0.0, %v194
    %v196 = vpop.f32.mrb[0].mxu0
    %197 = vdwg.mxu0
    %v207 = vunpack.c.l.b16 %v70
    %v208 = vunpack.c.l.b16 %v71
    %v209 = vunpack.c.l.b16 %v72
    %v210 = vunpack.c.l.b16 %v73
    %v211 = vunpack.c.l.b16 %v74
    %v212 = vunpack.c.l.b16 %v75
    %v213 = vunpack.c.l.b16 %v76
    %v214 = vunpack.c.l.b16 %v77
    %v215 = vunpack.c.l.b16 %v78
    %v216 = vpack.c.b16 %v208, %v207
    %v217 = vpack.c.b16 %v210, %v209
    %v218 = vpack.c.b16 %v212, %v211
    %v219 = vpack.c.b16 %v214, %v213
    %v220 = vpack.c.b16 %v215, %v215
    %v225 = vsel %vm138, %v68, 0
    %v227 = vsel %vm138, %v69, 0
    %v230 = vsel %vm145, %v220, 0
    %232 = vmatprep.subr.bf16.mxu0 0
    %233 = vmatpush1.bf16.msra.mxu0 %v216
    %234 = vmatprep.subr.bf16.mxu0 0
    %235 = vmatpush1.bf16.msra.mxu0 %v217
    %236 = vmatprep.subr.bf16.mxu0 0
    %237 = vmatpush1.bf16.msra.mxu0 %v218
    %238 = vmatprep.subr.bf16.mxu0 0
    %239 = vmatpush1.bf16.msra.mxu0 %v219
    %240 = vmatprep.subr.bf16.mxu0 0
    %241 = vmatpush1.bf16.msra.mxu0 %v230
    %242 = vmatprep.subr.bf16.mxu0 0
    %243 = vmatpush1.bf16.msra.mxu0 0
    %244 = vmatprep.subr.bf16.mxu0 0
    %245 = vmatpush1.bf16.msra.mxu0 0
    %246 = vmatprep.subr.bf16.mxu0 0
    %247 = vmatpush1.bf16.msra.mxu0 0
    %248 = vmatprep.subr.bf16.mxu0 0
    %249 = vmatpush1.bf16.msra.mxu0 0
    %250 = vmatprep.subr.bf16.mxu0 0
    %251 = vmatpush1.bf16.msra.mxu0 0
    %252 = vmatprep.subr.bf16.mxu0 0
    %253 = vmatpush1.bf16.msra.mxu0 0
    %254 = vmatprep.subr.bf16.mxu0 0
    %255 = vmatpush1.bf16.msra.mxu0 0
    %256 = vmatprep.subr.bf16.mxu0 0
    %257 = vmatpush1.bf16.msra.mxu0 0
    %258 = vmatprep.subr.bf16.mxu0 0
    %259 = vmatpush1.bf16.msra.mxu0 0
    %260 = vmatprep.subr.bf16.mxu0 0
    %261 = vmatpush1.bf16.msra.mxu0 0
    %262 = vmatprep.subr.bf16.mxu0 0
    %263 = vmatpush1.bf16.msra.mxu0 0
    %264 = vmatprep.mubr.bf16.mxu0 0
    %265 = vmatmul.mubr.bf16.gmra.mrb[0].mxu0 %v225
    %v266 = vpop.f32.mrb[0].mxu0
    %v267 = vadd.f32 %v184, %v266
    %v268 = vpop.f32.mrb[0].mxu0
    %v269 = vpop.f32.mrb[0].mxu0
    %v270 = vadd.f32 %v187, %v269
    %v271 = vpop.f32.mrb[0].mxu0
    %272 = vmatprep.mubr.bf16.mxu0 0
    %273 = vmatmul.mubr.bf16.gmra.mrb[0].mxu0 %v227
    %v274 = vpop.f32.mrb[0].mxu0
    %v275 = vadd.f32 %v192, %v274
    %v276 = vpop.f32.mrb[0].mxu0
    %v277 = vpop.f32.mrb[0].mxu0
    %v278 = vadd.f32 %v195, %v277
    %v279 = vpop.f32.mrb[0].mxu0
    %280 = vdwg.mxu0
    %s281 = scalar_lea.vmem [#allocation2], 72
    %v282 = vld [vmem:[%s281] sm:$0xf]
    %v283 = vld [vmem:[%s281 + $0x4] sm:$0xf]
    %v284 = vld [vmem:[%s281 + $0x8] sm:$0xf]
    %v285 = vld [vmem:[%s281 + $0xc] sm:$0xf]
    %v286 = vld [vmem:[%s281 + $0x10] sm:$0xf]
    %v287 = vld [vmem:[%s281 + $0x14] sm:$0xf]
    %v288 = vld [vmem:[%s281 + $0x18] sm:$0xf]
    %v289 = vld [vmem:[%s281 + $0x1c] sm:$0xf]
    %v290 = vld [vmem:[%s281 + $0x20] sm:$0xf]
    %vm294 = vcmask 1046528
    %v295 = vrot.slane %v68, 1
    %v296 = vrot.slane %v69, 1
    %v297 = vsel %vm294, %v295, %v296
    %v298 = vrot.slane %v79, 1
    %v299 = vsel %vm294, %v296, %v298
    %v309 = vunpack.c.l.b16 %v282
    %v310 = vunpack.c.l.b16 %v283
    %v311 = vunpack.c.l.b16 %v284
    %v312 = vunpack.c.l.b16 %v285
    %v313 = vunpack.c.l.b16 %v286
    %v314 = vunpack.c.l.b16 %v287
    %v315 = vunpack.c.l.b16 %v288
    %v316 = vunpack.c.l.b16 %v289
    %v317 = vunpack.c.l.b16 %v290
    %v318 = vpack.c.b16 %v310, %v309
    %v319 = vpack.c.b16 %v312, %v311
    %v320 = vpack.c.b16 %v314, %v313
    %v321 = vpack.c.b16 %v316, %v315
    %v322 = vpack.c.b16 %v317, %v317
    %v328 = vsel %vm138, %v297, 0
    %v331 = vsel %vm138, %v299, 0
    %v334 = vsel %vm145, %v322, 0
    %336 = vmatprep.subr.bf16.mxu0 0
    %337 = vmatpush1.bf16.msra.mxu0 %v318
    %338 = vmatprep.subr.bf16.mxu0 0
    %339 = vmatpush1.bf16.msra.mxu0 %v319
    %340 = vmatprep.subr.bf16.mxu0 0
    %341 = vmatpush1.bf16.msra.mxu0 %v320
    %342 = vmatprep.subr.bf16.mxu0 0
    %343 = vmatpush1.bf16.msra.mxu0 %v321
    %344 = vmatprep.subr.bf16.mxu0 0
    %345 = vmatpush1.bf16.msra.mxu0 %v334
    %346 = vmatprep.subr.bf16.mxu0 0
    %347 = vmatpush1.bf16.msra.mxu0 0
    %348 = vmatprep.subr.bf16.mxu0 0
    %349 = vmatpush1.bf16.msra.mxu0 0
    %350 = vmatprep.subr.bf16.mxu0 0
    %351 = vmatpush1.bf16.msra.mxu0 0
    %352 = vmatprep.subr.bf16.mxu0 0
    %353 = vmatpush1.bf16.msra.mxu0 0
    %354 = vmatprep.subr.bf16.mxu0 0
    %355 = vmatpush1.bf16.msra.mxu0 0
    %356 = vmatprep.subr.bf16.mxu0 0
    %357 = vmatpush1.bf16.msra.mxu0 0
    %358 = vmatprep.subr.bf16.mxu0 0
    %359 = vmatpush1.bf16.msra.mxu0 0
    %360 = vmatprep.subr.bf16.mxu0 0
    %361 = vmatpush1.bf16.msra.mxu0 0
    %362 = vmatprep.subr.bf16.mxu0 0
    %363 = vmatpush1.bf16.msra.mxu0 0
    %364 = vmatprep.subr.bf16.mxu0 0
    %365 = vmatpush1.bf16.msra.mxu0 0
    %366 = vmatprep.subr.bf16.mxu0 0
    %367 = vmatpush1.bf16.msra.mxu0 0
    %368 = vmatprep.mubr.bf16.mxu0 0
    %369 = vmatmul.mubr.bf16.gmra.mrb[0].mxu0 %v328
    %v370 = vpop.f32.mrb[0].mxu0
    %v371 = vadd.f32 0.0, %v370
    %v372 = vpop.f32.mrb[0].mxu0
    %v373 = vpop.f32.mrb[0].mxu0
    %v374 = vadd.f32 0.0, %v373
    %v375 = vpop.f32.mrb[0].mxu0
    %376 = vmatprep.mubr.bf16.mxu0 0
    %377 = vmatmul.mubr.bf16.gmra.mrb[0].mxu0 %v331
    %v378 = vpop.f32.mrb[0].mxu0
    %v379 = vadd.f32 0.0, %v378
    %v380 = vpop.f32.mrb[0].mxu0
    %v381 = vpop.f32.mrb[0].mxu0
    %v382 = vadd.f32 0.0, %v381
    %v383 = vpop.f32.mrb[0].mxu0
    %384 = vdwg.mxu0
    %v385 = vadd.f32 %v267, %v371
    %v386 = vadd.f32 %v270, %v374
    %v387 = vadd.f32 %v275, %v379
    %v388 = vadd.f32 %v278, %v382
    %s389 = scalar_lea.vmem [#allocation2], 108
    %v390 = vld [vmem:[%s389] sm:$0xf]
    %v391 = vld [vmem:[%s389 + $0x4] sm:$0xf]
    %v392 = vld [vmem:[%s389 + $0x8] sm:$0xf]
    %v393 = vld [vmem:[%s389 + $0xc] sm:$0xf]
    %v394 = vld [vmem:[%s389 + $0x10] sm:$0xf]
    %v395 = vld [vmem:[%s389 + $0x14] sm:$0xf]
    %v396 = vld [vmem:[%s389 + $0x18] sm:$0xf]
    %v397 = vld [vmem:[%s389 + $0x1c] sm:$0xf]
    %v398 = vld [vmem:[%s389 + $0x20] sm:$0xf]
    %vm399 = vsmask.f32 6400
    %v400 = vrot.slane %v92, 1
    %v401 = vrot.slane %v94, 2
    %v402 = vor.u32 %v400, %v401
    %v403 = vrot.slane %v103, 1
    %v404 = vrot.slane %v99, 2
    %v405 = vor.u32 %v403, %v404
    %v406 = vsel %vm399, %v402, %v405
    %v407 = vshrl.u32 %v79, 16
    %v409 = vrot.slane %v407, 1
    %v410 = vrot.slane %v107, 2
    %v411 = vor.u32 %v409, %v410
    %v412 = vsel %vm399, %v405, %v411
    %v422 = vunpack.c.l.b16 %v390
    %v423 = vunpack.c.l.b16 %v391
    %v424 = vunpack.c.l.b16 %v392
    %v425 = vunpack.c.l.b16 %v393
    %v426 = vunpack.c.l.b16 %v394
    %v427 = vunpack.c.l.b16 %v395
    %v428 = vunpack.c.l.b16 %v396
    %v429 = vunpack.c.l.b16 %v397
    %v430 = vunpack.c.l.b16 %v398
    %v431 = vpack.c.b16 %v423, %v422
    %v432 = vpack.c.b16 %v425, %v424
    %v433 = vpack.c.b16 %v427, %v426
    %v434 = vpack.c.b16 %v429, %v428
    %v435 = vpack.c.b16 %v430, %v430
    %v441 = vsel %vm138, %v406, 0
    %v444 = vsel %vm138, %v412, 0
    %v447 = vsel %vm145, %v435, 0
    %449 = vmatprep.subr.bf16.mxu0 0
    %450 = vmatpush1.bf16.msra.mxu0 %v431
    %451 = vmatprep.subr.bf16.mxu0 0
    %452 = vmatpush1.bf16.msra.mxu0 %v432
    %453 = vmatprep.subr.bf16.mxu0 0
    %454 = vmatpush1.bf16.msra.mxu0 %v433
    %455 = vmatprep.subr.bf16.mxu0 0
    %456 = vmatpush1.bf16.msra.mxu0 %v434
    %457 = vmatprep.subr.bf16.mxu0 0
    %458 = vmatpush1.bf16.msra.mxu0 %v447
    %459 = vmatprep.subr.bf16.mxu0 0
    %460 = vmatpush1.bf16.msra.mxu0 0
    %461 = vmatprep.subr.bf16.mxu0 0
    %462 = vmatpush1.bf16.msra.mxu0 0
    %463 = vmatprep.subr.bf16.mxu0 0
    %464 = vmatpush1.bf16.msra.mxu0 0
    %465 = vmatprep.subr.bf16.mxu0 0
    %466 = vmatpush1.bf16.msra.mxu0 0
    %467 = vmatprep.subr.bf16.mxu0 0
    %468 = vmatpush1.bf16.msra.mxu0 0
    %469 = vmatprep.subr.bf16.mxu0 0
    %470 = vmatpush1.bf16.msra.mxu0 0
    %471 = vmatprep.subr.bf16.mxu0 0
    %472 = vmatpush1.bf16.msra.mxu0 0
    %473 = vmatprep.subr.bf16.mxu0 0
    %474 = vmatpush1.bf16.msra.mxu0 0
    %475 = vmatprep.subr.bf16.mxu0 0
    %476 = vmatpush1.bf16.msra.mxu0 0
    %477 = vmatprep.subr.bf16.mxu0 0
    %478 = vmatpush1.bf16.msra.mxu0 0
    %479 = vmatprep.subr.bf16.mxu0 0
    %480 = vmatpush1.bf16.msra.mxu0 0
    %481 = vmatprep.mubr.bf16.mxu0 0
    %482 = vmatmul.mubr.bf16.gmra.mrb[0].mxu0 %v441
    %v483 = vpop.f32.mrb[0].mxu0
    %v484 = vadd.f32 0.0, %v483
    %v485 = vpop.f32.mrb[0].mxu0
    %v486 = vpop.f32.mrb[0].mxu0
    %v487 = vadd.f32 0.0, %v486
    %v488 = vpop.f32.mrb[0].mxu0
    %489 = vmatprep.mubr.bf16.mxu0 0
    %490 = vmatmul.mubr.bf16.gmra.mrb[0].mxu0 %v444
    %v491 = vpop.f32.mrb[0].mxu0
    %v492 = vadd.f32 0.0, %v491
    %v493 = vpop.f32.mrb[0].mxu0
    %v494 = vpop.f32.mrb[0].mxu0
    %v495 = vadd.f32 0.0, %v494
    %v496 = vpop.f32.mrb[0].mxu0
    %497 = vdwg.mxu0
    %v498 = vadd.f32 %v385, %v484
    %v499 = vadd.f32 %v386, %v487
    %v500 = vadd.f32 %v387, %v492
    %v501 = vadd.f32 %v388, %v495
    %s502 = scalar_lea.vmem [#allocation2], 144
    %v503 = vld [vmem:[%s502] sm:$0xf]
    %v504 = vld [vmem:[%s502 + $0x4] sm:$0xf]
    %v505 = vld [vmem:[%s502 + $0x8] sm:$0xf]
    %v506 = vld [vmem:[%s502 + $0xc] sm:$0xf]
    %v507 = vld [vmem:[%s502 + $0x10] sm:$0xf]
    %v508 = vld [vmem:[%s502 + $0x14] sm:$0xf]
    %v509 = vld [vmem:[%s502 + $0x18] sm:$0xf]
    %v510 = vld [vmem:[%s502 + $0x1c] sm:$0xf]
    %v511 = vld [vmem:[%s502 + $0x20] sm:$0xf]
    %vm512 = vcmask 1045504
    %v513 = vrot.slane %v68, 2
    %v514 = vrot.slane %v69, 2
    %v515 = vsel %vm512, %v513, %v514
    %v516 = vrot.slane %v79, 2
    %v517 = vsel %vm512, %v514, %v516
    %v527 = vunpack.c.l.b16 %v503
    %v528 = vunpack.c.l.b16 %v504
    %v529 = vunpack.c.l.b16 %v505
    %v530 = vunpack.c.l.b16 %v506
    %v531 = vunpack.c.l.b16 %v507
    %v532 = vunpack.c.l.b16 %v508
    %v533 = vunpack.c.l.b16 %v509
    %v534 = vunpack.c.l.b16 %v510
    %v535 = vunpack.c.l.b16 %v511
    %v536 = vpack.c.b16 %v528, %v527
    %v537 = vpack.c.b16 %v530, %v529
    %v538 = vpack.c.b16 %v532, %v531
    %v539 = vpack.c.b16 %v534, %v533
    %v540 = vpack.c.b16 %v535, %v535
    %v546 = vsel %vm138, %v515, 0
    %v549 = vsel %vm138, %v517, 0
    %v552 = vsel %vm145, %v540, 0
    %554 = vmatprep.subr.bf16.mxu0 0
    %555 = vmatpush1.bf16.msra.mxu0 %v536
    %556 = vmatprep.subr.bf16.mxu0 0
    %557 = vmatpush1.bf16.msra.mxu0 %v537
    %558 = vmatprep.subr.bf16.mxu0 0
    %559 = vmatpush1.bf16.msra.mxu0 %v538
    %560 = vmatprep.subr.bf16.mxu0 0
    %561 = vmatpush1.bf16.msra.mxu0 %v539
    %562 = vmatprep.subr.bf16.mxu0 0
    %563 = vmatpush1.bf16.msra.mxu0 %v552
    %564 = vmatprep.subr.bf16.mxu0 0
    %565 = vmatpush1.bf16.msra.mxu0 0
    %566 = vmatprep.subr.bf16.mxu0 0
    %567 = vmatpush1.bf16.msra.mxu0 0
    %568 = vmatprep.subr.bf16.mxu0 0
    %569 = vmatpush1.bf16.msra.mxu0 0
    %570 = vmatprep.subr.bf16.mxu0 0
    %571 = vmatpush1.bf16.msra.mxu0 0
    %572 = vmatprep.subr.bf16.mxu0 0
    %573 = vmatpush1.bf16.msra.mxu0 0
    %574 = vmatprep.subr.bf16.mxu0 0
    %575 = vmatpush1.bf16.msra.mxu0 0
    %576 = vmatprep.subr.bf16.mxu0 0
    %577 = vmatpush1.bf16.msra.mxu0 0
    %578 = vmatprep.subr.bf16.mxu0 0
    %579 = vmatpush1.bf16.msra.mxu0 0
    %580 = vmatprep.subr.bf16.mxu0 0
    %581 = vmatpush1.bf16.msra.mxu0 0
    %582 = vmatprep.subr.bf16.mxu0 0
    %583 = vmatpush1.bf16.msra.mxu0 0
    %584 = vmatprep.subr.bf16.mxu0 0
    %585 = vmatpush1.bf16.msra.mxu0 0
    %586 = vmatprep.mubr.bf16.mxu0 0
    %587 = vmatmul.mubr.bf16.gmra.mrb[0].mxu0 %v546
    %v588 = vpop.f32.mrb[0].mxu0
    %v589 = vadd.f32 0.0, %v588
    %v590 = vpop.f32.mrb[0].mxu0
    %v591 = vpop.f32.mrb[0].mxu0
    %v592 = vadd.f32 0.0, %v591
    %v593 = vpop.f32.mrb[0].mxu0
    %594 = vmatprep.mubr.bf16.mxu0 0
    %595 = vmatmul.mubr.bf16.gmra.mrb[0].mxu0 %v549
    %v596 = vpop.f32.mrb[0].mxu0
    %v597 = vadd.f32 0.0, %v596
    %v598 = vpop.f32.mrb[0].mxu0
    %v599 = vpop.f32.mrb[0].mxu0
    %v600 = vadd.f32 0.0, %v599
    %v601 = vpop.f32.mrb[0].mxu0
    %602 = vdwg.mxu0
    %v603 = vadd.f32 %v498, %v589
    %v604 = vadd.f32 %v499, %v592
    %v605 = vadd.f32 %v500, %v597
    %v606 = vadd.f32 %v501, %v600
    %v607 = vld [vmem:[#allocation4] sm:$0x1]
    %v609 = vlaneseq
    %v610 = vshrl.u32 %v609, 7
    %v611 = vsub.s32 0, %v610
    %v612 = vrot.slane %v607, %v611
    %v614 = vadd.f32 %v603, %v612
    %v615 = vadd.f32 %v604, %v612
    %v616 = vadd.f32 %v605, %v612
    %v617 = vadd.f32 %v606, %v612
    %v618 = vmax.f32 %v614, 0.0
    %v619 = vmax.f32 %v615, 0.0
    %v620 = vmax.f32 %v616, 0.0
    %v621 = vmax.f32 %v617, 0.0
    %vm626 = vcmask 1046528
    %v627 = vrot.slane %v618, 1
    %v628 = vrot.slane %v619, 1
    %v629 = vsel %vm626, %v627, %v628
    %v630 = vrot.slane %v620, 1
    %v631 = vsel %vm626, %v628, %v630
    %v632 = vrot.slane %v621, 1
    %v633 = vsel %vm626, %v630, %v632
    %v638 = vmax.f32 %v618, %v629
    %v639 = vmax.f32 %v619, %v631
    %v640 = vmax.f32 %v620, %v633
    %v641 = vmax.f32 %v621, %v632
    %v642 = vld [vmem:[%s4] sm:$0xff]
    %v643 = vld [vmem:[%s4 + $0x8] sm:$0xff]
    %v644 = vld [vmem:[%s4 + $0x10] sm:$0xff]
    %v645 = vld [vmem:[%s4 + $0x18] sm:$0xff]
    %v646 = vld [vmem:[%s4 + $0x20] sm:$0xff]
    %v647 = vld [vmem:[%s4 + $0x28] sm:$0xff]
    %v648 = vld [vmem:[%s4 + $0x30] sm:$0xff]
    %v649 = vld [vmem:[%s4 + $0x38] sm:$0xff]
    %v650 = vld [vmem:[%s4 + $0x40] sm:$0xff]
    %v651 = vld [vmem:[%s4 + $0x48] sm:$0xff]
    %v652 = vld [vmem:[%s4 + $0x50] sm:$0xff]
    %v653 = vld [vmem:[%s4 + $0x58] sm:$0xff]
    %v654 = vld [vmem:[%s4 + $0x60] sm:$0xff]
    %v655 = vld [vmem:[%s4 + $0x68] sm:$0xff]
    %vm656 = vcmask 916480
    %v658 = vsel %vm656, %v638, 0
    %v661 = vsel %vm656, %v639, 0
    %v664 = vsel %vm656, %v640, 0
    %v667 = vsel %vm656, %v641, 0
    %669 = vmatprep.subr.mxu0 0.0
    %670 = vmatpush1.msra.mxu0 %v642
    %671 = vmatprep.subr.mxu0 0.0
    %672 = vmatpush1.msra.mxu0 %v643
    %673 = vmatprep.subr.mxu0 0.0
    %674 = vmatpush1.msra.mxu0 %v644
    %675 = vmatprep.subr.mxu0 0.0
    %676 = vmatpush1.msra.mxu0 %v645
    %677 = vmatprep.subr.mxu0 0.0
    %678 = vmatpush1.msra.mxu0 %v646
    %679 = vmatprep.subr.mxu0 0.0
    %680 = vmatpush1.msra.mxu0 %v647
    %681 = vmatprep.subr.mxu0 0.0
    %682 = vmatpush1.msra.mxu0 %v648
    %683 = vmatprep.subr.mxu0 0.0
    %684 = vmatpush1.msra.mxu0 %v649
    %685 = vmatprep.subr.mxu0 0.0
    %686 = vmatpush1.msra.mxu0 %v650
    %687 = vmatprep.subr.mxu0 0.0
    %688 = vmatpush1.msra.mxu0 %v651
    %689 = vmatprep.subr.mxu0 0.0
    %690 = vmatpush1.msra.mxu0 %v652
    %691 = vmatprep.subr.mxu0 0.0
    %692 = vmatpush1.msra.mxu0 %v653
    %693 = vmatprep.subr.mxu0 0.0
    %694 = vmatpush1.msra.mxu0 %v654
    %695 = vmatprep.subr.mxu0 0.0
    %696 = vmatpush1.msra.mxu0 %v655
    %697 = vmatprep.subr.mxu0 0.0
    %698 = vmatpush1.msra.mxu0 0.0
    %699 = vmatprep.subr.mxu0 0.0
    %700 = vmatpush1.msra.mxu0 0.0
    %701 = vmatprep.subr.mxu0 0.0
    %702 = vmatpush1.msra.mxu0 0.0
    %703 = vmatprep.subr.mxu0 0.0
    %704 = vmatpush1.msra.mxu0 0.0
    %705 = vmatprep.subr.mxu0 0.0
    %706 = vmatpush1.msra.mxu0 0.0
    %707 = vmatprep.subr.mxu0 0.0
    %708 = vmatpush1.msra.mxu0 0.0
    %709 = vmatprep.subr.mxu0 0.0
    %710 = vmatpush1.msra.mxu0 0.0
    %711 = vmatprep.subr.mxu0 0.0
    %712 = vmatpush1.msra.mxu0 0.0
    %713 = vmatprep.subr.mxu0 0.0
    %714 = vmatpush1.msra.mxu0 0.0
    %715 = vmatprep.subr.mxu0 0.0
    %716 = vmatpush1.msra.mxu0 0.0
    %717 = vmatprep.subr.mxu0 0.0
    %718 = vmatpush1.msra.mxu0 0.0
    %719 = vmatprep.subr.mxu0 0.0
    %720 = vmatpush1.msra.mxu0 0.0
    %721 = vmatprep.subr.mxu0 0.0
    %722 = vmatpush1.msra.mxu0 0.0
    %723 = vmatprep.subr.mxu0 0.0
    %724 = vmatpush1.msra.mxu0 0.0
    %725 = vmatprep.subr.mxu0 0.0
    %726 = vmatpush1.msra.mxu0 0.0
    %727 = vmatprep.subr.mxu0 0.0
    %728 = vmatpush1.msra.mxu0 0.0
    %729 = vmatprep.subr.mxu0 0.0
    %730 = vmatpush1.msra.mxu0 0.0
    %731 = vmatprep.subr.mxu0 0.0
    %732 = vmatpush1.msra.mxu0 0.0
    %733 = vmatprep.mubr.f32.mxu0 0.0
    %734 = vmatmul.mubr.f32.gmra.mrb[0].mxu0 %v658
    %v735 = vpop.f32.mrb[0].mxu0
    %v736 = vadd.f32 0.0, %v735
    %v737 = vpop.f32.mrb[0].mxu0
    %738 = vmatprep.mubr.f32.mxu0 0.0
    %739 = vmatmul.mubr.f32.gmra.mrb[0].mxu0 %v661
    %v740 = vpop.f32.mrb[0].mxu0
    %v741 = vadd.f32 0.0, %v740
    %v742 = vpop.f32.mrb[0].mxu0
    %743 = vmatprep.mubr.f32.mxu0 0.0
    %744 = vmatmul.mubr.f32.gmra.mrb[0].mxu0 %v664
    %v745 = vpop.f32.mrb[0].mxu0
    %v746 = vadd.f32 0.0, %v745
    %v747 = vpop.f32.mrb[0].mxu0
    %748 = vmatprep.mubr.f32.mxu0 0.0
    %749 = vmatmul.mubr.f32.gmra.mrb[0].mxu0 %v667
    %v750 = vpop.f32.mrb[0].mxu0
    %v751 = vadd.f32 0.0, %v750
    %v752 = vpop.f32.mrb[0].mxu0
    %753 = vdwg.mxu0
    %v754 = vld [vmem:[%s5] sm:$0xff]
    %v755 = vld [vmem:[%s5 + $0x8] sm:$0xff]
    %v756 = vld [vmem:[%s5 + $0x10] sm:$0xff]
    %v757 = vld [vmem:[%s5 + $0x18] sm:$0xff]
    %v758 = vld [vmem:[%s5 + $0x20] sm:$0xff]
    %v759 = vld [vmem:[%s5 + $0x28] sm:$0xff]
    %v760 = vld [vmem:[%s5 + $0x30] sm:$0xff]
    %v761 = vld [vmem:[%s5 + $0x38] sm:$0xff]
    %v762 = vld [vmem:[%s5 + $0x40] sm:$0xff]
    %v763 = vld [vmem:[%s5 + $0x48] sm:$0xff]
    %v764 = vld [vmem:[%s5 + $0x50] sm:$0xff]
    %v765 = vld [vmem:[%s5 + $0x58] sm:$0xff]
    %v766 = vld [vmem:[%s5 + $0x60] sm:$0xff]
    %v767 = vld [vmem:[%s5 + $0x68] sm:$0xff]
    %768 = vmatprep.subr.mxu0 0.0
    %769 = vmatpush1.msra.mxu0 %v754
    %770 = vmatprep.subr.mxu0 0.0
    %771 = vmatpush1.msra.mxu0 %v755
    %772 = vmatprep.subr.mxu0 0.0
    %773 = vmatpush1.msra.mxu0 %v756
    %774 = vmatprep.subr.mxu0 0.0
    %775 = vmatpush1.msra.mxu0 %v757
    %776 = vmatprep.subr.mxu0 0.0
    %777 = vmatpush1.msra.mxu0 %v758
    %778 = vmatprep.subr.mxu0 0.0
    %779 = vmatpush1.msra.mxu0 %v759
    %780 = vmatprep.subr.mxu0 0.0
    %781 = vmatpush1.msra.mxu0 %v760
    %782 = vmatprep.subr.mxu0 0.0
    %783 = vmatpush1.msra.mxu0 %v761
    %784 = vmatprep.subr.mxu0 0.0
    %785 = vmatpush1.msra.mxu0 %v762
    %786 = vmatprep.subr.mxu0 0.0
    %787 = vmatpush1.msra.mxu0 %v763
    %788 = vmatprep.subr.mxu0 0.0
    %789 = vmatpush1.msra.mxu0 %v764
    %790 = vmatprep.subr.mxu0 0.0
    %791 = vmatpush1.msra.mxu0 %v765
    %792 = vmatprep.subr.mxu0 0.0
    %793 = vmatpush1.msra.mxu0 %v766
    %794 = vmatprep.subr.mxu0 0.0
    %795 = vmatpush1.msra.mxu0 %v767
    %796 = vmatprep.subr.mxu0 0.0
    %797 = vmatpush1.msra.mxu0 0.0
    %798 = vmatprep.subr.mxu0 0.0
    %799 = vmatpush1.msra.mxu0 0.0
    %800 = vmatprep.subr.mxu0 0.0
    %801 = vmatpush1.msra.mxu0 0.0
    %802 = vmatprep.subr.mxu0 0.0
    %803 = vmatpush1.msra.mxu0 0.0
    %804 = vmatprep.subr.mxu0 0.0
    %805 = vmatpush1.msra.mxu0 0.0
    %806 = vmatprep.subr.mxu0 0.0
    %807 = vmatpush1.msra.mxu0 0.0
    %808 = vmatprep.subr.mxu0 0.0
    %809 = vmatpush1.msra.mxu0 0.0
    %810 = vmatprep.subr.mxu0 0.0
    %811 = vmatpush1.msra.mxu0 0.0
    %812 = vmatprep.subr.mxu0 0.0
    %813 = vmatpush1.msra.mxu0 0.0
    %814 = vmatprep.subr.mxu0 0.0
    %815 = vmatpush1.msra.mxu0 0.0
    %816 = vmatprep.subr.mxu0 0.0
    %817 = vmatpush1.msra.mxu0 0.0
    %818 = vmatprep.subr.mxu0 0.0
    %819 = vmatpush1.msra.mxu0 0.0
    %820 = vmatprep.subr.mxu0 0.0
    %821 = vmatpush1.msra.mxu0 0.0
    %822 = vmatprep.subr.mxu0 0.0
    %823 = vmatpush1.msra.mxu0 0.0
    %824 = vmatprep.subr.mxu0 0.0
    %825 = vmatpush1.msra.mxu0 0.0
    %826 = vmatprep.subr.mxu0 0.0
    %827 = vmatpush1.msra.mxu0 0.0
    %828 = vmatprep.subr.mxu0 0.0
    %829 = vmatpush1.msra.mxu0 0.0
    %830 = vmatprep.subr.mxu0 0.0
    %831 = vmatpush1.msra.mxu0 0.0
    %832 = vmatprep.mubr.f32.mxu0 0.0
    %833 = vmatmul.mubr.f32.gmra.mrb[0].mxu0 %v658
    %v834 = vpop.f32.mrb[0].mxu0
    %v835 = vadd.f32 0.0, %v834
    %v836 = vpop.f32.mrb[0].mxu0
    %837 = vmatprep.mubr.f32.mxu0 0.0
    %838 = vmatmul.mubr.f32.gmra.mrb[0].mxu0 %v661
    %v839 = vpop.f32.mrb[0].mxu0
    %v840 = vadd.f32 0.0, %v839
    %v841 = vpop.f32.mrb[0].mxu0
    %842 = vmatprep.mubr.f32.mxu0 0.0
    %843 = vmatmul.mubr.f32.gmra.mrb[0].mxu0 %v664
    %v844 = vpop.f32.mrb[0].mxu0
    %v845 = vadd.f32 0.0, %v844
    %v846 = vpop.f32.mrb[0].mxu0
    %847 = vmatprep.mubr.f32.mxu0 0.0
    %848 = vmatmul.mubr.f32.gmra.mrb[0].mxu0 %v667
    %v849 = vpop.f32.mrb[0].mxu0
    %v850 = vadd.f32 0.0, %v849
    %v851 = vpop.f32.mrb[0].mxu0
    %852 = vdwg.mxu0
    %v853 = vmax.f32 %v736, %v835
    %v854 = vmax.f32 %v741, %v840
    %v855 = vmax.f32 %v746, %v845
    %v856 = vmax.f32 %v751, %v850
    %v857 = vld [vmem:[#allocation6] sm:$0xff]
    %v858 = vld [vmem:[#allocation6 + $0x8] sm:$0x3f]
    %vm859 = vcmask 252928
    %v861 = vsel %vm859, %v857, 0
    %v864 = vsel %vm859, %v858, 0
    %v867 = vsel %vm626, %v856, 0
    %869 = vmatprep.subr.mxu0 0.0
    %870 = vmatpush1.msra.mxu0 %v853
    %871 = vmatprep.subr.mxu0 0.0
    %872 = vmatpush1.msra.mxu0 %v854
    %873 = vmatprep.subr.mxu0 0.0
    %874 = vmatpush1.msra.mxu0 %v855
    %875 = vmatprep.subr.mxu0 0.0
    %876 = vmatpush1.msra.mxu0 %v867
    %877 = vmatprep.subr.mxu0 0.0
    %878 = vmatpush1.msra.mxu0 0.0
    %879 = vmatprep.subr.mxu0 0.0
    %880 = vmatpush1.msra.mxu0 0.0
    %881 = vmatprep.subr.mxu0 0.0
    %882 = vmatpush1.msra.mxu0 0.0
    %883 = vmatprep.subr.mxu0 0.0
    %884 = vmatpush1.msra.mxu0 0.0
    %885 = vmatprep.subr.mxu0 0.0
    %886 = vmatpush1.msra.mxu0 0.0
    %887 = vmatprep.subr.mxu0 0.0
    %888 = vmatpush1.msra.mxu0 0.0
    %889 = vmatprep.subr.mxu0 0.0
    %890 = vmatpush1.msra.mxu0 0.0
    %891 = vmatprep.subr.mxu0 0.0
    %892 = vmatpush1.msra.mxu0 0.0
    %893 = vmatprep.subr.mxu0 0.0
    %894 = vmatpush1.msra.mxu0 0.0
    %895 = vmatprep.subr.mxu0 0.0
    %896 = vmatpush1.msra.mxu0 0.0
    %897 = vmatprep.subr.mxu0 0.0
    %898 = vmatpush1.msra.mxu0 0.0
    %899 = vmatprep.subr.mxu0 0.0
    %900 = vmatpush1.msra.mxu0 0.0
    %901 = vmatprep.subr.mxu0 0.0
    %902 = vmatpush1.msra.mxu0 0.0
    %903 = vmatprep.subr.mxu0 0.0
    %904 = vmatpush1.msra.mxu0 0.0
    %905 = vmatprep.subr.mxu0 0.0
    %906 = vmatpush1.msra.mxu0 0.0
    %907 = vmatprep.subr.mxu0 0.0
    %908 = vmatpush1.msra.mxu0 0.0
    %909 = vmatprep.subr.mxu0 0.0
    %910 = vmatpush1.msra.mxu0 0.0
    %911 = vmatprep.subr.mxu0 0.0
    %912 = vmatpush1.msra.mxu0 0.0
    %913 = vmatprep.subr.mxu0 0.0
    %914 = vmatpush1.msra.mxu0 0.0
    %915 = vmatprep.subr.mxu0 0.0
    %916 = vmatpush1.msra.mxu0 0.0
    %917 = vmatprep.subr.mxu0 0.0
    %918 = vmatpush1.msra.mxu0 0.0
    %919 = vmatprep.subr.mxu0 0.0
    %920 = vmatpush1.msra.mxu0 0.0
    %921 = vmatprep.subr.mxu0 0.0
    %922 = vmatpush1.msra.mxu0 0.0
    %923 = vmatprep.subr.mxu0 0.0
    %924 = vmatpush1.msra.mxu0 0.0
    %925 = vmatprep.subr.mxu0 0.0
    %926 = vmatpush1.msra.mxu0 0.0
    %927 = vmatprep.subr.mxu0 0.0
    %928 = vmatpush1.msra.mxu0 0.0
    %929 = vmatprep.subr.mxu0 0.0
    %930 = vmatpush1.msra.mxu0 0.0
    %931 = vmatprep.subr.mxu0 0.0
    %932 = vmatpush1.msra.mxu0 0.0
    %933 = vmatprep.mubr.f32.mxu0 0.0
    %934 = vmatmul.mubr.f32.gmra.mrb[0].mxu0 %v861
    %v935 = vpop.f32.mrb[0].mxu0
    %v936 = vadd.f32 0.0, %v935
    %v937 = vpop.f32.mrb[0].mxu0
    %938 = vmatprep.mubr.f32.mxu0 0.0
    %939 = vmatmul.mubr.f32.gmra.mrb[0].mxu0 %v864
    %v940 = vpop.f32.mrb[0].mxu0
    %v941 = vadd.f32 0.0, %v940
    %v942 = vpop.f32.mrb[0].mxu0
    %943 = vdwg.mxu0
    %vm944 = vcmask 457728
    %945 = vst.msk [vmem:[%s6] sm:$0xff] %vm944, %v936
    %vm946 = vcmask 455680
    %947 = vst.msk [vmem:[%s6 + $0x8] sm:$0x3f] %vm946, %v941
    // Predicated region
    $region38: #{convnet_forward.4} parent=1 // pred_check
      _
    $region39: #{convnet_forward.4} parent=1 // pred_check_branch
      %949 = sbr.rel (0) target = $region41
    $region40: #{convnet_forward.4} parent=1 // pred_region
      _
    $region41: #{convnet_forward.4} parent=1 // pred_fallthru
      _
    // Predicated region
    $region42: #{convnet_forward.4} parent=1 // pred_check
      _
    $region43: #{convnet_forward.4} parent=1 // pred_check_branch
      %951 = sbr.rel (0) target = $region45
    $region44: #{convnet_forward.4} parent=1 // pred_region
      _
    $region45: #{convnet_forward.4} parent=1 // pred_fallthru
      _
    %952 = vsyncpa [#allocation3], 1
    %953 = vsyncpa [#allocation5], 1

// kernel: convnet_forward.3
$region0: #{convnet_forward.3}
  #allocation0 [shape = 'u32[]', space=smem, size = 0x4, offset = 0x4, fixed_abs, tag = 'smem constant byte address 0x4 - core index']
  #allocation1 [shape = 'u32[144,128]{1,0:T(1,128)}', space=vmem, size = 0x12000, scoped, tag = 'internal scratch']
  %s0 = inlined_call_operand.vmem [shape: f32[64,32], index: 0, kind: input, shape index: {}]
  %s1 = inlined_call_operand.hbm [shape: bf16[5,32,112], index: 1, kind: input, shape index: {}]
  %s2 = inlined_call_operand.hbm [shape: f32[1,112], index: 2, kind: input, shape index: {}]
  %s3 = inlined_call_operand.hbm [shape: f32[36,59], index: 3, kind: input, shape index: {}]
  %s4 = inlined_call_operand.vmem [shape: f32[112,72], index: 4, kind: input, shape index: {}]
  %s5 = inlined_call_operand.vmem [shape: f32[112,72], index: 5, kind: input, shape index: {}]
  %s6 = inlined_call_operand.vmem [shape: f32[36,72], index: 6, kind: output, shape index: {}]
  %s7 = sld [smem:[#allocation0]]
  $region46: #{convnet_forward.3} parent=0
    _
  %s9 = ssub.s32 1, %s7
  %s10 = scalar_select 0, %s9, %s7
  $region1: #{convnet_forward.3} parent=0
    #allocation2 [shape = 'u8[40960]{0}', space=vmem, size = 0xa000, scoped, tag = 'input window, operand 1, single buffered']
    #allocation3 [shape = 's32[1]{0}', space=sflag, size = 0x4, scoped, tag = 'scoped memory for convnet_forward.3']
    #allocation4 [shape = 'u8[512]{0}', space=vmem, size = 0x400, scoped, tag = 'input window, operand 2, single buffered']
    #allocation5 [shape = 's32[1]{0}', space=sflag, size = 0x4, scoped, tag = 'scoped memory for convnet_forward.3']
    #allocation6 [shape = 'u8[20480]{0}', space=vmem, size = 0x5000, scoped, tag = 'input window, operand 3, single buffered']
    %11 = vsyncpa [#allocation3], 0
    %12 = vsyncpa [#allocation5], 0
    // Predicated region
    $region2: #{convnet_forward.3} parent=1 // pred_check
      _
    $region3: #{convnet_forward.3} parent=1 // pred_check_branch
      %14 = sbr.rel (0) target = $region5
    $region4: #{convnet_forward.3} parent=1 // pred_region
      _
    $region5: #{convnet_forward.3} parent=1 // pred_fallthru
      _
    // Predicated region
    $region6: #{convnet_forward.3} parent=1 // pred_check
      _
    $region7: #{convnet_forward.3} parent=1 // pred_check_branch
      %16 = sbr.rel (0) target = $region9
    $region8: #{convnet_forward.3} parent=1 // pred_region
      %s18 = ssub.s32 1280, 1280
      %19 = vsyncadd [#allocation3], %s18
      %s20 = sshll.u32 [#allocation2], 4
      %s21 = int_to_ptr.vmem [resolvable:$true] %s20
      %26 = dma.hbm_to_vmem [thread:$0]  %s1, 1280, %s21, [#allocation3], 64, 64, 4
    $region9: #{convnet_forward.3} parent=1 // pred_fallthru
      _
    // Predicated region
    $region10: #{convnet_forward.3} parent=1 // pred_check
      _
    $region11: #{convnet_forward.3} parent=1 // pred_check_branch
      %28 = sbr.rel (0) target = $region13
    $region12: #{convnet_forward.3} parent=1 // pred_region
      %s30 = ssub.s32 16, 16
      %31 = vsyncadd [#allocation5], %s30
      %s33 = sshll.u32 [#allocation4], 4
      %s34 = int_to_ptr.vmem [resolvable:$true] %s33
      %36 = dma.hbm_to_vmem [thread:$0]  %s2, 16, %s34, [#allocation5]
    $region13: #{convnet_forward.3} parent=1 // pred_fallthru
      _
    // Predicated region
    $region14: #{convnet_forward.3} parent=1 // pred_check
      _
    $region15: #{convnet_forward.3} parent=1 // pred_check_branch
      %38 = sbr.rel (0) target = $region17
    $region16: #{convnet_forward.3} parent=1 // pred_region
      %s40 = ssub.s32 640, 640
      %41 = vsyncadd [#allocation5], %s40
      %s42 = sshll.u32 [#allocation6], 4
      %s43 = int_to_ptr.vmem [resolvable:$true] %s42
      %48 = dma.hbm_to_vmem [thread:$0]  %s3, 640, %s43, [#allocation5], 128, 128, 8
    $region17: #{convnet_forward.3} parent=1 // pred_fallthru
      _
    // Predicated region
    $region18: #{convnet_forward.3} parent=1 // pred_check
      _
    $region19: #{convnet_forward.3} parent=1 // pred_check_branch
      %50 = sbr.rel (0) target = $region21
    $region20: #{convnet_forward.3} parent=1 // pred_region
      _
    $region21: #{convnet_forward.3} parent=1 // pred_fallthru
      _
    // Predicated region
    $region22: #{convnet_forward.3} parent=1 // pred_check
      _
    $region23: #{convnet_forward.3} parent=1 // pred_check_branch
      %52 = sbr.rel (0) target = $region25
    $region24: #{convnet_forward.3} parent=1 // pred_region
      _
    $region25: #{convnet_forward.3} parent=1 // pred_fallthru
      _
    // Predicated region
    $region26: #{convnet_forward.3} parent=1 // pred_check
      _
    $region27: #{convnet_forward.3} parent=1 // pred_check_branch
      %54 = sbr.rel (0) target = $region29
    $region28: #{convnet_forward.3} parent=1 // pred_region
      %55 = dma.done [#allocation3], 1280
    $region29: #{convnet_forward.3} parent=1 // pred_fallthru
      _
    // Predicated region
    $region30: #{convnet_forward.3} parent=1 // pred_check
      _
    $region31: #{convnet_forward.3} parent=1 // pred_check_branch
      %57 = sbr.rel (0) target = $region33
    $region32: #{convnet_forward.3} parent=1 // pred_region
      %58 = dma.done [#allocation5], 16
    $region33: #{convnet_forward.3} parent=1 // pred_fallthru
      _
    // Predicated region
    $region34: #{convnet_forward.3} parent=1 // pred_check
      _
    $region35: #{convnet_forward.3} parent=1 // pred_check_branch
      %60 = sbr.rel (0) target = $region37
    $region36: #{convnet_forward.3} parent=1 // pred_region
      %61 = dma.done [#allocation5], 640
    $region37: #{convnet_forward.3} parent=1 // pred_fallthru
      _
    %v63 = vld [vmem:[%s0] sm:$0xff]
    %v64 = vld [vmem:[%s0 + $0x8] sm:$0xff]
    %v65 = vld [vmem:[%s0 + $0x10] sm:$0xff]
    %v66 = vld [vmem:[%s0 + $0x18] sm:$0xff]
    %v67 = vld [vmem:[%s0 + $0x20] sm:$0xff]
    %v68 = vld [vmem:[%s0 + $0x28] sm:$0xff]
    %v69 = vld [vmem:[%s0 + $0x30] sm:$0xff]
    %v70 = vld [vmem:[%s0 + $0x38] sm:$0xff]
    %v71 = vpack.c.bf16 %v64, %v63
    %v72 = vpack.c.bf16 %v66, %v65
    %v73 = vpack.c.bf16 %v68, %v67
    %v74 = vpack.c.bf16 %v70, %v69
    %v75 = vld [vmem:[#allocation2] sm:$0xf]
    %v76 = vld [vmem:[#allocation2 + $0x4] sm:$0xf]
    %v77 = vld [vmem:[#allocation2 + $0x8] sm:$0xf]
    %v78 = vld [vmem:[#allocation2 + $0xc] sm:$0xf]
    %s79 = scalar_lea.vmem [#allocation2], 16
    %v80 = vld [vmem:[%s79] sm:$0xf]
    %v81 = vld [vmem:[%s79 + $0x4] sm:$0xf]
    %v82 = vld [vmem:[%s79 + $0x8] sm:$0xf]
    %v83 = vld [vmem:[%s79 + $0xc] sm:$0xf]
    %vm84 = vsmask.f32 7424
    %v86 = vshrl.u32 %v71, 16
    %v88 = vshll.u32 %v71, 16
    %v90 = vrot.slane %v88, 1
    %v91 = vor.u32 %v86, %v90
    %v93 = vshll.u32 %v72, 16
    %v95 = vrot.slane %v93, 1
    %v96 = vsel %vm84, %v91, %v95
    %v97 = vshrl.u32 %v72, 16
    %v99 = vor.u32 %v97, %v95
    %v101 = vshll.u32 %v73, 16
    %v103 = vrot.slane %v101, 1
    %v104 = vsel %vm84, %v99, %v103
    %v105 = vshrl.u32 %v73, 16
    %v107 = vor.u32 %v105, %v103
    %v109 = vshll.u32 %v74, 16
    %v111 = vrot.slane %v109, 1
    %v112 = vsel %vm84, %v107, %v111
    %v113 = vshrl.u32 %v74, 16
    %v115 = vor.u32 %v113, %v111
    %v120 = vunpack.c.l.b16 %v80
    %v121 = vunpack.c.l.b16 %v81
    %v122 = vunpack.c.l.b16 %v82
    %v123 = vunpack.c.l.b16 %v83
    %v124 = vpack.c.b16 %v121, %v120
    %v125 = vpack.c.b16 %v123, %v122
    %vm128 = vcmask 261120
    %v130 = vsel %vm128, %v96, 0
    %v133 = vsel %vm128, %v104, 0
    %v136 = vsel %vm128, %v112, 0
    %v139 = vsel %vm128, %v115, 0
    %141 = vmatprep.subr.bf16.mxu0 0
    %142 = vmatpush1.bf16.msra.mxu0 %v124
    %143 = vmatprep.subr.bf16.mxu0 0
    %144 = vmatpush1.bf16.msra.mxu0 %v125
    %145 = vmatprep.subr.bf16.mxu0 0
    %146 = vmatpush1.bf16.msra.mxu0 0
    %147 = vmatprep.subr.bf16.mxu0 0
    %148 = vmatpush1.bf16.msra.mxu0 0
    %149 = vmatprep.subr.bf16.mxu0 0
    %150 = vmatpush1.bf16.msra.mxu0 0
    %151 = vmatprep.subr.bf16.mxu0 0
    %152 = vmatpush1.bf16.msra.mxu0 0
    %153 = vmatprep.subr.bf16.mxu0 0
    %154 = vmatpush1.bf16.msra.mxu0 0
    %155 = vmatprep.subr.bf16.mxu0 0
    %156 = vmatpush1.bf16.msra.mxu0 0
    %157 = vmatprep.subr.bf16.mxu0 0
    %158 = vmatpush1.bf16.msra.mxu0 0
    %159 = vmatprep.subr.bf16.mxu0 0
    %160 = vmatpush1.bf16.msra.mxu0 0
    %161 = vmatprep.subr.bf16.mxu0 0
    %162 = vmatpush1.bf16.msra.mxu0 0
    %163 = vmatprep.subr.bf16.mxu0 0
    %164 = vmatpush1.bf16.msra.mxu0 0
    %165 = vmatprep.subr.bf16.mxu0 0
    %166 = vmatpush1.bf16.msra.mxu0 0
    %167 = vmatprep.subr.bf16.mxu0 0
    %168 = vmatpush1.bf16.msra.mxu0 0
    %169 = vmatprep.subr.bf16.mxu0 0
    %170 = vmatpush1.bf16.msra.mxu0 0
    %171 = vmatprep.subr.bf16.mxu0 0
    %172 = vmatpush1.bf16.msra.mxu0 0
    %173 = vmatprep.mubr.bf16.mxu0 0
    %174 = vmatmul.mubr.bf16.gmra.mrb[0].mxu0 %v130
    %v175 = vpop.f32.mrb[0].mxu0
    %v176 = vadd.f32 0.0, %v175
    %v177 = vpop.f32.mrb[0].mxu0
    %v178 = vpop.f32.mrb[0].mxu0
    %v179 = vadd.f32 0.0, %v178
    %v180 = vpop.f32.mrb[0].mxu0
    %181 = vmatprep.mubr.bf16.mxu0 0
    %182 = vmatmul.mubr.bf16.gmra.mrb[0].mxu0 %v133
    %v183 = vpop.f32.mrb[0].mxu0
    %v184 = vadd.f32 0.0, %v183
    %v185 = vpop.f32.mrb[0].mxu0
    %v186 = vpop.f32.mrb[0].mxu0
    %v187 = vadd.f32 0.0, %v186
    %v188 = vpop.f32.mrb[0].mxu0
    %189 = vmatprep.mubr.bf16.mxu0 0
    %190 = vmatmul.mubr.bf16.gmra.mrb[0].mxu0 %v136
    %v191 = vpop.f32.mrb[0].mxu0
    %v192 = vadd.f32 0.0, %v191
    %v193 = vpop.f32.mrb[0].mxu0
    %v194 = vpop.f32.mrb[0].mxu0
    %v195 = vadd.f32 0.0, %v194
    %v196 = vpop.f32.mrb[0].mxu0
    %197 = vmatprep.mubr.bf16.mxu0 0
    %198 = vmatmul.mubr.bf16.gmra.mrb[0].mxu0 %v139
    %v199 = vpop.f32.mrb[0].mxu0
    %v200 = vadd.f32 0.0, %v199
    %v201 = vpop.f32.mrb[0].mxu0
    %v202 = vpop.f32.mrb[0].mxu0
    %v203 = vadd.f32 0.0, %v202
    %v204 = vpop.f32.mrb[0].mxu0
    %205 = vdwg.mxu0
    %v210 = vunpack.c.l.b16 %v75
    %v211 = vunpack.c.l.b16 %v76
    %v212 = vunpack.c.l.b16 %v77
    %v213 = vunpack.c.l.b16 %v78
    %v214 = vpack.c.b16 %v211, %v210
    %v215 = vpack.c.b16 %v213, %v212
    %v218 = vsel %vm128, %v71, 0
    %v220 = vsel %vm128, %v72, 0
    %v222 = vsel %vm128, %v73, 0
    %v224 = vsel %vm128, %v74, 0
    %226 = vmatprep.subr.bf16.mxu0 0
    %227 = vmatpush1.bf16.msra.mxu0 %v214
    %228 = vmatprep.subr.bf16.mxu0 0
    %229 = vmatpush1.bf16.msra.mxu0 %v215
    %230 = vmatprep.subr.bf16.mxu0 0
    %231 = vmatpush1.bf16.msra.mxu0 0
    %232 = vmatprep.subr.bf16.mxu0 0
    %233 = vmatpush1.bf16.msra.mxu0 0
    %234 = vmatprep.subr.bf16.mxu0 0
    %235 = vmatpush1.bf16.msra.mxu0 0
    %236 = vmatprep.subr.bf16.mxu0 0
    %237 = vmatpush1.bf16.msra.mxu0 0
    %238 = vmatprep.subr.bf16.mxu0 0
    %239 = vmatpush1.bf16.msra.mxu0 0
    %240 = vmatprep.subr.bf16.mxu0 0
    %241 = vmatpush1.bf16.msra.mxu0 0
    %242 = vmatprep.subr.bf16.mxu0 0
    %243 = vmatpush1.bf16.msra.mxu0 0
    %244 = vmatprep.subr.bf16.mxu0 0
    %245 = vmatpush1.bf16.msra.mxu0 0
    %246 = vmatprep.subr.bf16.mxu0 0
    %247 = vmatpush1.bf16.msra.mxu0 0
    %248 = vmatprep.subr.bf16.mxu0 0
    %249 = vmatpush1.bf16.msra.mxu0 0
    %250 = vmatprep.subr.bf16.mxu0 0
    %251 = vmatpush1.bf16.msra.mxu0 0
    %252 = vmatprep.subr.bf16.mxu0 0
    %253 = vmatpush1.bf16.msra.mxu0 0
    %254 = vmatprep.subr.bf16.mxu0 0
    %255 = vmatpush1.bf16.msra.mxu0 0
    %256 = vmatprep.subr.bf16.mxu0 0
    %257 = vmatpush1.bf16.msra.mxu0 0
    %258 = vmatprep.mubr.bf16.mxu0 0
    %259 = vmatmul.mubr.bf16.gmra.mrb[0].mxu0 %v218
    %v260 = vpop.f32.mrb[0].mxu0
    %v261 = vadd.f32 %v176, %v260
    %v262 = vpop.f32.mrb[0].mxu0
    %v263 = vpop.f32.mrb[0].mxu0
    %v264 = vadd.f32 %v179, %v263
    %v265 = vpop.f32.mrb[0].mxu0
    %266 = vmatprep.mubr.bf16.mxu0 0
    %267 = vmatmul.mubr.bf16.gmra.mrb[0].mxu0 %v220
    %v268 = vpop.f32.mrb[0].mxu0
    %v269 = vadd.f32 %v184, %v268
    %v270 = vpop.f32.mrb[0].mxu0
    %v271 = vpop.f32.mrb[0].mxu0
    %v272 = vadd.f32 %v187, %v271
    %v273 = vpop.f32.mrb[0].mxu0
    %274 = vmatprep.mubr.bf16.mxu0 0
    %275 = vmatmul.mubr.bf16.gmra.mrb[0].mxu0 %v222
    %v276 = vpop.f32.mrb[0].mxu0
    %v277 = vadd.f32 %v192, %v276
    %v278 = vpop.f32.mrb[0].mxu0
    %v279 = vpop.f32.mrb[0].mxu0
    %v280 = vadd.f32 %v195, %v279
    %v281 = vpop.f32.mrb[0].mxu0
    %282 = vmatprep.mubr.bf16.mxu0 0
    %283 = vmatmul.mubr.bf16.gmra.mrb[0].mxu0 %v224
    %v284 = vpop.f32.mrb[0].mxu0
    %v285 = vadd.f32 %v200, %v284
    %v286 = vpop.f32.mrb[0].mxu0
    %v287 = vpop.f32.mrb[0].mxu0
    %v288 = vadd.f32 %v203, %v287
    %v289 = vpop.f32.mrb[0].mxu0
    %290 = vdwg.mxu0
    %s291 = scalar_lea.vmem [#allocation2], 32
    %v292 = vld [vmem:[%s291] sm:$0xf]
    %v293 = vld [vmem:[%s291 + $0x4] sm:$0xf]
    %v294 = vld [vmem:[%s291 + $0x8] sm:$0xf]
    %v295 = vld [vmem:[%s291 + $0xc] sm:$0xf]
    %vm300 = vcmask 1046528
    %v301 = vrot.slane %v71, 1
    %v302 = vrot.slane %v72, 1
    %v303 = vsel %vm300, %v301, %v302
    %v304 = vrot.slane %v73, 1
    %v305 = vsel %vm300, %v302, %v304
    %v306 = vrot.slane %v74, 1
    %v307 = vsel %vm300, %v304, %v306
    %v312 = vunpack.c.l.b16 %v292
    %v313 = vunpack.c.l.b16 %v293
    %v314 = vunpack.c.l.b16 %v294
    %v315 = vunpack.c.l.b16 %v295
    %v316 = vpack.c.b16 %v313, %v312
    %v317 = vpack.c.b16 %v315, %v314
    %v321 = vsel %vm128, %v303, 0
    %v324 = vsel %vm128, %v305, 0
    %v327 = vsel %vm128, %v307, 0
    %v330 = vsel %vm128, %v306, 0
    %332 = vmatprep.subr.bf16.mxu0 0
    %333 = vmatpush1.bf16.msra.mxu0 %v316
    %334 = vmatprep.subr.bf16.mxu0 0
    %335 = vmatpush1.bf16.msra.mxu0 %v317
    %336 = vmatprep.subr.bf16.mxu0 0
    %337 = vmatpush1.bf16.msra.mxu0 0
    %338 = vmatprep.subr.bf16.mxu0 0
    %339 = vmatpush1.bf16.msra.mxu0 0
    %340 = vmatprep.subr.bf16.mxu0 0
    %341 = vmatpush1.bf16.msra.mxu0 0
    %342 = vmatprep.subr.bf16.mxu0 0
    %343 = vmatpush1.bf16.msra.mxu0 0
    %344 = vmatprep.subr.bf16.mxu0 0
    %345 = vmatpush1.bf16.msra.mxu0 0
    %346 = vmatprep.subr.bf16.mxu0 0
    %347 = vmatpush1.bf16.msra.mxu0 0
    %348 = vmatprep.subr.bf16.mxu0 0
    %349 = vmatpush1.bf16.msra.mxu0 0
    %350 = vmatprep.subr.bf16.mxu0 0
    %351 = vmatpush1.bf16.msra.mxu0 0
    %352 = vmatprep.subr.bf16.mxu0 0
    %353 = vmatpush1.bf16.msra.mxu0 0
    %354 = vmatprep.subr.bf16.mxu0 0
    %355 = vmatpush1.bf16.msra.mxu0 0
    %356 = vmatprep.subr.bf16.mxu0 0
    %357 = vmatpush1.bf16.msra.mxu0 0
    %358 = vmatprep.subr.bf16.mxu0 0
    %359 = vmatpush1.bf16.msra.mxu0 0
    %360 = vmatprep.subr.bf16.mxu0 0
    %361 = vmatpush1.bf16.msra.mxu0 0
    %362 = vmatprep.subr.bf16.mxu0 0
    %363 = vmatpush1.bf16.msra.mxu0 0
    %364 = vmatprep.mubr.bf16.mxu0 0
    %365 = vmatmul.mubr.bf16.gmra.mrb[0].mxu0 %v321
    %v366 = vpop.f32.mrb[0].mxu0
    %v367 = vadd.f32 0.0, %v366
    %v368 = vpop.f32.mrb[0].mxu0
    %v369 = vpop.f32.mrb[0].mxu0
    %v370 = vadd.f32 0.0, %v369
    %v371 = vpop.f32.mrb[0].mxu0
    %372 = vmatprep.mubr.bf16.mxu0 0
    %373 = vmatmul.mubr.bf16.gmra.mrb[0].mxu0 %v324
    %v374 = vpop.f32.mrb[0].mxu0
    %v375 = vadd.f32 0.0, %v374
    %v376 = vpop.f32.mrb[0].mxu0
    %v377 = vpop.f32.mrb[0].mxu0
    %v378 = vadd.f32 0.0, %v377
    %v379 = vpop.f32.mrb[0].mxu0
    %380 = vmatprep.mubr.bf16.mxu0 0
    %381 = vmatmul.mubr.bf16.gmra.mrb[0].mxu0 %v327
    %v382 = vpop.f32.mrb[0].mxu0
    %v383 = vadd.f32 0.0, %v382
    %v384 = vpop.f32.mrb[0].mxu0
    %v385 = vpop.f32.mrb[0].mxu0
    %v386 = vadd.f32 0.0, %v385
    %v387 = vpop.f32.mrb[0].mxu0
    %388 = vmatprep.mubr.bf16.mxu0 0
    %389 = vmatmul.mubr.bf16.gmra.mrb[0].mxu0 %v330
    %v390 = vpop.f32.mrb[0].mxu0
    %v391 = vadd.f32 0.0, %v390
    %v392 = vpop.f32.mrb[0].mxu0
    %v393 = vpop.f32.mrb[0].mxu0
    %v394 = vadd.f32 0.0, %v393
    %v395 = vpop.f32.mrb[0].mxu0
    %396 = vdwg.mxu0
    %v397 = vadd.f32 %v261, %v367
    %v398 = vadd.f32 %v264, %v370
    %v399 = vadd.f32 %v269, %v375
    %v400 = vadd.f32 %v272, %v378
    %v401 = vadd.f32 %v277, %v383
    %v402 = vadd.f32 %v280, %v386
    %v403 = vadd.f32 %v285, %v391
    %v404 = vadd.f32 %v288, %v394
    %s405 = scalar_lea.vmem [#allocation2], 48
    %v406 = vld [vmem:[%s405] sm:$0xf]
    %v407 = vld [vmem:[%s405 + $0x4] sm:$0xf]
    %v408 = vld [vmem:[%s405 + $0x8] sm:$0xf]
    %v409 = vld [vmem:[%s405 + $0xc] sm:$0xf]
    %vm410 = vsmask.f32 6400
    %v411 = vrot.slane %v86, 1
    %v412 = vrot.slane %v88, 2
    %v413 = vor.u32 %v411, %v412
    %v414 = vrot.slane %v97, 1
    %v415 = vrot.slane %v93, 2
    %v416 = vor.u32 %v414, %v415
    %v417 = vsel %vm410, %v413, %v416
    %v418 = vrot.slane %v105, 1
    %v419 = vrot.slane %v101, 2
    %v420 = vor.u32 %v418, %v419
    %v421 = vsel %vm410, %v416, %v420
    %v422 = vrot.slane %v113, 1
    %v423 = vrot.slane %v109, 2
    %v424 = vor.u32 %v422, %v423
    %v425 = vsel %vm410, %v420, %v424
    %v430 = vunpack.c.l.b16 %v406
    %v431 = vunpack.c.l.b16 %v407
    %v432 = vunpack.c.l.b16 %v408
    %v433 = vunpack.c.l.b16 %v409
    %v434 = vpack.c.b16 %v431, %v430
    %v435 = vpack.c.b16 %v433, %v432
    %v439 = vsel %vm128, %v417, 0
    %v442 = vsel %vm128, %v421, 0
    %v445 = vsel %vm128, %v425, 0
    %v448 = vsel %vm128, %v424, 0
    %450 = vmatprep.subr.bf16.mxu0 0
    %451 = vmatpush1.bf16.msra.mxu0 %v434
    %452 = vmatprep.subr.bf16.mxu0 0
    %453 = vmatpush1.bf16.msra.mxu0 %v435
    %454 = vmatprep.subr.bf16.mxu0 0
    %455 = vmatpush1.bf16.msra.mxu0 0
    %456 = vmatprep.subr.bf16.mxu0 0
    %457 = vmatpush1.bf16.msra.mxu0 0
    %458 = vmatprep.subr.bf16.mxu0 0
    %459 = vmatpush1.bf16.msra.mxu0 0
    %460 = vmatprep.subr.bf16.mxu0 0
    %461 = vmatpush1.bf16.msra.mxu0 0
    %462 = vmatprep.subr.bf16.mxu0 0
    %463 = vmatpush1.bf16.msra.mxu0 0
    %464 = vmatprep.subr.bf16.mxu0 0
    %465 = vmatpush1.bf16.msra.mxu0 0
    %466 = vmatprep.subr.bf16.mxu0 0
    %467 = vmatpush1.bf16.msra.mxu0 0
    %468 = vmatprep.subr.bf16.mxu0 0
    %469 = vmatpush1.bf16.msra.mxu0 0
    %470 = vmatprep.subr.bf16.mxu0 0
    %471 = vmatpush1.bf16.msra.mxu0 0
    %472 = vmatprep.subr.bf16.mxu0 0
    %473 = vmatpush1.bf16.msra.mxu0 0
    %474 = vmatprep.subr.bf16.mxu0 0
    %475 = vmatpush1.bf16.msra.mxu0 0
    %476 = vmatprep.subr.bf16.mxu0 0
    %477 = vmatpush1.bf16.msra.mxu0 0
    %478 = vmatprep.subr.bf16.mxu0 0
    %479 = vmatpush1.bf16.msra.mxu0 0
    %480 = vmatprep.subr.bf16.mxu0 0
    %481 = vmatpush1.bf16.msra.mxu0 0
    %482 = vmatprep.mubr.bf16.mxu0 0
    %483 = vmatmul.mubr.bf16.gmra.mrb[0].mxu0 %v439
    %v484 = vpop.f32.mrb[0].mxu0
    %v485 = vadd.f32 0.0, %v484
    %v486 = vpop.f32.mrb[0].mxu0
    %v487 = vpop.f32.mrb[0].mxu0
    %v488 = vadd.f32 0.0, %v487
    %v489 = vpop.f32.mrb[0].mxu0
    %490 = vmatprep.mubr.bf16.mxu0 0
    %491 = vmatmul.mubr.bf16.gmra.mrb[0].mxu0 %v442
    %v492 = vpop.f32.mrb[0].mxu0
    %v493 = vadd.f32 0.0, %v492
    %v494 = vpop.f32.mrb[0].mxu0
    %v495 = vpop.f32.mrb[0].mxu0
    %v496 = vadd.f32 0.0, %v495
    %v497 = vpop.f32.mrb[0].mxu0
    %498 = vmatprep.mubr.bf16.mxu0 0
    %499 = vmatmul.mubr.bf16.gmra.mrb[0].mxu0 %v445
    %v500 = vpop.f32.mrb[0].mxu0
    %v501 = vadd.f32 0.0, %v500
    %v502 = vpop.f32.mrb[0].mxu0
    %v503 = vpop.f32.mrb[0].mxu0
    %v504 = vadd.f32 0.0, %v503
    %v505 = vpop.f32.mrb[0].mxu0
    %506 = vmatprep.mubr.bf16.mxu0 0
    %507 = vmatmul.mubr.bf16.gmra.mrb[0].mxu0 %v448
    %v508 = vpop.f32.mrb[0].mxu0
    %v509 = vadd.f32 0.0, %v508
    %v510 = vpop.f32.mrb[0].mxu0
    %v511 = vpop.f32.mrb[0].mxu0
    %v512 = vadd.f32 0.0, %v511
    %v513 = vpop.f32.mrb[0].mxu0
    %514 = vdwg.mxu0
    %v515 = vadd.f32 %v397, %v485
    %v516 = vadd.f32 %v398, %v488
    %v517 = vadd.f32 %v399, %v493
    %v518 = vadd.f32 %v400, %v496
    %v519 = vadd.f32 %v401, %v501
    %v520 = vadd.f32 %v402, %v504
    %v521 = vadd.f32 %v403, %v509
    %v522 = vadd.f32 %v404, %v512
    %s523 = scalar_lea.vmem [#allocation2], 64
    %v524 = vld [vmem:[%s523] sm:$0xf]
    %v525 = vld [vmem:[%s523 + $0x4] sm:$0xf]
    %v526 = vld [vmem:[%s523 + $0x8] sm:$0xf]
    %v527 = vld [vmem:[%s523 + $0xc] sm:$0xf]
    %vm528 = vcmask 1045504
    %v529 = vrot.slane %v71, 2
    %v530 = vrot.slane %v72, 2
    %v531 = vsel %vm528, %v529, %v530
    %v532 = vrot.slane %v73, 2
    %v533 = vsel %vm528, %v530, %v532
    %v534 = vrot.slane %v74, 2
    %v535 = vsel %vm528, %v532, %v534
    %v540 = vunpack.c.l.b16 %v524
    %v541 = vunpack.c.l.b16 %v525
    %v542 = vunpack.c.l.b16 %v526
    %v543 = vunpack.c.l.b16 %v527
    %v544 = vpack.c.b16 %v541, %v540
    %v545 = vpack.c.b16 %v543, %v542
    %v549 = vsel %vm128, %v531, 0
    %v552 = vsel %vm128, %v533, 0
    %v555 = vsel %vm128, %v535, 0
    %v558 = vsel %vm128, %v534, 0
    %560 = vmatprep.subr.bf16.mxu0 0
    %561 = vmatpush1.bf16.msra.mxu0 %v544
    %562 = vmatprep.subr.bf16.mxu0 0
    %563 = vmatpush1.bf16.msra.mxu0 %v545
    %564 = vmatprep.subr.bf16.mxu0 0
    %565 = vmatpush1.bf16.msra.mxu0 0
    %566 = vmatprep.subr.bf16.mxu0 0
    %567 = vmatpush1.bf16.msra.mxu0 0
    %568 = vmatprep.subr.bf16.mxu0 0
    %569 = vmatpush1.bf16.msra.mxu0 0
    %570 = vmatprep.subr.bf16.mxu0 0
    %571 = vmatpush1.bf16.msra.mxu0 0
    %572 = vmatprep.subr.bf16.mxu0 0
    %573 = vmatpush1.bf16.msra.mxu0 0
    %574 = vmatprep.subr.bf16.mxu0 0
    %575 = vmatpush1.bf16.msra.mxu0 0
    %576 = vmatprep.subr.bf16.mxu0 0
    %577 = vmatpush1.bf16.msra.mxu0 0
    %578 = vmatprep.subr.bf16.mxu0 0
    %579 = vmatpush1.bf16.msra.mxu0 0
    %580 = vmatprep.subr.bf16.mxu0 0
    %581 = vmatpush1.bf16.msra.mxu0 0
    %582 = vmatprep.subr.bf16.mxu0 0
    %583 = vmatpush1.bf16.msra.mxu0 0
    %584 = vmatprep.subr.bf16.mxu0 0
    %585 = vmatpush1.bf16.msra.mxu0 0
    %586 = vmatprep.subr.bf16.mxu0 0
    %587 = vmatpush1.bf16.msra.mxu0 0
    %588 = vmatprep.subr.bf16.mxu0 0
    %589 = vmatpush1.bf16.msra.mxu0 0
    %590 = vmatprep.subr.bf16.mxu0 0
    %591 = vmatpush1.bf16.msra.mxu0 0
    %592 = vmatprep.mubr.bf16.mxu0 0
    %593 = vmatmul.mubr.bf16.gmra.mrb[0].mxu0 %v549
    %v594 = vpop.f32.mrb[0].mxu0
    %v595 = vadd.f32 0.0, %v594
    %v596 = vpop.f32.mrb[0].mxu0
    %v597 = vpop.f32.mrb[0].mxu0
    %v598 = vadd.f32 0.0, %v597
    %v599 = vpop.f32.mrb[0].mxu0
    %600 = vmatprep.mubr.bf16.mxu0 0
    %601 = vmatmul.mubr.bf16.gmra.mrb[0].mxu0 %v552
    %v602 = vpop.f32.mrb[0].mxu0
    %v603 = vadd.f32 0.0, %v602
    %v604 = vpop.f32.mrb[0].mxu0
    %v605 = vpop.f32.mrb[0].mxu0
    %v606 = vadd.f32 0.0, %v605
    %v607 = vpop.f32.mrb[0].mxu0
    %608 = vmatprep.mubr.bf16.mxu0 0
    %609 = vmatmul.mubr.bf16.gmra.mrb[0].mxu0 %v555
    %v610 = vpop.f32.mrb[0].mxu0
    %v611 = vadd.f32 0.0, %v610
    %v612 = vpop.f32.mrb[0].mxu0
    %v613 = vpop.f32.mrb[0].mxu0
    %v614 = vadd.f32 0.0, %v613
    %v615 = vpop.f32.mrb[0].mxu0
    %616 = vmatprep.mubr.bf16.mxu0 0
    %617 = vmatmul.mubr.bf16.gmra.mrb[0].mxu0 %v558
    %v618 = vpop.f32.mrb[0].mxu0
    %v619 = vadd.f32 0.0, %v618
    %v620 = vpop.f32.mrb[0].mxu0
    %v621 = vpop.f32.mrb[0].mxu0
    %v622 = vadd.f32 0.0, %v621
    %v623 = vpop.f32.mrb[0].mxu0
    %624 = vdwg.mxu0
    %v625 = vadd.f32 %v515, %v595
    %v626 = vadd.f32 %v516, %v598
    %v627 = vadd.f32 %v517, %v603
    %v628 = vadd.f32 %v518, %v606
    %v629 = vadd.f32 %v519, %v611
    %v630 = vadd.f32 %v520, %v614
    %v631 = vadd.f32 %v521, %v619
    %v632 = vadd.f32 %v522, %v622
    %v633 = vld [vmem:[#allocation4] sm:$0x1]
    %v635 = vlaneseq
    %v636 = vshrl.u32 %v635, 7
    %v637 = vsub.s32 0, %v636
    %v638 = vrot.slane %v633, %v637
    %v640 = vadd.f32 %v625, %v638
    %v641 = vadd.f32 %v626, %v638
    %v642 = vadd.f32 %v627, %v638
    %v643 = vadd.f32 %v628, %v638
    %v644 = vadd.f32 %v629, %v638
    %v645 = vadd.f32 %v630, %v638
    %v646 = vadd.f32 %v631, %v638
    %v647 = vadd.f32 %v632, %v638
    %v648 = vmax.f32 %v640, 0.0
    %v649 = vmax.f32 %v641, 0.0
    %v650 = vmax.f32 %v642, 0.0
    %v651 = vmax.f32 %v643, 0.0
    %v652 = vmax.f32 %v644, 0.0
    %v653 = vmax.f32 %v645, 0.0
    %v654 = vmax.f32 %v646, 0.0
    %v655 = vmax.f32 %v647, 0.0
    %vm664 = vcmask 1046528
    %v665 = vrot.slane %v648, 1
    %v666 = vrot.slane %v649, 1
    %v667 = vsel %vm664, %v665, %v666
    %v668 = vrot.slane %v650, 1
    %v669 = vsel %vm664, %v666, %v668
    %v670 = vrot.slane %v651, 1
    %v671 = vsel %vm664, %v668, %v670
    %v672 = vrot.slane %v652, 1
    %v673 = vsel %vm664, %v670, %v672
    %v674 = vrot.slane %v653, 1
    %v675 = vsel %vm664, %v672, %v674
    %v676 = vrot.slane %v654, 1
    %v677 = vsel %vm664, %v674, %v676
    %v678 = vrot.slane %v655, 1
    %v679 = vsel %vm664, %v676, %v678
    %v688 = vmax.f32 %v648, %v667
    %v689 = vmax.f32 %v649, %v669
    %v690 = vmax.f32 %v650, %v671
    %v691 = vmax.f32 %v651, %v673
    %v692 = vmax.f32 %v652, %v675
    %v693 = vmax.f32 %v653, %v677
    %v694 = vmax.f32 %v654, %v679
    %v695 = vmax.f32 %v655, %v678
    %v696 = vld [vmem:[%s4] sm:$0xff]
    %v697 = vld [vmem:[%s4 + $0x8] sm:$0xff]
    %v698 = vld [vmem:[%s4 + $0x10] sm:$0xff]
    %v699 = vld [vmem:[%s4 + $0x18] sm:$0xff]
    %v700 = vld [vmem:[%s4 + $0x20] sm:$0xff]
    %v701 = vld [vmem:[%s4 + $0x28] sm:$0xff]
    %v702 = vld [vmem:[%s4 + $0x30] sm:$0xff]
    %v703 = vld [vmem:[%s4 + $0x38] sm:$0xff]
    %v704 = vld [vmem:[%s4 + $0x40] sm:$0xff]
    %v705 = vld [vmem:[%s4 + $0x48] sm:$0xff]
    %v706 = vld [vmem:[%s4 + $0x50] sm:$0xff]
    %v707 = vld [vmem:[%s4 + $0x58] sm:$0xff]
    %v708 = vld [vmem:[%s4 + $0x60] sm:$0xff]
    %v709 = vld [vmem:[%s4 + $0x68] sm:$0xff]
    %vm710 = vcmask 916480
    %v712 = vsel %vm710, %v688, 0
    %v715 = vsel %vm710, %v689, 0
    %v718 = vsel %vm710, %v690, 0
    %v721 = vsel %vm710, %v691, 0
    %v724 = vsel %vm710, %v692, 0
    %v727 = vsel %vm710, %v693, 0
    %v730 = vsel %vm710, %v694, 0
    %v733 = vsel %vm710, %v695, 0
    %735 = vmatprep.subr.mxu0 0.0
    %736 = vmatpush1.msra.mxu0 %v696
    %737 = vmatprep.subr.mxu0 0.0
    %738 = vmatpush1.msra.mxu0 %v697
    %739 = vmatprep.subr.mxu0 0.0
    %740 = vmatpush1.msra.mxu0 %v698
    %741 = vmatprep.subr.mxu0 0.0
    %742 = vmatpush1.msra.mxu0 %v699
    %743 = vmatprep.subr.mxu0 0.0
    %744 = vmatpush1.msra.mxu0 %v700
    %745 = vmatprep.subr.mxu0 0.0
    %746 = vmatpush1.msra.mxu0 %v701
    %747 = vmatprep.subr.mxu0 0.0
    %748 = vmatpush1.msra.mxu0 %v702
    %749 = vmatprep.subr.mxu0 0.0
    %750 = vmatpush1.msra.mxu0 %v703
    %751 = vmatprep.subr.mxu0 0.0
    %752 = vmatpush1.msra.mxu0 %v704
    %753 = vmatprep.subr.mxu0 0.0
    %754 = vmatpush1.msra.mxu0 %v705
    %755 = vmatprep.subr.mxu0 0.0
    %756 = vmatpush1.msra.mxu0 %v706
    %757 = vmatprep.subr.mxu0 0.0
    %758 = vmatpush1.msra.mxu0 %v707
    %759 = vmatprep.subr.mxu0 0.0
    %760 = vmatpush1.msra.mxu0 %v708
    %761 = vmatprep.subr.mxu0 0.0
    %762 = vmatpush1.msra.mxu0 %v709
    %763 = vmatprep.subr.mxu0 0.0
    %764 = vmatpush1.msra.mxu0 0.0
    %765 = vmatprep.subr.mxu0 0.0
    %766 = vmatpush1.msra.mxu0 0.0
    %767 = vmatprep.subr.mxu0 0.0
    %768 = vmatpush1.msra.mxu0 0.0
    %769 = vmatprep.subr.mxu0 0.0
    %770 = vmatpush1.msra.mxu0 0.0
    %771 = vmatprep.subr.mxu0 0.0
    %772 = vmatpush1.msra.mxu0 0.0
    %773 = vmatprep.subr.mxu0 0.0
    %774 = vmatpush1.msra.mxu0 0.0
    %775 = vmatprep.subr.mxu0 0.0
    %776 = vmatpush1.msra.mxu0 0.0
    %777 = vmatprep.subr.mxu0 0.0
    %778 = vmatpush1.msra.mxu0 0.0
    %779 = vmatprep.subr.mxu0 0.0
    %780 = vmatpush1.msra.mxu0 0.0
    %781 = vmatprep.subr.mxu0 0.0
    %782 = vmatpush1.msra.mxu0 0.0
    %783 = vmatprep.subr.mxu0 0.0
    %784 = vmatpush1.msra.mxu0 0.0
    %785 = vmatprep.subr.mxu0 0.0
    %786 = vmatpush1.msra.mxu0 0.0
    %787 = vmatprep.subr.mxu0 0.0
    %788 = vmatpush1.msra.mxu0 0.0
    %789 = vmatprep.subr.mxu0 0.0
    %790 = vmatpush1.msra.mxu0 0.0
    %791 = vmatprep.subr.mxu0 0.0
    %792 = vmatpush1.msra.mxu0 0.0
    %793 = vmatprep.subr.mxu0 0.0
    %794 = vmatpush1.msra.mxu0 0.0
    %795 = vmatprep.subr.mxu0 0.0
    %796 = vmatpush1.msra.mxu0 0.0
    %797 = vmatprep.subr.mxu0 0.0
    %798 = vmatpush1.msra.mxu0 0.0
    %799 = vmatprep.mubr.f32.mxu0 0.0
    %800 = vmatmul.mubr.f32.gmra.mrb[0].mxu0 %v712
    %v801 = vpop.f32.mrb[0].mxu0
    %v802 = vadd.f32 0.0, %v801
    %v803 = vpop.f32.mrb[0].mxu0
    %804 = vmatprep.mubr.f32.mxu0 0.0
    %805 = vmatmul.mubr.f32.gmra.mrb[0].mxu0 %v715
    %v806 = vpop.f32.mrb[0].mxu0
    %v807 = vadd.f32 0.0, %v806
    %v808 = vpop.f32.mrb[0].mxu0
    %809 = vmatprep.mubr.f32.mxu0 0.0
    %810 = vmatmul.mubr.f32.gmra.mrb[0].mxu0 %v718
    %v811 = vpop.f32.mrb[0].mxu0
    %v812 = vadd.f32 0.0, %v811
    %v813 = vpop.f32.mrb[0].mxu0
    %814 = vmatprep.mubr.f32.mxu0 0.0
    %815 = vmatmul.mubr.f32.gmra.mrb[0].mxu0 %v721
    %v816 = vpop.f32.mrb[0].mxu0
    %v817 = vadd.f32 0.0, %v816
    %v818 = vpop.f32.mrb[0].mxu0
    %819 = vmatprep.mubr.f32.mxu0 0.0
    %820 = vmatmul.mubr.f32.gmra.mrb[0].mxu0 %v724
    %v821 = vpop.f32.mrb[0].mxu0
    %v822 = vadd.f32 0.0, %v821
    %v823 = vpop.f32.mrb[0].mxu0
    %824 = vmatprep.mubr.f32.mxu0 0.0
    %825 = vmatmul.mubr.f32.gmra.mrb[0].mxu0 %v727
    %v826 = vpop.f32.mrb[0].mxu0
    %v827 = vadd.f32 0.0, %v826
    %v828 = vpop.f32.mrb[0].mxu0
    %829 = vmatprep.mubr.f32.mxu0 0.0
    %830 = vmatmul.mubr.f32.gmra.mrb[0].mxu0 %v730
    %v831 = vpop.f32.mrb[0].mxu0
    %v832 = vadd.f32 0.0, %v831
    %v833 = vpop.f32.mrb[0].mxu0
    %834 = vmatprep.mubr.f32.mxu0 0.0
    %835 = vmatmul.mubr.f32.gmra.mrb[0].mxu0 %v733
    %v836 = vpop.f32.mrb[0].mxu0
    %v837 = vadd.f32 0.0, %v836
    %v838 = vpop.f32.mrb[0].mxu0
    %839 = vdwg.mxu0
    %v840 = vld [vmem:[%s5] sm:$0xff]
    %v841 = vld [vmem:[%s5 + $0x8] sm:$0xff]
    %v842 = vld [vmem:[%s5 + $0x10] sm:$0xff]
    %v843 = vld [vmem:[%s5 + $0x18] sm:$0xff]
    %v844 = vld [vmem:[%s5 + $0x20] sm:$0xff]
    %v845 = vld [vmem:[%s5 + $0x28] sm:$0xff]
    %v846 = vld [vmem:[%s5 + $0x30] sm:$0xff]
    %v847 = vld [vmem:[%s5 + $0x38] sm:$0xff]
    %v848 = vld [vmem:[%s5 + $0x40] sm:$0xff]
    %v849 = vld [vmem:[%s5 + $0x48] sm:$0xff]
    %v850 = vld [vmem:[%s5 + $0x50] sm:$0xff]
    %v851 = vld [vmem:[%s5 + $0x58] sm:$0xff]
    %v852 = vld [vmem:[%s5 + $0x60] sm:$0xff]
    %v853 = vld [vmem:[%s5 + $0x68] sm:$0xff]
    %854 = vmatprep.subr.mxu0 0.0
    %855 = vmatpush1.msra.mxu0 %v840
    %856 = vmatprep.subr.mxu0 0.0
    %857 = vmatpush1.msra.mxu0 %v841
    %858 = vmatprep.subr.mxu0 0.0
    %859 = vmatpush1.msra.mxu0 %v842
    %860 = vmatprep.subr.mxu0 0.0
    %861 = vmatpush1.msra.mxu0 %v843
    %862 = vmatprep.subr.mxu0 0.0
    %863 = vmatpush1.msra.mxu0 %v844
    %864 = vmatprep.subr.mxu0 0.0
    %865 = vmatpush1.msra.mxu0 %v845
    %866 = vmatprep.subr.mxu0 0.0
    %867 = vmatpush1.msra.mxu0 %v846
    %868 = vmatprep.subr.mxu0 0.0
    %869 = vmatpush1.msra.mxu0 %v847
    %870 = vmatprep.subr.mxu0 0.0
    %871 = vmatpush1.msra.mxu0 %v848
    %872 = vmatprep.subr.mxu0 0.0
    %873 = vmatpush1.msra.mxu0 %v849
    %874 = vmatprep.subr.mxu0 0.0
    %875 = vmatpush1.msra.mxu0 %v850
    %876 = vmatprep.subr.mxu0 0.0
    %877 = vmatpush1.msra.mxu0 %v851
    %878 = vmatprep.subr.mxu0 0.0
    %879 = vmatpush1.msra.mxu0 %v852
    %880 = vmatprep.subr.mxu0 0.0
    %881 = vmatpush1.msra.mxu0 %v853
    %882 = vmatprep.subr.mxu0 0.0
    %883 = vmatpush1.msra.mxu0 0.0
    %884 = vmatprep.subr.mxu0 0.0
    %885 = vmatpush1.msra.mxu0 0.0
    %886 = vmatprep.subr.mxu0 0.0
    %887 = vmatpush1.msra.mxu0 0.0
    %888 = vmatprep.subr.mxu0 0.0
    %889 = vmatpush1.msra.mxu0 0.0
    %890 = vmatprep.subr.mxu0 0.0
    %891 = vmatpush1.msra.mxu0 0.0
    %892 = vmatprep.subr.mxu0 0.0
    %893 = vmatpush1.msra.mxu0 0.0
    %894 = vmatprep.subr.mxu0 0.0
    %895 = vmatpush1.msra.mxu0 0.0
    %896 = vmatprep.subr.mxu0 0.0
    %897 = vmatpush1.msra.mxu0 0.0
    %898 = vmatprep.subr.mxu0 0.0
    %899 = vmatpush1.msra.mxu0 0.0
    %900 = vmatprep.subr.mxu0 0.0
    %901 = vmatpush1.msra.mxu0 0.0
    %902 = vmatprep.subr.mxu0 0.0
    %903 = vmatpush1.msra.mxu0 0.0
    %904 = vmatprep.subr.mxu0 0.0
    %905 = vmatpush1.msra.mxu0 0.0
    %906 = vmatprep.subr.mxu0 0.0
    %907 = vmatpush1.msra.mxu0 0.0
    %908 = vmatprep.subr.mxu0 0.0
    %909 = vmatpush1.msra.mxu0 0.0
    %910 = vmatprep.subr.mxu0 0.0
    %911 = vmatpush1.msra.mxu0 0.0
    %912 = vmatprep.subr.mxu0 0.0
    %913 = vmatpush1.msra.mxu0 0.0
    %914 = vmatprep.subr.mxu0 0.0
    %915 = vmatpush1.msra.mxu0 0.0
    %916 = vmatprep.subr.mxu0 0.0
    %917 = vmatpush1.msra.mxu0 0.0
    %918 = vmatprep.mubr.f32.mxu0 0.0
    %919 = vmatmul.mubr.f32.gmra.mrb[0].mxu0 %v712
    %v920 = vpop.f32.mrb[0].mxu0
    %v921 = vadd.f32 0.0, %v920
    %v922 = vpop.f32.mrb[0].mxu0
    %923 = vmatprep.mubr.f32.mxu0 0.0
    %924 = vmatmul.mubr.f32.gmra.mrb[0].mxu0 %v715
    %v925 = vpop.f32.mrb[0].mxu0
    %v926 = vadd.f32 0.0, %v925
    %v927 = vpop.f32.mrb[0].mxu0
    %928 = vmatprep.mubr.f32.mxu0 0.0
    %929 = vmatmul.mubr.f32.gmra.mrb[0].mxu0 %v718
    %v930 = vpop.f32.mrb[0].mxu0
    %v931 = vadd.f32 0.0, %v930
    %v932 = vpop.f32.mrb[0].mxu0
    %933 = vmatprep.mubr.f32.mxu0 0.0
    %934 = vmatmul.mubr.f32.gmra.mrb[0].mxu0 %v721
    %v935 = vpop.f32.mrb[0].mxu0
    %v936 = vadd.f32 0.0, %v935
    %v937 = vpop.f32.mrb[0].mxu0
    %938 = vmatprep.mubr.f32.mxu0 0.0
    %939 = vmatmul.mubr.f32.gmra.mrb[0].mxu0 %v724
    %v940 = vpop.f32.mrb[0].mxu0
    %v941 = vadd.f32 0.0, %v940
    %v942 = vpop.f32.mrb[0].mxu0
    %943 = vmatprep.mubr.f32.mxu0 0.0
    %944 = vmatmul.mubr.f32.gmra.mrb[0].mxu0 %v727
    %v945 = vpop.f32.mrb[0].mxu0
    %v946 = vadd.f32 0.0, %v945
    %v947 = vpop.f32.mrb[0].mxu0
    %948 = vmatprep.mubr.f32.mxu0 0.0
    %949 = vmatmul.mubr.f32.gmra.mrb[0].mxu0 %v730
    %v950 = vpop.f32.mrb[0].mxu0
    %v951 = vadd.f32 0.0, %v950
    %v952 = vpop.f32.mrb[0].mxu0
    %953 = vmatprep.mubr.f32.mxu0 0.0
    %954 = vmatmul.mubr.f32.gmra.mrb[0].mxu0 %v733
    %v955 = vpop.f32.mrb[0].mxu0
    %v956 = vadd.f32 0.0, %v955
    %v957 = vpop.f32.mrb[0].mxu0
    %958 = vdwg.mxu0
    %v959 = vmax.f32 %v802, %v921
    %v960 = vmax.f32 %v807, %v926
    %v961 = vmax.f32 %v812, %v931
    %v962 = vmax.f32 %v817, %v936
    %v963 = vmax.f32 %v822, %v941
    %v964 = vmax.f32 %v827, %v946
    %v965 = vmax.f32 %v832, %v951
    %v966 = vmax.f32 %v837, %v956
    %v967 = vld [vmem:[#allocation6] sm:$0xff]
    %v968 = vld [vmem:[#allocation6 + $0x8] sm:$0xff]
    %v969 = vld [vmem:[#allocation6 + $0x10] sm:$0xff]
    %v970 = vld [vmem:[#allocation6 + $0x18] sm:$0xff]
    %v971 = vld [vmem:[#allocation6 + $0x20] sm:$0xf]
    %vm972 = vcmask 482304
    %v974 = vsel %vm972, %v967, 0
    %v977 = vsel %vm972, %v968, 0
    %v980 = vsel %vm972, %v969, 0
    %v983 = vsel %vm972, %v970, 0
    %v986 = vsel %vm972, %v971, 0
    %vm988 = vcmask 1042432
    %v990 = vsel %vm988, %v966, 0
    %992 = vmatprep.subr.mxu0 0.0
    %993 = vmatpush1.msra.mxu0 %v959
    %994 = vmatprep.subr.mxu0 0.0
    %995 = vmatpush1.msra.mxu0 %v960
    %996 = vmatprep.subr.mxu0 0.0
    %997 = vmatpush1.msra.mxu0 %v961
    %998 = vmatprep.subr.mxu0 0.0
    %999 = vmatpush1.msra.mxu0 %v962
    %1000 = vmatprep.subr.mxu0 0.0
    %1001 = vmatpush1.msra.mxu0 %v963
    %1002 = vmatprep.subr.mxu0 0.0
    %1003 = vmatpush1.msra.mxu0 %v964
    %1004 = vmatprep.subr.mxu0 0.0
    %1005 = vmatpush1.msra.mxu0 %v965
    %1006 = vmatprep.subr.mxu0 0.0
    %1007 = vmatpush1.msra.mxu0 %v990
    %1008 = vmatprep.subr.mxu0 0.0
    %1009 = vmatpush1.msra.mxu0 0.0
    %1010 = vmatprep.subr.mxu0 0.0
    %1011 = vmatpush1.msra.mxu0 0.0
    %1012 = vmatprep.subr.mxu0 0.0
    %1013 = vmatpush1.msra.mxu0 0.0
    %1014 = vmatprep.subr.mxu0 0.0
    %1015 = vmatpush1.msra.mxu0 0.0
    %1016 = vmatprep.subr.mxu0 0.0
    %1017 = vmatpush1.msra.mxu0 0.0
    %1018 = vmatprep.subr.mxu0 0.0
    %1019 = vmatpush1.msra.mxu0 0.0
    %1020 = vmatprep.subr.mxu0 0.0
    %1021 = vmatpush1.msra.mxu0 0.0
    %1022 = vmatprep.subr.mxu0 0.0
    %1023 = vmatpush1.msra.mxu0 0.0
    %1024 = vmatprep.subr.mxu0 0.0
    %1025 = vmatpush1.msra.mxu0 0.0
    %1026 = vmatprep.subr.mxu0 0.0
    %1027 = vmatpush1.msra.mxu0 0.0
    %1028 = vmatprep.subr.mxu0 0.0
    %1029 = vmatpush1.msra.mxu0 0.0
    %1030 = vmatprep.subr.mxu0 0.0
    %1031 = vmatpush1.msra.mxu0 0.0
    %1032 = vmatprep.subr.mxu0 0.0
    %1033 = vmatpush1.msra.mxu0 0.0
    %1034 = vmatprep.subr.mxu0 0.0
    %1035 = vmatpush1.msra.mxu0 0.0
    %1036 = vmatprep.subr.mxu0 0.0
    %1037 = vmatpush1.msra.mxu0 0.0
    %1038 = vmatprep.subr.mxu0 0.0
    %1039 = vmatpush1.msra.mxu0 0.0
    %1040 = vmatprep.subr.mxu0 0.0
    %1041 = vmatpush1.msra.mxu0 0.0
    %1042 = vmatprep.subr.mxu0 0.0
    %1043 = vmatpush1.msra.mxu0 0.0
    %1044 = vmatprep.subr.mxu0 0.0
    %1045 = vmatpush1.msra.mxu0 0.0
    %1046 = vmatprep.subr.mxu0 0.0
    %1047 = vmatpush1.msra.mxu0 0.0
    %1048 = vmatprep.subr.mxu0 0.0
    %1049 = vmatpush1.msra.mxu0 0.0
    %1050 = vmatprep.subr.mxu0 0.0
    %1051 = vmatpush1.msra.mxu0 0.0
    %1052 = vmatprep.subr.mxu0 0.0
    %1053 = vmatpush1.msra.mxu0 0.0
    %1054 = vmatprep.subr.mxu0 0.0
    %1055 = vmatpush1.msra.mxu0 0.0
    %1056 = vmatprep.mubr.f32.mxu0 0.0
    %1057 = vmatmul.mubr.f32.gmra.mrb[0].mxu0 %v974
    %v1058 = vpop.f32.mrb[0].mxu0
    %v1059 = vadd.f32 0.0, %v1058
    %v1060 = vpop.f32.mrb[0].mxu0
    %1061 = vmatprep.mubr.f32.mxu0 0.0
    %1062 = vmatmul.mubr.f32.gmra.mrb[0].mxu0 %v977
    %v1063 = vpop.f32.mrb[0].mxu0
    %v1064 = vadd.f32 0.0, %v1063
    %v1065 = vpop.f32.mrb[0].mxu0
    %1066 = vmatprep.mubr.f32.mxu0 0.0
    %1067 = vmatmul.mubr.f32.gmra.mrb[0].mxu0 %v980
    %v1068 = vpop.f32.mrb[0].mxu0
    %v1069 = vadd.f32 0.0, %v1068
    %v1070 = vpop.f32.mrb[0].mxu0
    %1071 = vmatprep.mubr.f32.mxu0 0.0
    %1072 = vmatmul.mubr.f32.gmra.mrb[0].mxu0 %v983
    %v1073 = vpop.f32.mrb[0].mxu0
    %v1074 = vadd.f32 0.0, %v1073
    %v1075 = vpop.f32.mrb[0].mxu0
    %1076 = vmatprep.mubr.f32.mxu0 0.0
    %1077 = vmatmul.mubr.f32.gmra.mrb[0].mxu0 %v986
    %v1078 = vpop.f32.mrb[0].mxu0
    %v1079 = vadd.f32 0.0, %v1078
    %v1080 = vpop.f32.mrb[0].mxu0
    %1081 = vdwg.mxu0
    %vm1082 = vcmask 588800
    %1083 = vst.msk [vmem:[%s6] sm:$0xff] %vm1082, %v1059
    %1084 = vst.msk [vmem:[%s6 + $0x8] sm:$0xff] %vm1082, %v1064
    %1085 = vst.msk [vmem:[%s6 + $0x10] sm:$0xff] %vm1082, %v1069
    %1086 = vst.msk [vmem:[%s6 + $0x18] sm:$0xff] %vm1082, %v1074
    %vm1087 = vcmask 584704
    %1088 = vst.msk [vmem:[%s6 + $0x20] sm:$0xf] %vm1087, %v1079
    // Predicated region
    $region38: #{convnet_forward.3} parent=1 // pred_check
      _
    $region39: #{convnet_forward.3} parent=1 // pred_check_branch
      %1090 = sbr.rel (0) target = $region41
    $region40: #{convnet_forward.3} parent=1 // pred_region
      _
    $region41: #{convnet_forward.3} parent=1 // pred_fallthru
      _
    // Predicated region
    $region42: #{convnet_forward.3} parent=1 // pred_check
      _
    $region43: #{convnet_forward.3} parent=1 // pred_check_branch
      %1092 = sbr.rel (0) target = $region45
    $region44: #{convnet_forward.3} parent=1 // pred_region
      _
    $region45: #{convnet_forward.3} parent=1 // pred_fallthru
      _
    %1093 = vsyncpa [#allocation3], 1
    %1094 = vsyncpa [#allocation5], 1

// kernel: convnet_forward.5
$region0: #{convnet_forward.5}
  #allocation0 [shape = 'u32[]', space=smem, size = 0x4, offset = 0x4, fixed_abs, tag = 'smem constant byte address 0x4 - core index']
  #allocation1 [shape = 'u32[144,128]{1,0:T(1,128)}', space=vmem, size = 0x12000, scoped, tag = 'internal scratch']
  %s0 = inlined_call_operand.vmem [shape: f32[14,56], index: 0, kind: input, shape index: {}]
  %s1 = inlined_call_operand.vmem [shape: bf16[7,56,1000], index: 1, kind: input, shape index: {}]
  %s2 = inlined_call_operand.vmem [shape: f32[1,1000], index: 2, kind: input, shape index: {}]
  %s3 = inlined_call_operand.vmem [shape: bf16[1000,10], index: 3, kind: input, shape index: {}]
  %s4 = inlined_call_operand.vmem [shape: f32[1,10], index: 4, kind: input, shape index: {}]
  %s5 = inlined_call_operand.hbm [shape: f32[2,10], index: 5, kind: output, shape index: {}]
  %s6 = sld [smem:[#allocation0]]
  $region30: #{convnet_forward.5} parent=0
    _
  %s8 = ssub.s32 1, %s6
  %s9 = scalar_select 0, %s8, %s6
  $region1: #{convnet_forward.5} parent=0
    #allocation2 [shape = 'u8[1024]{0}', space=vmem, size = 0x400, scoped, tag = 'output window, operand 0, single buffered']
    #allocation3 [shape = 's32[1]{0}', space=sflag, size = 0x4, scoped, tag = 'scoped memory for convnet_forward.5']
    %10 = vsyncpa [#allocation3], 0
    // Predicated region
    $region2: #{convnet_forward.5} parent=1 // pred_check
      _
    $region3: #{convnet_forward.5} parent=1 // pred_check_branch
      %12 = sbr.rel (0) target = $region5
    $region4: #{convnet_forward.5} parent=1 // pred_region
      _
    $region5: #{convnet_forward.5} parent=1 // pred_fallthru
      _
    // Predicated region
    $region6: #{convnet_forward.5} parent=1 // pred_check
      _
    $region7: #{convnet_forward.5} parent=1 // pred_check_branch
      %14 = sbr.rel (0) target = $region9
    $region8: #{convnet_forward.5} parent=1 // pred_region
      _
    $region9: #{convnet_forward.5} parent=1 // pred_fallthru
      _
    // Predicated region
    $region10: #{convnet_forward.5} parent=1 // pred_check
      _
    $region11: #{convnet_forward.5} parent=1 // pred_check_branch
      %16 = sbr.rel (0) target = $region13
    $region12: #{convnet_forward.5} parent=1 // pred_region
      _
    $region13: #{convnet_forward.5} parent=1 // pred_fallthru
      _
    // Predicated region
    $region14: #{convnet_forward.5} parent=1 // pred_check
      _
    $region15: #{convnet_forward.5} parent=1 // pred_check_branch
      %18 = sbr.rel (0) target = $region17
    $region16: #{convnet_forward.5} parent=1 // pred_region
      _
    $region17: #{convnet_forward.5} parent=1 // pred_fallthru
      _
    // Predicated region
    $region18: #{convnet_forward.5} parent=1 // pred_check
      _
    $region19: #{convnet_forward.5} parent=1 // pred_check_branch
      %20 = sbr.rel (0) target = $region21
    $region20: #{convnet_forward.5} parent=1 // pred_region
      _
    $region21: #{convnet_forward.5} parent=1 // pred_fallthru
      _
    %v22 = vld [vmem:[%s0] sm:$0xff]
    %v23 = vld [vmem:[%s0 + $0x8] sm:$0x3f]
    %v24 = vpack.c.bf16 %v22, %v22
    %v25 = vld [vmem:[%s1] sm:$0xff]
    %v26 = vld [vmem:[%s1 + $0x8] sm:$0xff]
    %v27 = vld [vmem:[%s1 + $0x10] sm:$0xff]
    %v28 = vld [vmem:[%s1 + $0x18] sm:$0xff]
    %v29 = vld [vmem:[%s1 + $0x20] sm:$0xff]
    %v30 = vld [vmem:[%s1 + $0x28] sm:$0xff]
    %v31 = vld [vmem:[%s1 + $0x30] sm:$0xff]
    %v32 = vld [vmem:[%s1 + $0x38] sm:$0xff]
    %v33 = vld [vmem:[%s1 + $0x40] sm:$0xff]
    %v34 = vld [vmem:[%s1 + $0x48] sm:$0xff]
    %v35 = vld [vmem:[%s1 + $0x50] sm:$0xff]
    %v36 = vld [vmem:[%s1 + $0x58] sm:$0xff]
    %v37 = vld [vmem:[%s1 + $0x60] sm:$0xff]
    %v38 = vld [vmem:[%s1 + $0x68] sm:$0xff]
    %v39 = vld [vmem:[%s1 + $0x70] sm:$0xff]
    %v40 = vld [vmem:[%s1 + $0x78] sm:$0xff]
    %v41 = vld [vmem:[%s1 + $0x80] sm:$0xff]
    %v42 = vld [vmem:[%s1 + $0x88] sm:$0xff]
    %v43 = vld [vmem:[%s1 + $0x90] sm:$0xff]
    %v44 = vld [vmem:[%s1 + $0x98] sm:$0xff]
    %v45 = vld [vmem:[%s1 + $0xa0] sm:$0xff]
    %v46 = vld [vmem:[%s1 + $0xa8] sm:$0xff]
    %v47 = vld [vmem:[%s1 + $0xb0] sm:$0xff]
    %v48 = vld [vmem:[%s1 + $0xb8] sm:$0xff]
    %v49 = vld [vmem:[%s1 + $0xc0] sm:$0xff]
    %v50 = vld [vmem:[%s1 + $0xc8] sm:$0xff]
    %v51 = vld [vmem:[%s1 + $0xd0] sm:$0xff]
    %v52 = vld [vmem:[%s1 + $0xd8] sm:$0xff]
    %s53 = scalar_lea.vmem %s1, 224
    %v54 = vld [vmem:[%s53] sm:$0xff]
    %v55 = vld [vmem:[%s53 + $0x8] sm:$0xff]
    %v56 = vld [vmem:[%s53 + $0x10] sm:$0xff]
    %v57 = vld [vmem:[%s53 + $0x18] sm:$0xff]
    %v58 = vld [vmem:[%s53 + $0x20] sm:$0xff]
    %v59 = vld [vmem:[%s53 + $0x28] sm:$0xff]
    %v60 = vld [vmem:[%s53 + $0x30] sm:$0xff]
    %v61 = vld [vmem:[%s53 + $0x38] sm:$0xff]
    %v62 = vld [vmem:[%s53 + $0x40] sm:$0xff]
    %v63 = vld [vmem:[%s53 + $0x48] sm:$0xff]
    %v64 = vld [vmem:[%s53 + $0x50] sm:$0xff]
    %v65 = vld [vmem:[%s53 + $0x58] sm:$0xff]
    %v66 = vld [vmem:[%s53 + $0x60] sm:$0xff]
    %v67 = vld [vmem:[%s53 + $0x68] sm:$0xff]
    %v68 = vld [vmem:[%s53 + $0x70] sm:$0xff]
    %v69 = vld [vmem:[%s53 + $0x78] sm:$0xff]
    %v70 = vld [vmem:[%s53 + $0x80] sm:$0xff]
    %v71 = vld [vmem:[%s53 + $0x88] sm:$0xff]
    %v72 = vld [vmem:[%s53 + $0x90] sm:$0xff]
    %v73 = vld [vmem:[%s53 + $0x98] sm:$0xff]
    %v74 = vld [vmem:[%s53 + $0xa0] sm:$0xff]
    %v75 = vld [vmem:[%s53 + $0xa8] sm:$0xff]
    %v76 = vld [vmem:[%s53 + $0xb0] sm:$0xff]
    %v77 = vld [vmem:[%s53 + $0xb8] sm:$0xff]
    %v78 = vld [vmem:[%s53 + $0xc0] sm:$0xff]
    %v79 = vld [vmem:[%s53 + $0xc8] sm:$0xff]
    %v80 = vld [vmem:[%s53 + $0xd0] sm:$0xff]
    %v81 = vld [vmem:[%s53 + $0xd8] sm:$0xff]
    %v83 = vrot.slane %v24, 1
    %v112 = vunpack.c.l.b16 %v54
    %v113 = vunpack.c.h.b16 %v54
    %v114 = vunpack.c.l.b16 %v55
    %v115 = vunpack.c.h.b16 %v55
    %v116 = vunpack.c.l.b16 %v56
    %v117 = vunpack.c.h.b16 %v56
    %v118 = vunpack.c.l.b16 %v57
    %v119 = vunpack.c.h.b16 %v57
    %v120 = vunpack.c.l.b16 %v58
    %v121 = vunpack.c.h.b16 %v58
    %v122 = vunpack.c.l.b16 %v59
    %v123 = vunpack.c.h.b16 %v59
    %v124 = vunpack.c.l.b16 %v60
    %v125 = vunpack.c.h.b16 %v60
    %v126 = vunpack.c.l.b16 %v61
    %v127 = vunpack.c.h.b16 %v61
    %v128 = vunpack.c.l.b16 %v62
    %v129 = vunpack.c.h.b16 %v62
    %v130 = vunpack.c.l.b16 %v63
    %v131 = vunpack.c.h.b16 %v63
    %v132 = vunpack.c.l.b16 %v64
    %v133 = vunpack.c.h.b16 %v64
    %v134 = vunpack.c.l.b16 %v65
    %v135 = vunpack.c.h.b16 %v65
    %v136 = vunpack.c.l.b16 %v66
    %v137 = vunpack.c.h.b16 %v66
    %v138 = vunpack.c.l.b16 %v67
    %v139 = vunpack.c.h.b16 %v67
    %v140 = vunpack.c.l.b16 %v68
    %v141 = vunpack.c.h.b16 %v68
    %v142 = vunpack.c.l.b16 %v69
    %v143 = vunpack.c.h.b16 %v69
    %v144 = vunpack.c.l.b16 %v70
    %v145 = vunpack.c.h.b16 %v70
    %v146 = vunpack.c.l.b16 %v71
    %v147 = vunpack.c.h.b16 %v71
    %v148 = vunpack.c.l.b16 %v72
    %v149 = vunpack.c.h.b16 %v72
    %v150 = vunpack.c.l.b16 %v73
    %v151 = vunpack.c.h.b16 %v73
    %v152 = vunpack.c.l.b16 %v74
    %v153 = vunpack.c.h.b16 %v74
    %v154 = vunpack.c.l.b16 %v75
    %v155 = vunpack.c.h.b16 %v75
    %v156 = vunpack.c.l.b16 %v76
    %v157 = vunpack.c.h.b16 %v76
    %v158 = vunpack.c.l.b16 %v77
    %v159 = vunpack.c.h.b16 %v77
    %v160 = vunpack.c.l.b16 %v78
    %v161 = vunpack.c.h.b16 %v78
    %v162 = vunpack.c.l.b16 %v79
    %v163 = vunpack.c.h.b16 %v79
    %v164 = vunpack.c.l.b16 %v80
    %v165 = vunpack.c.h.b16 %v80
    %v166 = vunpack.c.l.b16 %v81
    %v167 = vunpack.c.h.b16 %v81
    %v168 = vpack.c.b16 %v120, %v112
    %v169 = vpack.c.b16 %v121, %v113
    %v170 = vpack.c.b16 %v122, %v114
    %v171 = vpack.c.b16 %v123, %v115
    %v172 = vpack.c.b16 %v124, %v116
    %v173 = vpack.c.b16 %v125, %v117
    %v174 = vpack.c.b16 %v126, %v118
    %v175 = vpack.c.b16 %v127, %v119
    %v176 = vpack.c.b16 %v136, %v128
    %v177 = vpack.c.b16 %v137, %v129
    %v178 = vpack.c.b16 %v138, %v130
    %v179 = vpack.c.b16 %v139, %v131
    %v180 = vpack.c.b16 %v140, %v132
    %v181 = vpack.c.b16 %v141, %v133
    %v182 = vpack.c.b16 %v142, %v134
    %v183 = vpack.c.b16 %v143, %v135
    %v184 = vpack.c.b16 %v152, %v144
    %v185 = vpack.c.b16 %v153, %v145
    %v186 = vpack.c.b16 %v154, %v146
    %v187 = vpack.c.b16 %v155, %v147
    %v188 = vpack.c.b16 %v156, %v148
    %v189 = vpack.c.b16 %v157, %v149
    %v190 = vpack.c.b16 %v158, %v150
    %v191 = vpack.c.b16 %v159, %v151
    %v192 = vpack.c.b16 %v160, %v160
    %v193 = vpack.c.b16 %v161, %v161
    %v194 = vpack.c.b16 %v162, %v162
    %v195 = vpack.c.b16 %v163, %v163
    %v196 = vpack.c.b16 %v164, %v164
    %v197 = vpack.c.b16 %v165, %v165
    %v198 = vpack.c.b16 %v166, %v166
    %v199 = vpack.c.b16 %v167, %v167
    %vm224 = vcmask 457728
    %v226 = vsel %vm224, %v83, 0
    %vm228 = vcmask 1043456
    %v230 = vsel %vm228, %v192, 0
    %v233 = vsel %vm228, %v193, 0
    %v236 = vsel %vm228, %v194, 0
    %v239 = vsel %vm228, %v195, 0
    %v242 = vsel %vm228, %v196, 0
    %v245 = vsel %vm228, %v197, 0
    %v248 = vsel %vm228, %v198, 0
    %v251 = vsel %vm228, %v199, 0
    %253 = vmatprep.subr.bf16.mxu0 %v169
    %254 = vmatpush1.bf16.msra.mxu0 %v168
    %255 = vmatprep.subr.bf16.mxu0 %v177
    %256 = vmatpush1.bf16.msra.mxu0 %v176
    %257 = vmatprep.subr.bf16.mxu0 %v185
    %258 = vmatpush1.bf16.msra.mxu0 %v184
    %259 = vmatprep.subr.bf16.mxu0 %v233
    %260 = vmatpush1.bf16.msra.mxu0 %v230
    %261 = vmatprep.subr.bf16.mxu0 0
    %262 = vmatpush1.bf16.msra.mxu0 0
    %263 = vmatprep.subr.bf16.mxu0 0
    %264 = vmatpush1.bf16.msra.mxu0 0
    %265 = vmatprep.subr.bf16.mxu0 0
    %266 = vmatpush1.bf16.msra.mxu0 0
    %267 = vmatprep.subr.bf16.mxu0 0
    %268 = vmatpush1.bf16.msra.mxu0 0
    %269 = vmatprep.subr.bf16.mxu0 0
    %270 = vmatpush1.bf16.msra.mxu0 0
    %271 = vmatprep.subr.bf16.mxu0 0
    %272 = vmatpush1.bf16.msra.mxu0 0
    %273 = vmatprep.subr.bf16.mxu0 0
    %274 = vmatpush1.bf16.msra.mxu0 0
    %275 = vmatprep.subr.bf16.mxu0 0
    %276 = vmatpush1.bf16.msra.mxu0 0
    %277 = vmatprep.subr.bf16.mxu0 0
    %278 = vmatpush1.bf16.msra.mxu0 0
    %279 = vmatprep.subr.bf16.mxu0 0
    %280 = vmatpush1.bf16.msra.mxu0 0
    %281 = vmatprep.subr.bf16.mxu0 0
    %282 = vmatpush1.bf16.msra.mxu0 0
    %283 = vmatprep.subr.bf16.mxu0 0
    %284 = vmatpush1.bf16.msra.mxu0 0
    %285 = vmatprep.mubr.bf16.mxu0 0
    %286 = vmatmul.mubr.bf16.gmra.mrb[0].mxu0 %v226
    %v287 = vpop.f32.mrb[0].mxu0
    %v288 = vadd.f32 0.0, %v287
    %v289 = vpop.f32.mrb[0].mxu0
    %v290 = vadd.f32 0.0, %v289
    %v291 = vpop.f32.mrb[0].mxu0
    %v292 = vpop.f32.mrb[0].mxu0
    %293 = vdwg.mxu0
    %294 = vmatprep.subr.bf16.mxu0 %v171
    %295 = vmatpush1.bf16.msra.mxu0 %v170
    %296 = vmatprep.subr.bf16.mxu0 %v179
    %297 = vmatpush1.bf16.msra.mxu0 %v178
    %298 = vmatprep.subr.bf16.mxu0 %v187
    %299 = vmatpush1.bf16.msra.mxu0 %v186
    %300 = vmatprep.subr.bf16.mxu0 %v239
    %301 = vmatpush1.bf16.msra.mxu0 %v236
    %302 = vmatprep.subr.bf16.mxu0 0
    %303 = vmatpush1.bf16.msra.mxu0 0
    %304 = vmatprep.subr.bf16.mxu0 0
    %305 = vmatpush1.bf16.msra.mxu0 0
    %306 = vmatprep.subr.bf16.mxu0 0
    %307 = vmatpush1.bf16.msra.mxu0 0
    %308 = vmatprep.subr.bf16.mxu0 0
    %309 = vmatpush1.bf16.msra.mxu0 0
    %310 = vmatprep.subr.bf16.mxu0 0
    %311 = vmatpush1.bf16.msra.mxu0 0
    %312 = vmatprep.subr.bf16.mxu0 0
    %313 = vmatpush1.bf16.msra.mxu0 0
    %314 = vmatprep.subr.bf16.mxu0 0
    %315 = vmatpush1.bf16.msra.mxu0 0
    %316 = vmatprep.subr.bf16.mxu0 0
    %317 = vmatpush1.bf16.msra.mxu0 0
    %318 = vmatprep.subr.bf16.mxu0 0
    %319 = vmatpush1.bf16.msra.mxu0 0
    %320 = vmatprep.subr.bf16.mxu0 0
    %321 = vmatpush1.bf16.msra.mxu0 0
    %322 = vmatprep.subr.bf16.mxu0 0
    %323 = vmatpush1.bf16.msra.mxu0 0
    %324 = vmatprep.subr.bf16.mxu0 0
    %325 = vmatpush1.bf16.msra.mxu0 0
    %326 = vmatprep.mubr.bf16.mxu0 0
    %327 = vmatmul.mubr.bf16.gmra.mrb[0].mxu0 %v226
    %v328 = vpop.f32.mrb[0].mxu0
    %v329 = vadd.f32 0.0, %v328
    %v330 = vpop.f32.mrb[0].mxu0
    %v331 = vadd.f32 0.0, %v330
    %v332 = vpop.f32.mrb[0].mxu0
    %v333 = vpop.f32.mrb[0].mxu0
    %334 = vdwg.mxu0
    %335 = vmatprep.subr.bf16.mxu0 %v173
    %336 = vmatpush1.bf16.msra.mxu0 %v172
    %337 = vmatprep.subr.bf16.mxu0 %v181
    %338 = vmatpush1.bf16.msra.mxu0 %v180
    %339 = vmatprep.subr.bf16.mxu0 %v189
    %340 = vmatpush1.bf16.msra.mxu0 %v188
    %341 = vmatprep.subr.bf16.mxu0 %v245
    %342 = vmatpush1.bf16.msra.mxu0 %v242
    %343 = vmatprep.subr.bf16.mxu0 0
    %344 = vmatpush1.bf16.msra.mxu0 0
    %345 = vmatprep.subr.bf16.mxu0 0
    %346 = vmatpush1.bf16.msra.mxu0 0
    %347 = vmatprep.subr.bf16.mxu0 0
    %348 = vmatpush1.bf16.msra.mxu0 0
    %349 = vmatprep.subr.bf16.mxu0 0
    %350 = vmatpush1.bf16.msra.mxu0 0
    %351 = vmatprep.subr.bf16.mxu0 0
    %352 = vmatpush1.bf16.msra.mxu0 0
    %353 = vmatprep.subr.bf16.mxu0 0
    %354 = vmatpush1.bf16.msra.mxu0 0
    %355 = vmatprep.subr.bf16.mxu0 0
    %356 = vmatpush1.bf16.msra.mxu0 0
    %357 = vmatprep.subr.bf16.mxu0 0
    %358 = vmatpush1.bf16.msra.mxu0 0
    %359 = vmatprep.subr.bf16.mxu0 0
    %360 = vmatpush1.bf16.msra.mxu0 0
    %361 = vmatprep.subr.bf16.mxu0 0
    %362 = vmatpush1.bf16.msra.mxu0 0
    %363 = vmatprep.subr.bf16.mxu0 0
    %364 = vmatpush1.bf16.msra.mxu0 0
    %365 = vmatprep.subr.bf16.mxu0 0
    %366 = vmatpush1.bf16.msra.mxu0 0
    %367 = vmatprep.mubr.bf16.mxu0 0
    %368 = vmatmul.mubr.bf16.gmra.mrb[0].mxu0 %v226
    %v369 = vpop.f32.mrb[0].mxu0
    %v370 = vadd.f32 0.0, %v369
    %v371 = vpop.f32.mrb[0].mxu0
    %v372 = vadd.f32 0.0, %v371
    %v373 = vpop.f32.mrb[0].mxu0
    %v374 = vpop.f32.mrb[0].mxu0
    %375 = vdwg.mxu0
    %376 = vmatprep.subr.bf16.mxu0 %v175
    %377 = vmatpush1.bf16.msra.mxu0 %v174
    %378 = vmatprep.subr.bf16.mxu0 %v183
    %379 = vmatpush1.bf16.msra.mxu0 %v182
    %380 = vmatprep.subr.bf16.mxu0 %v191
    %381 = vmatpush1.bf16.msra.mxu0 %v190
    %382 = vmatprep.subr.bf16.mxu0 %v251
    %383 = vmatpush1.bf16.msra.mxu0 %v248
    %384 = vmatprep.subr.bf16.mxu0 0
    %385 = vmatpush1.bf16.msra.mxu0 0
    %386 = vmatprep.subr.bf16.mxu0 0
    %387 = vmatpush1.bf16.msra.mxu0 0
    %388 = vmatprep.subr.bf16.mxu0 0
    %389 = vmatpush1.bf16.msra.mxu0 0
    %390 = vmatprep.subr.bf16.mxu0 0
    %391 = vmatpush1.bf16.msra.mxu0 0
    %392 = vmatprep.subr.bf16.mxu0 0
    %393 = vmatpush1.bf16.msra.mxu0 0
    %394 = vmatprep.subr.bf16.mxu0 0
    %395 = vmatpush1.bf16.msra.mxu0 0
    %396 = vmatprep.subr.bf16.mxu0 0
    %397 = vmatpush1.bf16.msra.mxu0 0
    %398 = vmatprep.subr.bf16.mxu0 0
    %399 = vmatpush1.bf16.msra.mxu0 0
    %400 = vmatprep.subr.bf16.mxu0 0
    %401 = vmatpush1.bf16.msra.mxu0 0
    %402 = vmatprep.subr.bf16.mxu0 0
    %403 = vmatpush1.bf16.msra.mxu0 0
    %404 = vmatprep.subr.bf16.mxu0 0
    %405 = vmatpush1.bf16.msra.mxu0 0
    %406 = vmatprep.subr.bf16.mxu0 0
    %407 = vmatpush1.bf16.msra.mxu0 0
    %408 = vmatprep.mubr.bf16.mxu0 0
    %409 = vmatmul.mubr.bf16.gmra.mrb[0].mxu0 %v226
    %v410 = vpop.f32.mrb[0].mxu0
    %v411 = vadd.f32 0.0, %v410
    %v412 = vpop.f32.mrb[0].mxu0
    %v413 = vadd.f32 0.0, %v412
    %v414 = vpop.f32.mrb[0].mxu0
    %v415 = vpop.f32.mrb[0].mxu0
    %416 = vdwg.mxu0
    %v445 = vunpack.c.l.b16 %v25
    %v446 = vunpack.c.h.b16 %v25
    %v447 = vunpack.c.l.b16 %v26
    %v448 = vunpack.c.h.b16 %v26
    %v449 = vunpack.c.l.b16 %v27
    %v450 = vunpack.c.h.b16 %v27
    %v451 = vunpack.c.l.b16 %v28
    %v452 = vunpack.c.h.b16 %v28
    %v453 = vunpack.c.l.b16 %v29
    %v454 = vunpack.c.h.b16 %v29
    %v455 = vunpack.c.l.b16 %v30
    %v456 = vunpack.c.h.b16 %v30
    %v457 = vunpack.c.l.b16 %v31
    %v458 = vunpack.c.h.b16 %v31
    %v459 = vunpack.c.l.b16 %v32
    %v460 = vunpack.c.h.b16 %v32
    %v461 = vunpack.c.l.b16 %v33
    %v462 = vunpack.c.h.b16 %v33
    %v463 = vunpack.c.l.b16 %v34
    %v464 = vunpack.c.h.b16 %v34
    %v465 = vunpack.c.l.b16 %v35
    %v466 = vunpack.c.h.b16 %v35
    %v467 = vunpack.c.l.b16 %v36
    %v468 = vunpack.c.h.b16 %v36
    %v469 = vunpack.c.l.b16 %v37
    %v470 = vunpack.c.h.b16 %v37
    %v471 = vunpack.c.l.b16 %v38
    %v472 = vunpack.c.h.b16 %v38
    %v473 = vunpack.c.l.b16 %v39
    %v474 = vunpack.c.h.b16 %v39
    %v475 = vunpack.c.l.b16 %v40
    %v476 = vunpack.c.h.b16 %v40
    %v477 = vunpack.c.l.b16 %v41
    %v478 = vunpack.c.h.b16 %v41
    %v479 = vunpack.c.l.b16 %v42
    %v480 = vunpack.c.h.b16 %v42
    %v481 = vunpack.c.l.b16 %v43
    %v482 = vunpack.c.h.b16 %v43
    %v483 = vunpack.c.l.b16 %v44
    %v484 = vunpack.c.h.b16 %v44
    %v485 = vunpack.c.l.b16 %v45
    %v486 = vunpack.c.h.b16 %v45
    %v487 = vunpack.c.l.b16 %v46
    %v488 = vunpack.c.h.b16 %v46
    %v489 = vunpack.c.l.b16 %v47
    %v490 = vunpack.c.h.b16 %v47
    %v491 = vunpack.c.l.b16 %v48
    %v492 = vunpack.c.h.b16 %v48
    %v493 = vunpack.c.l.b16 %v49
    %v494 = vunpack.c.h.b16 %v49
    %v495 = vunpack.c.l.b16 %v50
    %v496 = vunpack.c.h.b16 %v50
    %v497 = vunpack.c.l.b16 %v51
    %v498 = vunpack.c.h.b16 %v51
    %v499 = vunpack.c.l.b16 %v52
    %v500 = vunpack.c.h.b16 %v52
    %v501 = vpack.c.b16 %v453, %v445
    %v502 = vpack.c.b16 %v454, %v446
    %v503 = vpack.c.b16 %v455, %v447
    %v504 = vpack.c.b16 %v456, %v448
    %v505 = vpack.c.b16 %v457, %v449
    %v506 = vpack.c.b16 %v458, %v450
    %v507 = vpack.c.b16 %v459, %v451
    %v508 = vpack.c.b16 %v460, %v452
    %v509 = vpack.c.b16 %v469, %v461
    %v510 = vpack.c.b16 %v470, %v462
    %v511 = vpack.c.b16 %v471, %v463
    %v512 = vpack.c.b16 %v472, %v464
    %v513 = vpack.c.b16 %v473, %v465
    %v514 = vpack.c.b16 %v474, %v466
    %v515 = vpack.c.b16 %v475, %v467
    %v516 = vpack.c.b16 %v476, %v468
    %v517 = vpack.c.b16 %v485, %v477
    %v518 = vpack.c.b16 %v486, %v478
    %v519 = vpack.c.b16 %v487, %v479
    %v520 = vpack.c.b16 %v488, %v480
    %v521 = vpack.c.b16 %v489, %v481
    %v522 = vpack.c.b16 %v490, %v482
    %v523 = vpack.c.b16 %v491, %v483
    %v524 = vpack.c.b16 %v492, %v484
    %v525 = vpack.c.b16 %v493, %v493
    %v526 = vpack.c.b16 %v494, %v494
    %v527 = vpack.c.b16 %v495, %v495
    %v528 = vpack.c.b16 %v496, %v496
    %v529 = vpack.c.b16 %v497, %v497
    %v530 = vpack.c.b16 %v498, %v498
    %v531 = vpack.c.b16 %v499, %v499
    %v532 = vpack.c.b16 %v500, %v500
    %v558 = vsel %vm224, %v24, 0
    %v561 = vsel %vm228, %v525, 0
    %v564 = vsel %vm228, %v526, 0
    %v567 = vsel %vm228, %v527, 0
    %v570 = vsel %vm228, %v528, 0
    %v573 = vsel %vm228, %v529, 0
    %v576 = vsel %vm228, %v530, 0
    %v579 = vsel %vm228, %v531, 0
    %v582 = vsel %vm228, %v532, 0
    %584 = vmatprep.subr.bf16.mxu0 %v502
    %585 = vmatpush1.bf16.msra.mxu0 %v501
    %586 = vmatprep.subr.bf16.mxu0 %v510
    %587 = vmatpush1.bf16.msra.mxu0 %v509
    %588 = vmatprep.subr.bf16.mxu0 %v518
    %589 = vmatpush1.bf16.msra.mxu0 %v517
    %590 = vmatprep.subr.bf16.mxu0 %v564
    %591 = vmatpush1.bf16.msra.mxu0 %v561
    %592 = vmatprep.subr.bf16.mxu0 0
    %593 = vmatpush1.bf16.msra.mxu0 0
    %594 = vmatprep.subr.bf16.mxu0 0
    %595 = vmatpush1.bf16.msra.mxu0 0
    %596 = vmatprep.subr.bf16.mxu0 0
    %597 = vmatpush1.bf16.msra.mxu0 0
    %598 = vmatprep.subr.bf16.mxu0 0
    %599 = vmatpush1.bf16.msra.mxu0 0
    %600 = vmatprep.subr.bf16.mxu0 0
    %601 = vmatpush1.bf16.msra.mxu0 0
    %602 = vmatprep.subr.bf16.mxu0 0
    %603 = vmatpush1.bf16.msra.mxu0 0
    %604 = vmatprep.subr.bf16.mxu0 0
    %605 = vmatpush1.bf16.msra.mxu0 0
    %606 = vmatprep.subr.bf16.mxu0 0
    %607 = vmatpush1.bf16.msra.mxu0 0
    %608 = vmatprep.subr.bf16.mxu0 0
    %609 = vmatpush1.bf16.msra.mxu0 0
    %610 = vmatprep.subr.bf16.mxu0 0
    %611 = vmatpush1.bf16.msra.mxu0 0
    %612 = vmatprep.subr.bf16.mxu0 0
    %613 = vmatpush1.bf16.msra.mxu0 0
    %614 = vmatprep.subr.bf16.mxu0 0
    %615 = vmatpush1.bf16.msra.mxu0 0
    %616 = vmatprep.mubr.bf16.mxu0 0
    %617 = vmatmul.mubr.bf16.gmra.mrb[0].mxu0 %v558
    %v618 = vpop.f32.mrb[0].mxu0
    %v619 = vadd.f32 %v288, %v618
    %v620 = vpop.f32.mrb[0].mxu0
    %v621 = vadd.f32 %v290, %v620
    %v622 = vpop.f32.mrb[0].mxu0
    %v623 = vpop.f32.mrb[0].mxu0
    %624 = vdwg.mxu0
    %625 = vmatprep.subr.bf16.mxu0 %v504
    %626 = vmatpush1.bf16.msra.mxu0 %v503
    %627 = vmatprep.subr.bf16.mxu0 %v512
    %628 = vmatpush1.bf16.msra.mxu0 %v511
    %629 = vmatprep.subr.bf16.mxu0 %v520
    %630 = vmatpush1.bf16.msra.mxu0 %v519
    %631 = vmatprep.subr.bf16.mxu0 %v570
    %632 = vmatpush1.bf16.msra.mxu0 %v567
    %633 = vmatprep.subr.bf16.mxu0 0
    %634 = vmatpush1.bf16.msra.mxu0 0
    %635 = vmatprep.subr.bf16.mxu0 0
    %636 = vmatpush1.bf16.msra.mxu0 0
    %637 = vmatprep.subr.bf16.mxu0 0
    %638 = vmatpush1.bf16.msra.mxu0 0
    %639 = vmatprep.subr.bf16.mxu0 0
    %640 = vmatpush1.bf16.msra.mxu0 0
    %641 = vmatprep.subr.bf16.mxu0 0
    %642 = vmatpush1.bf16.msra.mxu0 0
    %643 = vmatprep.subr.bf16.mxu0 0
    %644 = vmatpush1.bf16.msra.mxu0 0
    %645 = vmatprep.subr.bf16.mxu0 0
    %646 = vmatpush1.bf16.msra.mxu0 0
    %647 = vmatprep.subr.bf16.mxu0 0
    %648 = vmatpush1.bf16.msra.mxu0 0
    %649 = vmatprep.subr.bf16.mxu0 0
    %650 = vmatpush1.bf16.msra.mxu0 0
    %651 = vmatprep.subr.bf16.mxu0 0
    %652 = vmatpush1.bf16.msra.mxu0 0
    %653 = vmatprep.subr.bf16.mxu0 0
    %654 = vmatpush1.bf16.msra.mxu0 0
    %655 = vmatprep.subr.bf16.mxu0 0
    %656 = vmatpush1.bf16.msra.mxu0 0
    %657 = vmatprep.mubr.bf16.mxu0 0
    %658 = vmatmul.mubr.bf16.gmra.mrb[0].mxu0 %v558
    %v659 = vpop.f32.mrb[0].mxu0
    %v660 = vadd.f32 %v329, %v659
    %v661 = vpop.f32.mrb[0].mxu0
    %v662 = vadd.f32 %v331, %v661
    %v663 = vpop.f32.mrb[0].mxu0
    %v664 = vpop.f32.mrb[0].mxu0
    %665 = vdwg.mxu0
    %666 = vmatprep.subr.bf16.mxu0 %v506
    %667 = vmatpush1.bf16.msra.mxu0 %v505
    %668 = vmatprep.subr.bf16.mxu0 %v514
    %669 = vmatpush1.bf16.msra.mxu0 %v513
    %670 = vmatprep.subr.bf16.mxu0 %v522
    %671 = vmatpush1.bf16.msra.mxu0 %v521
    %672 = vmatprep.subr.bf16.mxu0 %v576
    %673 = vmatpush1.bf16.msra.mxu0 %v573
    %674 = vmatprep.subr.bf16.mxu0 0
    %675 = vmatpush1.bf16.msra.mxu0 0
    %676 = vmatprep.subr.bf16.mxu0 0
    %677 = vmatpush1.bf16.msra.mxu0 0
    %678 = vmatprep.subr.bf16.mxu0 0
    %679 = vmatpush1.bf16.msra.mxu0 0
    %680 = vmatprep.subr.bf16.mxu0 0
    %681 = vmatpush1.bf16.msra.mxu0 0
    %682 = vmatprep.subr.bf16.mxu0 0
    %683 = vmatpush1.bf16.msra.mxu0 0
    %684 = vmatprep.subr.bf16.mxu0 0
    %685 = vmatpush1.bf16.msra.mxu0 0
    %686 = vmatprep.subr.bf16.mxu0 0
    %687 = vmatpush1.bf16.msra.mxu0 0
    %688 = vmatprep.subr.bf16.mxu0 0
    %689 = vmatpush1.bf16.msra.mxu0 0
    %690 = vmatprep.subr.bf16.mxu0 0
    %691 = vmatpush1.bf16.msra.mxu0 0
    %692 = vmatprep.subr.bf16.mxu0 0
    %693 = vmatpush1.bf16.msra.mxu0 0
    %694 = vmatprep.subr.bf16.mxu0 0
    %695 = vmatpush1.bf16.msra.mxu0 0
    %696 = vmatprep.subr.bf16.mxu0 0
    %697 = vmatpush1.bf16.msra.mxu0 0
    %698 = vmatprep.mubr.bf16.mxu0 0
    %699 = vmatmul.mubr.bf16.gmra.mrb[0].mxu0 %v558
    %v700 = vpop.f32.mrb[0].mxu0
    %v701 = vadd.f32 %v370, %v700
    %v702 = vpop.f32.mrb[0].mxu0
    %v703 = vadd.f32 %v372, %v702
    %v704 = vpop.f32.mrb[0].mxu0
    %v705 = vpop.f32.mrb[0].mxu0
    %706 = vdwg.mxu0
    %707 = vmatprep.subr.bf16.mxu0 %v508
    %708 = vmatpush1.bf16.msra.mxu0 %v507
    %709 = vmatprep.subr.bf16.mxu0 %v516
    %710 = vmatpush1.bf16.msra.mxu0 %v515
    %711 = vmatprep.subr.bf16.mxu0 %v524
    %712 = vmatpush1.bf16.msra.mxu0 %v523
    %713 = vmatprep.subr.bf16.mxu0 %v582
    %714 = vmatpush1.bf16.msra.mxu0 %v579
    %715 = vmatprep.subr.bf16.mxu0 0
    %716 = vmatpush1.bf16.msra.mxu0 0
    %717 = vmatprep.subr.bf16.mxu0 0
    %718 = vmatpush1.bf16.msra.mxu0 0
    %719 = vmatprep.subr.bf16.mxu0 0
    %720 = vmatpush1.bf16.msra.mxu0 0
    %721 = vmatprep.subr.bf16.mxu0 0
    %722 = vmatpush1.bf16.msra.mxu0 0
    %723 = vmatprep.subr.bf16.mxu0 0
    %724 = vmatpush1.bf16.msra.mxu0 0
    %725 = vmatprep.subr.bf16.mxu0 0
    %726 = vmatpush1.bf16.msra.mxu0 0
    %727 = vmatprep.subr.bf16.mxu0 0
    %728 = vmatpush1.bf16.msra.mxu0 0
    %729 = vmatprep.subr.bf16.mxu0 0
    %730 = vmatpush1.bf16.msra.mxu0 0
    %731 = vmatprep.subr.bf16.mxu0 0
    %732 = vmatpush1.bf16.msra.mxu0 0
    %733 = vmatprep.subr.bf16.mxu0 0
    %734 = vmatpush1.bf16.msra.mxu0 0
    %735 = vmatprep.subr.bf16.mxu0 0
    %736 = vmatpush1.bf16.msra.mxu0 0
    %737 = vmatprep.subr.bf16.mxu0 0
    %738 = vmatpush1.bf16.msra.mxu0 0
    %739 = vmatprep.mubr.bf16.mxu0 0
    %740 = vmatmul.mubr.bf16.gmra.mrb[0].mxu0 %v558
    %v741 = vpop.f32.mrb[0].mxu0
    %v742 = vadd.f32 %v411, %v741
    %v743 = vpop.f32.mrb[0].mxu0
    %v744 = vadd.f32 %v413, %v743
    %v745 = vpop.f32.mrb[0].mxu0
    %v746 = vpop.f32.mrb[0].mxu0
    %747 = vdwg.mxu0
    %s748 = scalar_lea.vmem %s1, 448
    %v749 = vld [vmem:[%s748] sm:$0xff]
    %v750 = vld [vmem:[%s748 + $0x8] sm:$0xff]
    %v751 = vld [vmem:[%s748 + $0x10] sm:$0xff]
    %v752 = vld [vmem:[%s748 + $0x18] sm:$0xff]
    %v753 = vld [vmem:[%s748 + $0x20] sm:$0xff]
    %v754 = vld [vmem:[%s748 + $0x28] sm:$0xff]
    %v755 = vld [vmem:[%s748 + $0x30] sm:$0xff]
    %v756 = vld [vmem:[%s748 + $0x38] sm:$0xff]
    %v757 = vld [vmem:[%s748 + $0x40] sm:$0xff]
    %v758 = vld [vmem:[%s748 + $0x48] sm:$0xff]
    %v759 = vld [vmem:[%s748 + $0x50] sm:$0xff]
    %v760 = vld [vmem:[%s748 + $0x58] sm:$0xff]
    %v761 = vld [vmem:[%s748 + $0x60] sm:$0xff]
    %v762 = vld [vmem:[%s748 + $0x68] sm:$0xff]
    %v763 = vld [vmem:[%s748 + $0x70] sm:$0xff]
    %v764 = vld [vmem:[%s748 + $0x78] sm:$0xff]
    %v765 = vld [vmem:[%s748 + $0x80] sm:$0xff]
    %v766 = vld [vmem:[%s748 + $0x88] sm:$0xff]
    %v767 = vld [vmem:[%s748 + $0x90] sm:$0xff]
    %v768 = vld [vmem:[%s748 + $0x98] sm:$0xff]
    %v769 = vld [vmem:[%s748 + $0xa0] sm:$0xff]
    %v770 = vld [vmem:[%s748 + $0xa8] sm:$0xff]
    %v771 = vld [vmem:[%s748 + $0xb0] sm:$0xff]
    %v772 = vld [vmem:[%s748 + $0xb8] sm:$0xff]
    %v773 = vld [vmem:[%s748 + $0xc0] sm:$0xff]
    %v774 = vld [vmem:[%s748 + $0xc8] sm:$0xff]
    %v775 = vld [vmem:[%s748 + $0xd0] sm:$0xff]
    %v776 = vld [vmem:[%s748 + $0xd8] sm:$0xff]
    %v777 = vrot.slane %v24, 2
    %v806 = vunpack.c.l.b16 %v749
    %v807 = vunpack.c.h.b16 %v749
    %v808 = vunpack.c.l.b16 %v750
    %v809 = vunpack.c.h.b16 %v750
    %v810 = vunpack.c.l.b16 %v751
    %v811 = vunpack.c.h.b16 %v751
    %v812 = vunpack.c.l.b16 %v752
    %v813 = vunpack.c.h.b16 %v752
    %v814 = vunpack.c.l.b16 %v753
    %v815 = vunpack.c.h.b16 %v753
    %v816 = vunpack.c.l.b16 %v754
    %v817 = vunpack.c.h.b16 %v754
    %v818 = vunpack.c.l.b16 %v755
    %v819 = vunpack.c.h.b16 %v755
    %v820 = vunpack.c.l.b16 %v756
    %v821 = vunpack.c.h.b16 %v756
    %v822 = vunpack.c.l.b16 %v757
    %v823 = vunpack.c.h.b16 %v757
    %v824 = vunpack.c.l.b16 %v758
    %v825 = vunpack.c.h.b16 %v758
    %v826 = vunpack.c.l.b16 %v759
    %v827 = vunpack.c.h.b16 %v759
    %v828 = vunpack.c.l.b16 %v760
    %v829 = vunpack.c.h.b16 %v760
    %v830 = vunpack.c.l.b16 %v761
    %v831 = vunpack.c.h.b16 %v761
    %v832 = vunpack.c.l.b16 %v762
    %v833 = vunpack.c.h.b16 %v762
    %v834 = vunpack.c.l.b16 %v763
    %v835 = vunpack.c.h.b16 %v763
    %v836 = vunpack.c.l.b16 %v764
    %v837 = vunpack.c.h.b16 %v764
    %v838 = vunpack.c.l.b16 %v765
    %v839 = vunpack.c.h.b16 %v765
    %v840 = vunpack.c.l.b16 %v766
    %v841 = vunpack.c.h.b16 %v766
    %v842 = vunpack.c.l.b16 %v767
    %v843 = vunpack.c.h.b16 %v767
    %v844 = vunpack.c.l.b16 %v768
    %v845 = vunpack.c.h.b16 %v768
    %v846 = vunpack.c.l.b16 %v769
    %v847 = vunpack.c.h.b16 %v769
    %v848 = vunpack.c.l.b16 %v770
    %v849 = vunpack.c.h.b16 %v770
    %v850 = vunpack.c.l.b16 %v771
    %v851 = vunpack.c.h.b16 %v771
    %v852 = vunpack.c.l.b16 %v772
    %v853 = vunpack.c.h.b16 %v772
    %v854 = vunpack.c.l.b16 %v773
    %v855 = vunpack.c.h.b16 %v773
    %v856 = vunpack.c.l.b16 %v774
    %v857 = vunpack.c.h.b16 %v774
    %v858 = vunpack.c.l.b16 %v775
    %v859 = vunpack.c.h.b16 %v775
    %v860 = vunpack.c.l.b16 %v776
    %v861 = vunpack.c.h.b16 %v776
    %v862 = vpack.c.b16 %v814, %v806
    %v863 = vpack.c.b16 %v815, %v807
    %v864 = vpack.c.b16 %v816, %v808
    %v865 = vpack.c.b16 %v817, %v809
    %v866 = vpack.c.b16 %v818, %v810
    %v867 = vpack.c.b16 %v819, %v811
    %v868 = vpack.c.b16 %v820, %v812
    %v869 = vpack.c.b16 %v821, %v813
    %v870 = vpack.c.b16 %v830, %v822
    %v871 = vpack.c.b16 %v831, %v823
    %v872 = vpack.c.b16 %v832, %v824
    %v873 = vpack.c.b16 %v833, %v825
    %v874 = vpack.c.b16 %v834, %v826
    %v875 = vpack.c.b16 %v835, %v827
    %v876 = vpack.c.b16 %v836, %v828
    %v877 = vpack.c.b16 %v837, %v829
    %v878 = vpack.c.b16 %v846, %v838
    %v879 = vpack.c.b16 %v847, %v839
    %v880 = vpack.c.b16 %v848, %v840
    %v881 = vpack.c.b16 %v849, %v841
    %v882 = vpack.c.b16 %v850, %v842
    %v883 = vpack.c.b16 %v851, %v843
    %v884 = vpack.c.b16 %v852, %v844
    %v885 = vpack.c.b16 %v853, %v845
    %v886 = vpack.c.b16 %v854, %v854
    %v887 = vpack.c.b16 %v855, %v855
    %v888 = vpack.c.b16 %v856, %v856
    %v889 = vpack.c.b16 %v857, %v857
    %v890 = vpack.c.b16 %v858, %v858
    %v891 = vpack.c.b16 %v859, %v859
    %v892 = vpack.c.b16 %v860, %v860
    %v893 = vpack.c.b16 %v861, %v861
    %v919 = vsel %vm224, %v777, 0
    %v922 = vsel %vm228, %v886, 0
    %v925 = vsel %vm228, %v887, 0
    %v928 = vsel %vm228, %v888, 0
    %v931 = vsel %vm228, %v889, 0
    %v934 = vsel %vm228, %v890, 0
    %v937 = vsel %vm228, %v891, 0
    %v940 = vsel %vm228, %v892, 0
    %v943 = vsel %vm228, %v893, 0
    %945 = vmatprep.subr.bf16.mxu0 %v863
    %946 = vmatpush1.bf16.msra.mxu0 %v862
    %947 = vmatprep.subr.bf16.mxu0 %v871
    %948 = vmatpush1.bf16.msra.mxu0 %v870
    %949 = vmatprep.subr.bf16.mxu0 %v879
    %950 = vmatpush1.bf16.msra.mxu0 %v878
    %951 = vmatprep.subr.bf16.mxu0 %v925
    %952 = vmatpush1.bf16.msra.mxu0 %v922
    %953 = vmatprep.subr.bf16.mxu0 0
    %954 = vmatpush1.bf16.msra.mxu0 0
    %955 = vmatprep.subr.bf16.mxu0 0
    %956 = vmatpush1.bf16.msra.mxu0 0
    %957 = vmatprep.subr.bf16.mxu0 0
    %958 = vmatpush1.bf16.msra.mxu0 0
    %959 = vmatprep.subr.bf16.mxu0 0
    %960 = vmatpush1.bf16.msra.mxu0 0
    %961 = vmatprep.subr.bf16.mxu0 0
    %962 = vmatpush1.bf16.msra.mxu0 0
    %963 = vmatprep.subr.bf16.mxu0 0
    %964 = vmatpush1.bf16.msra.mxu0 0
    %965 = vmatprep.subr.bf16.mxu0 0
    %966 = vmatpush1.bf16.msra.mxu0 0
    %967 = vmatprep.subr.bf16.mxu0 0
    %968 = vmatpush1.bf16.msra.mxu0 0
    %969 = vmatprep.subr.bf16.mxu0 0
    %970 = vmatpush1.bf16.msra.mxu0 0
    %971 = vmatprep.subr.bf16.mxu0 0
    %972 = vmatpush1.bf16.msra.mxu0 0
    %973 = vmatprep.subr.bf16.mxu0 0
    %974 = vmatpush1.bf16.msra.mxu0 0
    %975 = vmatprep.subr.bf16.mxu0 0
    %976 = vmatpush1.bf16.msra.mxu0 0
    %977 = vmatprep.mubr.bf16.mxu0 0
    %978 = vmatmul.mubr.bf16.gmra.mrb[0].mxu0 %v919
    %v979 = vpop.f32.mrb[0].mxu0
    %v980 = vadd.f32 0.0, %v979
    %v981 = vpop.f32.mrb[0].mxu0
    %v982 = vadd.f32 0.0, %v981
    %v983 = vpop.f32.mrb[0].mxu0
    %v984 = vpop.f32.mrb[0].mxu0
    %985 = vdwg.mxu0
    %986 = vmatprep.subr.bf16.mxu0 %v865
    %987 = vmatpush1.bf16.msra.mxu0 %v864
    %988 = vmatprep.subr.bf16.mxu0 %v873
    %989 = vmatpush1.bf16.msra.mxu0 %v872
    %990 = vmatprep.subr.bf16.mxu0 %v881
    %991 = vmatpush1.bf16.msra.mxu0 %v880
    %992 = vmatprep.subr.bf16.mxu0 %v931
    %993 = vmatpush1.bf16.msra.mxu0 %v928
    %994 = vmatprep.subr.bf16.mxu0 0
    %995 = vmatpush1.bf16.msra.mxu0 0
    %996 = vmatprep.subr.bf16.mxu0 0
    %997 = vmatpush1.bf16.msra.mxu0 0
    %998 = vmatprep.subr.bf16.mxu0 0
    %999 = vmatpush1.bf16.msra.mxu0 0
    %1000 = vmatprep.subr.bf16.mxu0 0
    %1001 = vmatpush1.bf16.msra.mxu0 0
    %1002 = vmatprep.subr.bf16.mxu0 0
    %1003 = vmatpush1.bf16.msra.mxu0 0
    %1004 = vmatprep.subr.bf16.mxu0 0
    %1005 = vmatpush1.bf16.msra.mxu0 0
    %1006 = vmatprep.subr.bf16.mxu0 0
    %1007 = vmatpush1.bf16.msra.mxu0 0
    %1008 = vmatprep.subr.bf16.mxu0 0
    %1009 = vmatpush1.bf16.msra.mxu0 0
    %1010 = vmatprep.subr.bf16.mxu0 0
    %1011 = vmatpush1.bf16.msra.mxu0 0
    %1012 = vmatprep.subr.bf16.mxu0 0
    %1013 = vmatpush1.bf16.msra.mxu0 0
    %1014 = vmatprep.subr.bf16.mxu0 0
    %1015 = vmatpush1.bf16.msra.mxu0 0
    %1016 = vmatprep.subr.bf16.mxu0 0
    %1017 = vmatpush1.bf16.msra.mxu0 0
    %1018 = vmatprep.mubr.bf16.mxu0 0
    %1019 = vmatmul.mubr.bf16.gmra.mrb[0].mxu0 %v919
    %v1020 = vpop.f32.mrb[0].mxu0
    %v1021 = vadd.f32 0.0, %v1020
    %v1022 = vpop.f32.mrb[0].mxu0
    %v1023 = vadd.f32 0.0, %v1022
    %v1024 = vpop.f32.mrb[0].mxu0
    %v1025 = vpop.f32.mrb[0].mxu0
    %1026 = vdwg.mxu0
    %1027 = vmatprep.subr.bf16.mxu0 %v867
    %1028 = vmatpush1.bf16.msra.mxu0 %v866
    %1029 = vmatprep.subr.bf16.mxu0 %v875
    %1030 = vmatpush1.bf16.msra.mxu0 %v874
    %1031 = vmatprep.subr.bf16.mxu0 %v883
    %1032 = vmatpush1.bf16.msra.mxu0 %v882
    %1033 = vmatprep.subr.bf16.mxu0 %v937
    %1034 = vmatpush1.bf16.msra.mxu0 %v934
    %1035 = vmatprep.subr.bf16.mxu0 0
    %1036 = vmatpush1.bf16.msra.mxu0 0
    %1037 = vmatprep.subr.bf16.mxu0 0
    %1038 = vmatpush1.bf16.msra.mxu0 0
    %1039 = vmatprep.subr.bf16.mxu0 0
    %1040 = vmatpush1.bf16.msra.mxu0 0
    %1041 = vmatprep.subr.bf16.mxu0 0
    %1042 = vmatpush1.bf16.msra.mxu0 0
    %1043 = vmatprep.subr.bf16.mxu0 0
    %1044 = vmatpush1.bf16.msra.mxu0 0
    %1045 = vmatprep.subr.bf16.mxu0 0
    %1046 = vmatpush1.bf16.msra.mxu0 0
    %1047 = vmatprep.subr.bf16.mxu0 0
    %1048 = vmatpush1.bf16.msra.mxu0 0
    %1049 = vmatprep.subr.bf16.mxu0 0
    %1050 = vmatpush1.bf16.msra.mxu0 0
    %1051 = vmatprep.subr.bf16.mxu0 0
    %1052 = vmatpush1.bf16.msra.mxu0 0
    %1053 = vmatprep.subr.bf16.mxu0 0
    %1054 = vmatpush1.bf16.msra.mxu0 0
    %1055 = vmatprep.subr.bf16.mxu0 0
    %1056 = vmatpush1.bf16.msra.mxu0 0
    %1057 = vmatprep.subr.bf16.mxu0 0
    %1058 = vmatpush1.bf16.msra.mxu0 0
    %1059 = vmatprep.mubr.bf16.mxu0 0
    %1060 = vmatmul.mubr.bf16.gmra.mrb[0].mxu0 %v919
    %v1061 = vpop.f32.mrb[0].mxu0
    %v1062 = vadd.f32 0.0, %v1061
    %v1063 = vpop.f32.mrb[0].mxu0
    %v1064 = vadd.f32 0.0, %v1063
    %v1065 = vpop.f32.mrb[0].mxu0
    %v1066 = vpop.f32.mrb[0].mxu0
    %1067 = vdwg.mxu0
    %1068 = vmatprep.subr.bf16.mxu0 %v869
    %1069 = vmatpush1.bf16.msra.mxu0 %v868
    %1070 = vmatprep.subr.bf16.mxu0 %v877
    %1071 = vmatpush1.bf16.msra.mxu0 %v876
    %1072 = vmatprep.subr.bf16.mxu0 %v885
    %1073 = vmatpush1.bf16.msra.mxu0 %v884
    %1074 = vmatprep.subr.bf16.mxu0 %v943
    %1075 = vmatpush1.bf16.msra.mxu0 %v940
    %1076 = vmatprep.subr.bf16.mxu0 0
    %1077 = vmatpush1.bf16.msra.mxu0 0
    %1078 = vmatprep.subr.bf16.mxu0 0
    %1079 = vmatpush1.bf16.msra.mxu0 0
    %1080 = vmatprep.subr.bf16.mxu0 0
    %1081 = vmatpush1.bf16.msra.mxu0 0
    %1082 = vmatprep.subr.bf16.mxu0 0
    %1083 = vmatpush1.bf16.msra.mxu0 0
    %1084 = vmatprep.subr.bf16.mxu0 0
    %1085 = vmatpush1.bf16.msra.mxu0 0
    %1086 = vmatprep.subr.bf16.mxu0 0
    %1087 = vmatpush1.bf16.msra.mxu0 0
    %1088 = vmatprep.subr.bf16.mxu0 0
    %1089 = vmatpush1.bf16.msra.mxu0 0
    %1090 = vmatprep.subr.bf16.mxu0 0
    %1091 = vmatpush1.bf16.msra.mxu0 0
    %1092 = vmatprep.subr.bf16.mxu0 0
    %1093 = vmatpush1.bf16.msra.mxu0 0
    %1094 = vmatprep.subr.bf16.mxu0 0
    %1095 = vmatpush1.bf16.msra.mxu0 0
    %1096 = vmatprep.subr.bf16.mxu0 0
    %1097 = vmatpush1.bf16.msra.mxu0 0
    %1098 = vmatprep.subr.bf16.mxu0 0
    %1099 = vmatpush1.bf16.msra.mxu0 0
    %1100 = vmatprep.mubr.bf16.mxu0 0
    %1101 = vmatmul.mubr.bf16.gmra.mrb[0].mxu0 %v919
    %v1102 = vpop.f32.mrb[0].mxu0
    %v1103 = vadd.f32 0.0, %v1102
    %v1104 = vpop.f32.mrb[0].mxu0
    %v1105 = vadd.f32 0.0, %v1104
    %v1106 = vpop.f32.mrb[0].mxu0
    %v1107 = vpop.f32.mrb[0].mxu0
    %1108 = vdwg.mxu0
    %v1109 = vadd.f32 %v619, %v980
    %v1110 = vadd.f32 %v621, %v982
    %v1111 = vadd.f32 %v660, %v1021
    %v1112 = vadd.f32 %v662, %v1023
    %v1113 = vadd.f32 %v701, %v1062
    %v1114 = vadd.f32 %v703, %v1064
    %v1115 = vadd.f32 %v742, %v1103
    %v1116 = vadd.f32 %v744, %v1105
    %s1117 = scalar_lea.vmem %s1, 672
    %v1118 = vld [vmem:[%s1117] sm:$0xff]
    %v1119 = vld [vmem:[%s1117 + $0x8] sm:$0xff]
    %v1120 = vld [vmem:[%s1117 + $0x10] sm:$0xff]
    %v1121 = vld [vmem:[%s1117 + $0x18] sm:$0xff]
    %v1122 = vld [vmem:[%s1117 + $0x20] sm:$0xff]
    %v1123 = vld [vmem:[%s1117 + $0x28] sm:$0xff]
    %v1124 = vld [vmem:[%s1117 + $0x30] sm:$0xff]
    %v1125 = vld [vmem:[%s1117 + $0x38] sm:$0xff]
    %v1126 = vld [vmem:[%s1117 + $0x40] sm:$0xff]
    %v1127 = vld [vmem:[%s1117 + $0x48] sm:$0xff]
    %v1128 = vld [vmem:[%s1117 + $0x50] sm:$0xff]
    %v1129 = vld [vmem:[%s1117 + $0x58] sm:$0xff]
    %v1130 = vld [vmem:[%s1117 + $0x60] sm:$0xff]
    %v1131 = vld [vmem:[%s1117 + $0x68] sm:$0xff]
    %v1132 = vld [vmem:[%s1117 + $0x70] sm:$0xff]
    %v1133 = vld [vmem:[%s1117 + $0x78] sm:$0xff]
    %v1134 = vld [vmem:[%s1117 + $0x80] sm:$0xff]
    %v1135 = vld [vmem:[%s1117 + $0x88] sm:$0xff]
    %v1136 = vld [vmem:[%s1117 + $0x90] sm:$0xff]
    %v1137 = vld [vmem:[%s1117 + $0x98] sm:$0xff]
    %v1138 = vld [vmem:[%s1117 + $0xa0] sm:$0xff]
    %v1139 = vld [vmem:[%s1117 + $0xa8] sm:$0xff]
    %v1140 = vld [vmem:[%s1117 + $0xb0] sm:$0xff]
    %v1141 = vld [vmem:[%s1117 + $0xb8] sm:$0xff]
    %v1142 = vld [vmem:[%s1117 + $0xc0] sm:$0xff]
    %v1143 = vld [vmem:[%s1117 + $0xc8] sm:$0xff]
    %v1144 = vld [vmem:[%s1117 + $0xd0] sm:$0xff]
    %v1145 = vld [vmem:[%s1117 + $0xd8] sm:$0xff]
    %v1146 = vrot.slane %v24, 3
    %v1175 = vunpack.c.l.b16 %v1118
    %v1176 = vunpack.c.h.b16 %v1118
    %v1177 = vunpack.c.l.b16 %v1119
    %v1178 = vunpack.c.h.b16 %v1119
    %v1179 = vunpack.c.l.b16 %v1120
    %v1180 = vunpack.c.h.b16 %v1120
    %v1181 = vunpack.c.l.b16 %v1121
    %v1182 = vunpack.c.h.b16 %v1121
    %v1183 = vunpack.c.l.b16 %v1122
    %v1184 = vunpack.c.h.b16 %v1122
    %v1185 = vunpack.c.l.b16 %v1123
    %v1186 = vunpack.c.h.b16 %v1123
    %v1187 = vunpack.c.l.b16 %v1124
    %v1188 = vunpack.c.h.b16 %v1124
    %v1189 = vunpack.c.l.b16 %v1125
    %v1190 = vunpack.c.h.b16 %v1125
    %v1191 = vunpack.c.l.b16 %v1126
    %v1192 = vunpack.c.h.b16 %v1126
    %v1193 = vunpack.c.l.b16 %v1127
    %v1194 = vunpack.c.h.b16 %v1127
    %v1195 = vunpack.c.l.b16 %v1128
    %v1196 = vunpack.c.h.b16 %v1128
    %v1197 = vunpack.c.l.b16 %v1129
    %v1198 = vunpack.c.h.b16 %v1129
    %v1199 = vunpack.c.l.b16 %v1130
    %v1200 = vunpack.c.h.b16 %v1130
    %v1201 = vunpack.c.l.b16 %v1131
    %v1202 = vunpack.c.h.b16 %v1131
    %v1203 = vunpack.c.l.b16 %v1132
    %v1204 = vunpack.c.h.b16 %v1132
    %v1205 = vunpack.c.l.b16 %v1133
    %v1206 = vunpack.c.h.b16 %v1133
    %v1207 = vunpack.c.l.b16 %v1134
    %v1208 = vunpack.c.h.b16 %v1134
    %v1209 = vunpack.c.l.b16 %v1135
    %v1210 = vunpack.c.h.b16 %v1135
    %v1211 = vunpack.c.l.b16 %v1136
    %v1212 = vunpack.c.h.b16 %v1136
    %v1213 = vunpack.c.l.b16 %v1137
    %v1214 = vunpack.c.h.b16 %v1137
    %v1215 = vunpack.c.l.b16 %v1138
    %v1216 = vunpack.c.h.b16 %v1138
    %v1217 = vunpack.c.l.b16 %v1139
    %v1218 = vunpack.c.h.b16 %v1139
    %v1219 = vunpack.c.l.b16 %v1140
    %v1220 = vunpack.c.h.b16 %v1140
    %v1221 = vunpack.c.l.b16 %v1141
    %v1222 = vunpack.c.h.b16 %v1141
    %v1223 = vunpack.c.l.b16 %v1142
    %v1224 = vunpack.c.h.b16 %v1142
    %v1225 = vunpack.c.l.b16 %v1143
    %v1226 = vunpack.c.h.b16 %v1143
    %v1227 = vunpack.c.l.b16 %v1144
    %v1228 = vunpack.c.h.b16 %v1144
    %v1229 = vunpack.c.l.b16 %v1145
    %v1230 = vunpack.c.h.b16 %v1145
    %v1231 = vpack.c.b16 %v1183, %v1175
    %v1232 = vpack.c.b16 %v1184, %v1176
    %v1233 = vpack.c.b16 %v1185, %v1177
    %v1234 = vpack.c.b16 %v1186, %v1178
    %v1235 = vpack.c.b16 %v1187, %v1179
    %v1236 = vpack.c.b16 %v1188, %v1180
    %v1237 = vpack.c.b16 %v1189, %v1181
    %v1238 = vpack.c.b16 %v1190, %v1182
    %v1239 = vpack.c.b16 %v1199, %v1191
    %v1240 = vpack.c.b16 %v1200, %v1192
    %v1241 = vpack.c.b16 %v1201, %v1193
    %v1242 = vpack.c.b16 %v1202, %v1194
    %v1243 = vpack.c.b16 %v1203, %v1195
    %v1244 = vpack.c.b16 %v1204, %v1196
    %v1245 = vpack.c.b16 %v1205, %v1197
    %v1246 = vpack.c.b16 %v1206, %v1198
    %v1247 = vpack.c.b16 %v1215, %v1207
    %v1248 = vpack.c.b16 %v1216, %v1208
    %v1249 = vpack.c.b16 %v1217, %v1209
    %v1250 = vpack.c.b16 %v1218, %v1210
    %v1251 = vpack.c.b16 %v1219, %v1211
    %v1252 = vpack.c.b16 %v1220, %v1212
    %v1253 = vpack.c.b16 %v1221, %v1213
    %v1254 = vpack.c.b16 %v1222, %v1214
    %v1255 = vpack.c.b16 %v1223, %v1223
    %v1256 = vpack.c.b16 %v1224, %v1224
    %v1257 = vpack.c.b16 %v1225, %v1225
    %v1258 = vpack.c.b16 %v1226, %v1226
    %v1259 = vpack.c.b16 %v1227, %v1227
    %v1260 = vpack.c.b16 %v1228, %v1228
    %v1261 = vpack.c.b16 %v1229, %v1229
    %v1262 = vpack.c.b16 %v1230, %v1230
    %v1288 = vsel %vm224, %v1146, 0
    %v1291 = vsel %vm228, %v1255, 0
    %v1294 = vsel %vm228, %v1256, 0
    %v1297 = vsel %vm228, %v1257, 0
    %v1300 = vsel %vm228, %v1258, 0
    %v1303 = vsel %vm228, %v1259, 0
    %v1306 = vsel %vm228, %v1260, 0
    %v1309 = vsel %vm228, %v1261, 0
    %v1312 = vsel %vm228, %v1262, 0
    %1314 = vmatprep.subr.bf16.mxu0 %v1232
    %1315 = vmatpush1.bf16.msra.mxu0 %v1231
    %1316 = vmatprep.subr.bf16.mxu0 %v1240
    %1317 = vmatpush1.bf16.msra.mxu0 %v1239
    %1318 = vmatprep.subr.bf16.mxu0 %v1248
    %1319 = vmatpush1.bf16.msra.mxu0 %v1247
    %1320 = vmatprep.subr.bf16.mxu0 %v1294
    %1321 = vmatpush1.bf16.msra.mxu0 %v1291
    %1322 = vmatprep.subr.bf16.mxu0 0
    %1323 = vmatpush1.bf16.msra.mxu0 0
    %1324 = vmatprep.subr.bf16.mxu0 0
    %1325 = vmatpush1.bf16.msra.mxu0 0
    %1326 = vmatprep.subr.bf16.mxu0 0
    %1327 = vmatpush1.bf16.msra.mxu0 0
    %1328 = vmatprep.subr.bf16.mxu0 0
    %1329 = vmatpush1.bf16.msra.mxu0 0
    %1330 = vmatprep.subr.bf16.mxu0 0
    %1331 = vmatpush1.bf16.msra.mxu0 0
    %1332 = vmatprep.subr.bf16.mxu0 0
    %1333 = vmatpush1.bf16.msra.mxu0 0
    %1334 = vmatprep.subr.bf16.mxu0 0
    %1335 = vmatpush1.bf16.msra.mxu0 0
    %1336 = vmatprep.subr.bf16.mxu0 0
    %1337 = vmatpush1.bf16.msra.mxu0 0
    %1338 = vmatprep.subr.bf16.mxu0 0
    %1339 = vmatpush1.bf16.msra.mxu0 0
    %1340 = vmatprep.subr.bf16.mxu0 0
    %1341 = vmatpush1.bf16.msra.mxu0 0
    %1342 = vmatprep.subr.bf16.mxu0 0
    %1343 = vmatpush1.bf16.msra.mxu0 0
    %1344 = vmatprep.subr.bf16.mxu0 0
    %1345 = vmatpush1.bf16.msra.mxu0 0
    %1346 = vmatprep.mubr.bf16.mxu0 0
    %1347 = vmatmul.mubr.bf16.gmra.mrb[0].mxu0 %v1288
    %v1348 = vpop.f32.mrb[0].mxu0
    %v1349 = vadd.f32 0.0, %v1348
    %v1350 = vpop.f32.mrb[0].mxu0
    %v1351 = vadd.f32 0.0, %v1350
    %v1352 = vpop.f32.mrb[0].mxu0
    %v1353 = vpop.f32.mrb[0].mxu0
    %1354 = vdwg.mxu0
    %1355 = vmatprep.subr.bf16.mxu0 %v1234
    %1356 = vmatpush1.bf16.msra.mxu0 %v1233
    %1357 = vmatprep.subr.bf16.mxu0 %v1242
    %1358 = vmatpush1.bf16.msra.mxu0 %v1241
    %1359 = vmatprep.subr.bf16.mxu0 %v1250
    %1360 = vmatpush1.bf16.msra.mxu0 %v1249
    %1361 = vmatprep.subr.bf16.mxu0 %v1300
    %1362 = vmatpush1.bf16.msra.mxu0 %v1297
    %1363 = vmatprep.subr.bf16.mxu0 0
    %1364 = vmatpush1.bf16.msra.mxu0 0
    %1365 = vmatprep.subr.bf16.mxu0 0
    %1366 = vmatpush1.bf16.msra.mxu0 0
    %1367 = vmatprep.subr.bf16.mxu0 0
    %1368 = vmatpush1.bf16.msra.mxu0 0
    %1369 = vmatprep.subr.bf16.mxu0 0
    %1370 = vmatpush1.bf16.msra.mxu0 0
    %1371 = vmatprep.subr.bf16.mxu0 0
    %1372 = vmatpush1.bf16.msra.mxu0 0
    %1373 = vmatprep.subr.bf16.mxu0 0
    %1374 = vmatpush1.bf16.msra.mxu0 0
    %1375 = vmatprep.subr.bf16.mxu0 0
    %1376 = vmatpush1.bf16.msra.mxu0 0
    %1377 = vmatprep.subr.bf16.mxu0 0
    %1378 = vmatpush1.bf16.msra.mxu0 0
    %1379 = vmatprep.subr.bf16.mxu0 0
    %1380 = vmatpush1.bf16.msra.mxu0 0
    %1381 = vmatprep.subr.bf16.mxu0 0
    %1382 = vmatpush1.bf16.msra.mxu0 0
    %1383 = vmatprep.subr.bf16.mxu0 0
    %1384 = vmatpush1.bf16.msra.mxu0 0
    %1385 = vmatprep.subr.bf16.mxu0 0
    %1386 = vmatpush1.bf16.msra.mxu0 0
    %1387 = vmatprep.mubr.bf16.mxu0 0
    %1388 = vmatmul.mubr.bf16.gmra.mrb[0].mxu0 %v1288
    %v1389 = vpop.f32.mrb[0].mxu0
    %v1390 = vadd.f32 0.0, %v1389
    %v1391 = vpop.f32.mrb[0].mxu0
    %v1392 = vadd.f32 0.0, %v1391
    %v1393 = vpop.f32.mrb[0].mxu0
    %v1394 = vpop.f32.mrb[0].mxu0
    %1395 = vdwg.mxu0
    %1396 = vmatprep.subr.bf16.mxu0 %v1236
    %1397 = vmatpush1.bf16.msra.mxu0 %v1235
    %1398 = vmatprep.subr.bf16.mxu0 %v1244
    %1399 = vmatpush1.bf16.msra.mxu0 %v1243
    %1400 = vmatprep.subr.bf16.mxu0 %v1252
    %1401 = vmatpush1.bf16.msra.mxu0 %v1251
    %1402 = vmatprep.subr.bf16.mxu0 %v1306
    %1403 = vmatpush1.bf16.msra.mxu0 %v1303
    %1404 = vmatprep.subr.bf16.mxu0 0
    %1405 = vmatpush1.bf16.msra.mxu0 0
    %1406 = vmatprep.subr.bf16.mxu0 0
    %1407 = vmatpush1.bf16.msra.mxu0 0
    %1408 = vmatprep.subr.bf16.mxu0 0
    %1409 = vmatpush1.bf16.msra.mxu0 0
    %1410 = vmatprep.subr.bf16.mxu0 0
    %1411 = vmatpush1.bf16.msra.mxu0 0
    %1412 = vmatprep.subr.bf16.mxu0 0
    %1413 = vmatpush1.bf16.msra.mxu0 0
    %1414 = vmatprep.subr.bf16.mxu0 0
    %1415 = vmatpush1.bf16.msra.mxu0 0
    %1416 = vmatprep.subr.bf16.mxu0 0
    %1417 = vmatpush1.bf16.msra.mxu0 0
    %1418 = vmatprep.subr.bf16.mxu0 0
    %1419 = vmatpush1.bf16.msra.mxu0 0
    %1420 = vmatprep.subr.bf16.mxu0 0
    %1421 = vmatpush1.bf16.msra.mxu0 0
    %1422 = vmatprep.subr.bf16.mxu0 0
    %1423 = vmatpush1.bf16.msra.mxu0 0
    %1424 = vmatprep.subr.bf16.mxu0 0
    %1425 = vmatpush1.bf16.msra.mxu0 0
    %1426 = vmatprep.subr.bf16.mxu0 0
    %1427 = vmatpush1.bf16.msra.mxu0 0
    %1428 = vmatprep.mubr.bf16.mxu0 0
    %1429 = vmatmul.mubr.bf16.gmra.mrb[0].mxu0 %v1288
    %v1430 = vpop.f32.mrb[0].mxu0
    %v1431 = vadd.f32 0.0, %v1430
    %v1432 = vpop.f32.mrb[0].mxu0
    %v1433 = vadd.f32 0.0, %v1432
    %v1434 = vpop.f32.mrb[0].mxu0
    %v1435 = vpop.f32.mrb[0].mxu0
    %1436 = vdwg.mxu0
    %1437 = vmatprep.subr.bf16.mxu0 %v1238
    %1438 = vmatpush1.bf16.msra.mxu0 %v1237
    %1439 = vmatprep.subr.bf16.mxu0 %v1246
    %1440 = vmatpush1.bf16.msra.mxu0 %v1245
    %1441 = vmatprep.subr.bf16.mxu0 %v1254
    %1442 = vmatpush1.bf16.msra.mxu0 %v1253
    %1443 = vmatprep.subr.bf16.mxu0 %v1312
    %1444 = vmatpush1.bf16.msra.mxu0 %v1309
    %1445 = vmatprep.subr.bf16.mxu0 0
    %1446 = vmatpush1.bf16.msra.mxu0 0
    %1447 = vmatprep.subr.bf16.mxu0 0
    %1448 = vmatpush1.bf16.msra.mxu0 0
    %1449 = vmatprep.subr.bf16.mxu0 0
    %1450 = vmatpush1.bf16.msra.mxu0 0
    %1451 = vmatprep.subr.bf16.mxu0 0
    %1452 = vmatpush1.bf16.msra.mxu0 0
    %1453 = vmatprep.subr.bf16.mxu0 0
    %1454 = vmatpush1.bf16.msra.mxu0 0
    %1455 = vmatprep.subr.bf16.mxu0 0
    %1456 = vmatpush1.bf16.msra.mxu0 0
    %1457 = vmatprep.subr.bf16.mxu0 0
    %1458 = vmatpush1.bf16.msra.mxu0 0
    %1459 = vmatprep.subr.bf16.mxu0 0
    %1460 = vmatpush1.bf16.msra.mxu0 0
    %1461 = vmatprep.subr.bf16.mxu0 0
    %1462 = vmatpush1.bf16.msra.mxu0 0
    %1463 = vmatprep.subr.bf16.mxu0 0
    %1464 = vmatpush1.bf16.msra.mxu0 0
    %1465 = vmatprep.subr.bf16.mxu0 0
    %1466 = vmatpush1.bf16.msra.mxu0 0
    %1467 = vmatprep.subr.bf16.mxu0 0
    %1468 = vmatpush1.bf16.msra.mxu0 0
    %1469 = vmatprep.mubr.bf16.mxu0 0
    %1470 = vmatmul.mubr.bf16.gmra.mrb[0].mxu0 %v1288
    %v1471 = vpop.f32.mrb[0].mxu0
    %v1472 = vadd.f32 0.0, %v1471
    %v1473 = vpop.f32.mrb[0].mxu0
    %v1474 = vadd.f32 0.0, %v1473
    %v1475 = vpop.f32.mrb[0].mxu0
    %v1476 = vpop.f32.mrb[0].mxu0
    %1477 = vdwg.mxu0
    %v1478 = vadd.f32 %v1109, %v1349
    %v1479 = vadd.f32 %v1110, %v1351
    %v1480 = vadd.f32 %v1111, %v1390
    %v1481 = vadd.f32 %v1112, %v1392
    %v1482 = vadd.f32 %v1113, %v1431
    %v1483 = vadd.f32 %v1114, %v1433
    %v1484 = vadd.f32 %v1115, %v1472
    %v1485 = vadd.f32 %v1116, %v1474
    %v1486 = vpack.c.bf16 %v23, %v23
    %s1487 = scalar_lea.vmem %s1, 896
    %v1488 = vld [vmem:[%s1487] sm:$0xff]
    %v1489 = vld [vmem:[%s1487 + $0x8] sm:$0xff]
    %v1490 = vld [vmem:[%s1487 + $0x10] sm:$0xff]
    %v1491 = vld [vmem:[%s1487 + $0x18] sm:$0xff]
    %v1492 = vld [vmem:[%s1487 + $0x20] sm:$0xff]
    %v1493 = vld [vmem:[%s1487 + $0x28] sm:$0xff]
    %v1494 = vld [vmem:[%s1487 + $0x30] sm:$0xff]
    %v1495 = vld [vmem:[%s1487 + $0x38] sm:$0xff]
    %v1496 = vld [vmem:[%s1487 + $0x40] sm:$0xff]
    %v1497 = vld [vmem:[%s1487 + $0x48] sm:$0xff]
    %v1498 = vld [vmem:[%s1487 + $0x50] sm:$0xff]
    %v1499 = vld [vmem:[%s1487 + $0x58] sm:$0xff]
    %v1500 = vld [vmem:[%s1487 + $0x60] sm:$0xff]
    %v1501 = vld [vmem:[%s1487 + $0x68] sm:$0xff]
    %v1502 = vld [vmem:[%s1487 + $0x70] sm:$0xff]
    %v1503 = vld [vmem:[%s1487 + $0x78] sm:$0xff]
    %v1504 = vld [vmem:[%s1487 + $0x80] sm:$0xff]
    %v1505 = vld [vmem:[%s1487 + $0x88] sm:$0xff]
    %v1506 = vld [vmem:[%s1487 + $0x90] sm:$0xff]
    %v1507 = vld [vmem:[%s1487 + $0x98] sm:$0xff]
    %v1508 = vld [vmem:[%s1487 + $0xa0] sm:$0xff]
    %v1509 = vld [vmem:[%s1487 + $0xa8] sm:$0xff]
    %v1510 = vld [vmem:[%s1487 + $0xb0] sm:$0xff]
    %v1511 = vld [vmem:[%s1487 + $0xb8] sm:$0xff]
    %v1512 = vld [vmem:[%s1487 + $0xc0] sm:$0xff]
    %v1513 = vld [vmem:[%s1487 + $0xc8] sm:$0xff]
    %v1514 = vld [vmem:[%s1487 + $0xd0] sm:$0xff]
    %v1515 = vld [vmem:[%s1487 + $0xd8] sm:$0xff]
    %v1544 = vunpack.c.l.b16 %v1488
    %v1545 = vunpack.c.h.b16 %v1488
    %v1546 = vunpack.c.l.b16 %v1489
    %v1547 = vunpack.c.h.b16 %v1489
    %v1548 = vunpack.c.l.b16 %v1490
    %v1549 = vunpack.c.h.b16 %v1490
    %v1550 = vunpack.c.l.b16 %v1491
    %v1551 = vunpack.c.h.b16 %v1491
    %v1552 = vunpack.c.l.b16 %v1492
    %v1553 = vunpack.c.h.b16 %v1492
    %v1554 = vunpack.c.l.b16 %v1493
    %v1555 = vunpack.c.h.b16 %v1493
    %v1556 = vunpack.c.l.b16 %v1494
    %v1557 = vunpack.c.h.b16 %v1494
    %v1558 = vunpack.c.l.b16 %v1495
    %v1559 = vunpack.c.h.b16 %v1495
    %v1560 = vunpack.c.l.b16 %v1496
    %v1561 = vunpack.c.h.b16 %v1496
    %v1562 = vunpack.c.l.b16 %v1497
    %v1563 = vunpack.c.h.b16 %v1497
    %v1564 = vunpack.c.l.b16 %v1498
    %v1565 = vunpack.c.h.b16 %v1498
    %v1566 = vunpack.c.l.b16 %v1499
    %v1567 = vunpack.c.h.b16 %v1499
    %v1568 = vunpack.c.l.b16 %v1500
    %v1569 = vunpack.c.h.b16 %v1500
    %v1570 = vunpack.c.l.b16 %v1501
    %v1571 = vunpack.c.h.b16 %v1501
    %v1572 = vunpack.c.l.b16 %v1502
    %v1573 = vunpack.c.h.b16 %v1502
    %v1574 = vunpack.c.l.b16 %v1503
    %v1575 = vunpack.c.h.b16 %v1503
    %v1576 = vunpack.c.l.b16 %v1504
    %v1577 = vunpack.c.h.b16 %v1504
    %v1578 = vunpack.c.l.b16 %v1505
    %v1579 = vunpack.c.h.b16 %v1505
    %v1580 = vunpack.c.l.b16 %v1506
    %v1581 = vunpack.c.h.b16 %v1506
    %v1582 = vunpack.c.l.b16 %v1507
    %v1583 = vunpack.c.h.b16 %v1507
    %v1584 = vunpack.c.l.b16 %v1508
    %v1585 = vunpack.c.h.b16 %v1508
    %v1586 = vunpack.c.l.b16 %v1509
    %v1587 = vunpack.c.h.b16 %v1509
    %v1588 = vunpack.c.l.b16 %v1510
    %v1589 = vunpack.c.h.b16 %v1510
    %v1590 = vunpack.c.l.b16 %v1511
    %v1591 = vunpack.c.h.b16 %v1511
    %v1592 = vunpack.c.l.b16 %v1512
    %v1593 = vunpack.c.h.b16 %v1512
    %v1594 = vunpack.c.l.b16 %v1513
    %v1595 = vunpack.c.h.b16 %v1513
    %v1596 = vunpack.c.l.b16 %v1514
    %v1597 = vunpack.c.h.b16 %v1514
    %v1598 = vunpack.c.l.b16 %v1515
    %v1599 = vunpack.c.h.b16 %v1515
    %v1600 = vpack.c.b16 %v1552, %v1544
    %v1601 = vpack.c.b16 %v1553, %v1545
    %v1602 = vpack.c.b16 %v1554, %v1546
    %v1603 = vpack.c.b16 %v1555, %v1547
    %v1604 = vpack.c.b16 %v1556, %v1548
    %v1605 = vpack.c.b16 %v1557, %v1549
    %v1606 = vpack.c.b16 %v1558, %v1550
    %v1607 = vpack.c.b16 %v1559, %v1551
    %v1608 = vpack.c.b16 %v1568, %v1560
    %v1609 = vpack.c.b16 %v1569, %v1561
    %v1610 = vpack.c.b16 %v1570, %v1562
    %v1611 = vpack.c.b16 %v1571, %v1563
    %v1612 = vpack.c.b16 %v1572, %v1564
    %v1613 = vpack.c.b16 %v1573, %v1565
    %v1614 = vpack.c.b16 %v1574, %v1566
    %v1615 = vpack.c.b16 %v1575, %v1567
    %v1616 = vpack.c.b16 %v1584, %v1576
    %v1617 = vpack.c.b16 %v1585, %v1577
    %v1618 = vpack.c.b16 %v1586, %v1578
    %v1619 = vpack.c.b16 %v1587, %v1579
    %v1620 = vpack.c.b16 %v1588, %v1580
    %v1621 = vpack.c.b16 %v1589, %v1581
    %v1622 = vpack.c.b16 %v1590, %v1582
    %v1623 = vpack.c.b16 %v1591, %v1583
    %v1624 = vpack.c.b16 %v1592, %v1592
    %v1625 = vpack.c.b16 %v1593, %v1593
    %v1626 = vpack.c.b16 %v1594, %v1594
    %v1627 = vpack.c.b16 %v1595, %v1595
    %v1628 = vpack.c.b16 %v1596, %v1596
    %v1629 = vpack.c.b16 %v1597, %v1597
    %v1630 = vpack.c.b16 %v1598, %v1598
    %v1631 = vpack.c.b16 %v1599, %v1599
    %v1657 = vsel %vm224, %v1486, 0
    %v1660 = vsel %vm228, %v1624, 0
    %v1663 = vsel %vm228, %v1625, 0
    %v1666 = vsel %vm228, %v1626, 0
    %v1669 = vsel %vm228, %v1627, 0
    %v1672 = vsel %vm228, %v1628, 0
    %v1675 = vsel %vm228, %v1629, 0
    %v1678 = vsel %vm228, %v1630, 0
    %v1681 = vsel %vm228, %v1631, 0
    %1683 = vmatprep.subr.bf16.mxu0 %v1601
    %1684 = vmatpush1.bf16.msra.mxu0 %v1600
    %1685 = vmatprep.subr.bf16.mxu0 %v1609
    %1686 = vmatpush1.bf16.msra.mxu0 %v1608
    %1687 = vmatprep.subr.bf16.mxu0 %v1617
    %1688 = vmatpush1.bf16.msra.mxu0 %v1616
    %1689 = vmatprep.subr.bf16.mxu0 %v1663
    %1690 = vmatpush1.bf16.msra.mxu0 %v1660
    %1691 = vmatprep.subr.bf16.mxu0 0
    %1692 = vmatpush1.bf16.msra.mxu0 0
    %1693 = vmatprep.subr.bf16.mxu0 0
    %1694 = vmatpush1.bf16.msra.mxu0 0
    %1695 = vmatprep.subr.bf16.mxu0 0
    %1696 = vmatpush1.bf16.msra.mxu0 0
    %1697 = vmatprep.subr.bf16.mxu0 0
    %1698 = vmatpush1.bf16.msra.mxu0 0
    %1699 = vmatprep.subr.bf16.mxu0 0
    %1700 = vmatpush1.bf16.msra.mxu0 0
    %1701 = vmatprep.subr.bf16.mxu0 0
    %1702 = vmatpush1.bf16.msra.mxu0 0
    %1703 = vmatprep.subr.bf16.mxu0 0
    %1704 = vmatpush1.bf16.msra.mxu0 0
    %1705 = vmatprep.subr.bf16.mxu0 0
    %1706 = vmatpush1.bf16.msra.mxu0 0
    %1707 = vmatprep.subr.bf16.mxu0 0
    %1708 = vmatpush1.bf16.msra.mxu0 0
    %1709 = vmatprep.subr.bf16.mxu0 0
    %1710 = vmatpush1.bf16.msra.mxu0 0
    %1711 = vmatprep.subr.bf16.mxu0 0
    %1712 = vmatpush1.bf16.msra.mxu0 0
    %1713 = vmatprep.subr.bf16.mxu0 0
    %1714 = vmatpush1.bf16.msra.mxu0 0
    %1715 = vmatprep.mubr.bf16.mxu0 0
    %1716 = vmatmul.mubr.bf16.gmra.mrb[0].mxu0 %v1657
    %v1717 = vpop.f32.mrb[0].mxu0
    %v1718 = vadd.f32 0.0, %v1717
    %v1719 = vpop.f32.mrb[0].mxu0
    %v1720 = vadd.f32 0.0, %v1719
    %v1721 = vpop.f32.mrb[0].mxu0
    %v1722 = vpop.f32.mrb[0].mxu0
    %1723 = vdwg.mxu0
    %1724 = vmatprep.subr.bf16.mxu0 %v1603
    %1725 = vmatpush1.bf16.msra.mxu0 %v1602
    %1726 = vmatprep.subr.bf16.mxu0 %v1611
    %1727 = vmatpush1.bf16.msra.mxu0 %v1610
    %1728 = vmatprep.subr.bf16.mxu0 %v1619
    %1729 = vmatpush1.bf16.msra.mxu0 %v1618
    %1730 = vmatprep.subr.bf16.mxu0 %v1669
    %1731 = vmatpush1.bf16.msra.mxu0 %v1666
    %1732 = vmatprep.subr.bf16.mxu0 0
    %1733 = vmatpush1.bf16.msra.mxu0 0
    %1734 = vmatprep.subr.bf16.mxu0 0
    %1735 = vmatpush1.bf16.msra.mxu0 0
    %1736 = vmatprep.subr.bf16.mxu0 0
    %1737 = vmatpush1.bf16.msra.mxu0 0
    %1738 = vmatprep.subr.bf16.mxu0 0
    %1739 = vmatpush1.bf16.msra.mxu0 0
    %1740 = vmatprep.subr.bf16.mxu0 0
    %1741 = vmatpush1.bf16.msra.mxu0 0
    %1742 = vmatprep.subr.bf16.mxu0 0
    %1743 = vmatpush1.bf16.msra.mxu0 0
    %1744 = vmatprep.subr.bf16.mxu0 0
    %1745 = vmatpush1.bf16.msra.mxu0 0
    %1746 = vmatprep.subr.bf16.mxu0 0
    %1747 = vmatpush1.bf16.msra.mxu0 0
    %1748 = vmatprep.subr.bf16.mxu0 0
    %1749 = vmatpush1.bf16.msra.mxu0 0
    %1750 = vmatprep.subr.bf16.mxu0 0
    %1751 = vmatpush1.bf16.msra.mxu0 0
    %1752 = vmatprep.subr.bf16.mxu0 0
    %1753 = vmatpush1.bf16.msra.mxu0 0
    %1754 = vmatprep.subr.bf16.mxu0 0
    %1755 = vmatpush1.bf16.msra.mxu0 0
    %1756 = vmatprep.mubr.bf16.mxu0 0
    %1757 = vmatmul.mubr.bf16.gmra.mrb[0].mxu0 %v1657
    %v1758 = vpop.f32.mrb[0].mxu0
    %v1759 = vadd.f32 0.0, %v1758
    %v1760 = vpop.f32.mrb[0].mxu0
    %v1761 = vadd.f32 0.0, %v1760
    %v1762 = vpop.f32.mrb[0].mxu0
    %v1763 = vpop.f32.mrb[0].mxu0
    %1764 = vdwg.mxu0
    %1765 = vmatprep.subr.bf16.mxu0 %v1605
    %1766 = vmatpush1.bf16.msra.mxu0 %v1604
    %1767 = vmatprep.subr.bf16.mxu0 %v1613
    %1768 = vmatpush1.bf16.msra.mxu0 %v1612
    %1769 = vmatprep.subr.bf16.mxu0 %v1621
    %1770 = vmatpush1.bf16.msra.mxu0 %v1620
    %1771 = vmatprep.subr.bf16.mxu0 %v1675
    %1772 = vmatpush1.bf16.msra.mxu0 %v1672
    %1773 = vmatprep.subr.bf16.mxu0 0
    %1774 = vmatpush1.bf16.msra.mxu0 0
    %1775 = vmatprep.subr.bf16.mxu0 0
    %1776 = vmatpush1.bf16.msra.mxu0 0
    %1777 = vmatprep.subr.bf16.mxu0 0
    %1778 = vmatpush1.bf16.msra.mxu0 0
    %1779 = vmatprep.subr.bf16.mxu0 0
    %1780 = vmatpush1.bf16.msra.mxu0 0
    %1781 = vmatprep.subr.bf16.mxu0 0
    %1782 = vmatpush1.bf16.msra.mxu0 0
    %1783 = vmatprep.subr.bf16.mxu0 0
    %1784 = vmatpush1.bf16.msra.mxu0 0
    %1785 = vmatprep.subr.bf16.mxu0 0
    %1786 = vmatpush1.bf16.msra.mxu0 0
    %1787 = vmatprep.subr.bf16.mxu0 0
    %1788 = vmatpush1.bf16.msra.mxu0 0
    %1789 = vmatprep.subr.bf16.mxu0 0
    %1790 = vmatpush1.bf16.msra.mxu0 0
    %1791 = vmatprep.subr.bf16.mxu0 0
    %1792 = vmatpush1.bf16.msra.mxu0 0
    %1793 = vmatprep.subr.bf16.mxu0 0
    %1794 = vmatpush1.bf16.msra.mxu0 0
    %1795 = vmatprep.subr.bf16.mxu0 0
    %1796 = vmatpush1.bf16.msra.mxu0 0
    %1797 = vmatprep.mubr.bf16.mxu0 0
    %1798 = vmatmul.mubr.bf16.gmra.mrb[0].mxu0 %v1657
    %v1799 = vpop.f32.mrb[0].mxu0
    %v1800 = vadd.f32 0.0, %v1799
    %v1801 = vpop.f32.mrb[0].mxu0
    %v1802 = vadd.f32 0.0, %v1801
    %v1803 = vpop.f32.mrb[0].mxu0
    %v1804 = vpop.f32.mrb[0].mxu0
    %1805 = vdwg.mxu0
    %1806 = vmatprep.subr.bf16.mxu0 %v1607
    %1807 = vmatpush1.bf16.msra.mxu0 %v1606
    %1808 = vmatprep.subr.bf16.mxu0 %v1615
    %1809 = vmatpush1.bf16.msra.mxu0 %v1614
    %1810 = vmatprep.subr.bf16.mxu0 %v1623
    %1811 = vmatpush1.bf16.msra.mxu0 %v1622
    %1812 = vmatprep.subr.bf16.mxu0 %v1681
    %1813 = vmatpush1.bf16.msra.mxu0 %v1678
    %1814 = vmatprep.subr.bf16.mxu0 0
    %1815 = vmatpush1.bf16.msra.mxu0 0
    %1816 = vmatprep.subr.bf16.mxu0 0
    %1817 = vmatpush1.bf16.msra.mxu0 0
    %1818 = vmatprep.subr.bf16.mxu0 0
    %1819 = vmatpush1.bf16.msra.mxu0 0
    %1820 = vmatprep.subr.bf16.mxu0 0
    %1821 = vmatpush1.bf16.msra.mxu0 0
    %1822 = vmatprep.subr.bf16.mxu0 0
    %1823 = vmatpush1.bf16.msra.mxu0 0
    %1824 = vmatprep.subr.bf16.mxu0 0
    %1825 = vmatpush1.bf16.msra.mxu0 0
    %1826 = vmatprep.subr.bf16.mxu0 0
    %1827 = vmatpush1.bf16.msra.mxu0 0
    %1828 = vmatprep.subr.bf16.mxu0 0
    %1829 = vmatpush1.bf16.msra.mxu0 0
    %1830 = vmatprep.subr.bf16.mxu0 0
    %1831 = vmatpush1.bf16.msra.mxu0 0
    %1832 = vmatprep.subr.bf16.mxu0 0
    %1833 = vmatpush1.bf16.msra.mxu0 0
    %1834 = vmatprep.subr.bf16.mxu0 0
    %1835 = vmatpush1.bf16.msra.mxu0 0
    %1836 = vmatprep.subr.bf16.mxu0 0
    %1837 = vmatpush1.bf16.msra.mxu0 0
    %1838 = vmatprep.mubr.bf16.mxu0 0
    %1839 = vmatmul.mubr.bf16.gmra.mrb[0].mxu0 %v1657
    %v1840 = vpop.f32.mrb[0].mxu0
    %v1841 = vadd.f32 0.0, %v1840
    %v1842 = vpop.f32.mrb[0].mxu0
    %v1843 = vadd.f32 0.0, %v1842
    %v1844 = vpop.f32.mrb[0].mxu0
    %v1845 = vpop.f32.mrb[0].mxu0
    %1846 = vdwg.mxu0
    %v1847 = vadd.f32 %v1478, %v1718
    %v1848 = vadd.f32 %v1479, %v1720
    %v1849 = vadd.f32 %v1480, %v1759
    %v1850 = vadd.f32 %v1481, %v1761
    %v1851 = vadd.f32 %v1482, %v1800
    %v1852 = vadd.f32 %v1483, %v1802
    %v1853 = vadd.f32 %v1484, %v1841
    %v1854 = vadd.f32 %v1485, %v1843
    %s1855 = scalar_lea.vmem %s1, 1120
    %v1856 = vld [vmem:[%s1855] sm:$0xff]
    %v1857 = vld [vmem:[%s1855 + $0x8] sm:$0xff]
    %v1858 = vld [vmem:[%s1855 + $0x10] sm:$0xff]
    %v1859 = vld [vmem:[%s1855 + $0x18] sm:$0xff]
    %v1860 = vld [vmem:[%s1855 + $0x20] sm:$0xff]
    %v1861 = vld [vmem:[%s1855 + $0x28] sm:$0xff]
    %v1862 = vld [vmem:[%s1855 + $0x30] sm:$0xff]
    %v1863 = vld [vmem:[%s1855 + $0x38] sm:$0xff]
    %v1864 = vld [vmem:[%s1855 + $0x40] sm:$0xff]
    %v1865 = vld [vmem:[%s1855 + $0x48] sm:$0xff]
    %v1866 = vld [vmem:[%s1855 + $0x50] sm:$0xff]
    %v1867 = vld [vmem:[%s1855 + $0x58] sm:$0xff]
    %v1868 = vld [vmem:[%s1855 + $0x60] sm:$0xff]
    %v1869 = vld [vmem:[%s1855 + $0x68] sm:$0xff]
    %v1870 = vld [vmem:[%s1855 + $0x70] sm:$0xff]
    %v1871 = vld [vmem:[%s1855 + $0x78] sm:$0xff]
    %v1872 = vld [vmem:[%s1855 + $0x80] sm:$0xff]
    %v1873 = vld [vmem:[%s1855 + $0x88] sm:$0xff]
    %v1874 = vld [vmem:[%s1855 + $0x90] sm:$0xff]
    %v1875 = vld [vmem:[%s1855 + $0x98] sm:$0xff]
    %v1876 = vld [vmem:[%s1855 + $0xa0] sm:$0xff]
    %v1877 = vld [vmem:[%s1855 + $0xa8] sm:$0xff]
    %v1878 = vld [vmem:[%s1855 + $0xb0] sm:$0xff]
    %v1879 = vld [vmem:[%s1855 + $0xb8] sm:$0xff]
    %v1880 = vld [vmem:[%s1855 + $0xc0] sm:$0xff]
    %v1881 = vld [vmem:[%s1855 + $0xc8] sm:$0xff]
    %v1882 = vld [vmem:[%s1855 + $0xd0] sm:$0xff]
    %v1883 = vld [vmem:[%s1855 + $0xd8] sm:$0xff]
    %v1885 = vrot.slane %v1486, 1
    %v1914 = vunpack.c.l.b16 %v1856
    %v1915 = vunpack.c.h.b16 %v1856
    %v1916 = vunpack.c.l.b16 %v1857
    %v1917 = vunpack.c.h.b16 %v1857
    %v1918 = vunpack.c.l.b16 %v1858
    %v1919 = vunpack.c.h.b16 %v1858
    %v1920 = vunpack.c.l.b16 %v1859
    %v1921 = vunpack.c.h.b16 %v1859
    %v1922 = vunpack.c.l.b16 %v1860
    %v1923 = vunpack.c.h.b16 %v1860
    %v1924 = vunpack.c.l.b16 %v1861
    %v1925 = vunpack.c.h.b16 %v1861
    %v1926 = vunpack.c.l.b16 %v1862
    %v1927 = vunpack.c.h.b16 %v1862
    %v1928 = vunpack.c.l.b16 %v1863
    %v1929 = vunpack.c.h.b16 %v1863
    %v1930 = vunpack.c.l.b16 %v1864
    %v1931 = vunpack.c.h.b16 %v1864
    %v1932 = vunpack.c.l.b16 %v1865
    %v1933 = vunpack.c.h.b16 %v1865
    %v1934 = vunpack.c.l.b16 %v1866
    %v1935 = vunpack.c.h.b16 %v1866
    %v1936 = vunpack.c.l.b16 %v1867
    %v1937 = vunpack.c.h.b16 %v1867
    %v1938 = vunpack.c.l.b16 %v1868
    %v1939 = vunpack.c.h.b16 %v1868
    %v1940 = vunpack.c.l.b16 %v1869
    %v1941 = vunpack.c.h.b16 %v1869
    %v1942 = vunpack.c.l.b16 %v1870
    %v1943 = vunpack.c.h.b16 %v1870
    %v1944 = vunpack.c.l.b16 %v1871
    %v1945 = vunpack.c.h.b16 %v1871
    %v1946 = vunpack.c.l.b16 %v1872
    %v1947 = vunpack.c.h.b16 %v1872
    %v1948 = vunpack.c.l.b16 %v1873
    %v1949 = vunpack.c.h.b16 %v1873
    %v1950 = vunpack.c.l.b16 %v1874
    %v1951 = vunpack.c.h.b16 %v1874
    %v1952 = vunpack.c.l.b16 %v1875
    %v1953 = vunpack.c.h.b16 %v1875
    %v1954 = vunpack.c.l.b16 %v1876
    %v1955 = vunpack.c.h.b16 %v1876
    %v1956 = vunpack.c.l.b16 %v1877
    %v1957 = vunpack.c.h.b16 %v1877
    %v1958 = vunpack.c.l.b16 %v1878
    %v1959 = vunpack.c.h.b16 %v1878
    %v1960 = vunpack.c.l.b16 %v1879
    %v1961 = vunpack.c.h.b16 %v1879
    %v1962 = vunpack.c.l.b16 %v1880
    %v1963 = vunpack.c.h.b16 %v1880
    %v1964 = vunpack.c.l.b16 %v1881
    %v1965 = vunpack.c.h.b16 %v1881
    %v1966 = vunpack.c.l.b16 %v1882
    %v1967 = vunpack.c.h.b16 %v1882
    %v1968 = vunpack.c.l.b16 %v1883
    %v1969 = vunpack.c.h.b16 %v1883
    %v1970 = vpack.c.b16 %v1922, %v1914
    %v1971 = vpack.c.b16 %v1923, %v1915
    %v1972 = vpack.c.b16 %v1924, %v1916
    %v1973 = vpack.c.b16 %v1925, %v1917
    %v1974 = vpack.c.b16 %v1926, %v1918
    %v1975 = vpack.c.b16 %v1927, %v1919
    %v1976 = vpack.c.b16 %v1928, %v1920
    %v1977 = vpack.c.b16 %v1929, %v1921
    %v1978 = vpack.c.b16 %v1938, %v1930
    %v1979 = vpack.c.b16 %v1939, %v1931
    %v1980 = vpack.c.b16 %v1940, %v1932
    %v1981 = vpack.c.b16 %v1941, %v1933
    %v1982 = vpack.c.b16 %v1942, %v1934
    %v1983 = vpack.c.b16 %v1943, %v1935
    %v1984 = vpack.c.b16 %v1944, %v1936
    %v1985 = vpack.c.b16 %v1945, %v1937
    %v1986 = vpack.c.b16 %v1954, %v1946
    %v1987 = vpack.c.b16 %v1955, %v1947
    %v1988 = vpack.c.b16 %v1956, %v1948
    %v1989 = vpack.c.b16 %v1957, %v1949
    %v1990 = vpack.c.b16 %v1958, %v1950
    %v1991 = vpack.c.b16 %v1959, %v1951
    %v1992 = vpack.c.b16 %v1960, %v1952
    %v1993 = vpack.c.b16 %v1961, %v1953
    %v1994 = vpack.c.b16 %v1962, %v1962
    %v1995 = vpack.c.b16 %v1963, %v1963
    %v1996 = vpack.c.b16 %v1964, %v1964
    %v1997 = vpack.c.b16 %v1965, %v1965
    %v1998 = vpack.c.b16 %v1966, %v1966
    %v1999 = vpack.c.b16 %v1967, %v1967
    %v2000 = vpack.c.b16 %v1968, %v1968
    %v2001 = vpack.c.b16 %v1969, %v1969
    %v2027 = vsel %vm224, %v1885, 0
    %v2030 = vsel %vm228, %v1994, 0
    %v2033 = vsel %vm228, %v1995, 0
    %v2036 = vsel %vm228, %v1996, 0
    %v2039 = vsel %vm228, %v1997, 0
    %v2042 = vsel %vm228, %v1998, 0
    %v2045 = vsel %vm228, %v1999, 0
    %v2048 = vsel %vm228, %v2000, 0
    %v2051 = vsel %vm228, %v2001, 0
    %2053 = vmatprep.subr.bf16.mxu0 %v1971
    %2054 = vmatpush1.bf16.msra.mxu0 %v1970
    %2055 = vmatprep.subr.bf16.mxu0 %v1979
    %2056 = vmatpush1.bf16.msra.mxu0 %v1978
    %2057 = vmatprep.subr.bf16.mxu0 %v1987
    %2058 = vmatpush1.bf16.msra.mxu0 %v1986
    %2059 = vmatprep.subr.bf16.mxu0 %v2033
    %2060 = vmatpush1.bf16.msra.mxu0 %v2030
    %2061 = vmatprep.subr.bf16.mxu0 0
    %2062 = vmatpush1.bf16.msra.mxu0 0
    %2063 = vmatprep.subr.bf16.mxu0 0
    %2064 = vmatpush1.bf16.msra.mxu0 0
    %2065 = vmatprep.subr.bf16.mxu0 0
    %2066 = vmatpush1.bf16.msra.mxu0 0
    %2067 = vmatprep.subr.bf16.mxu0 0
    %2068 = vmatpush1.bf16.msra.mxu0 0
    %2069 = vmatprep.subr.bf16.mxu0 0
    %2070 = vmatpush1.bf16.msra.mxu0 0
    %2071 = vmatprep.subr.bf16.mxu0 0
    %2072 = vmatpush1.bf16.msra.mxu0 0
    %2073 = vmatprep.subr.bf16.mxu0 0
    %2074 = vmatpush1.bf16.msra.mxu0 0
    %2075 = vmatprep.subr.bf16.mxu0 0
    %2076 = vmatpush1.bf16.msra.mxu0 0
    %2077 = vmatprep.subr.bf16.mxu0 0
    %2078 = vmatpush1.bf16.msra.mxu0 0
    %2079 = vmatprep.subr.bf16.mxu0 0
    %2080 = vmatpush1.bf16.msra.mxu0 0
    %2081 = vmatprep.subr.bf16.mxu0 0
    %2082 = vmatpush1.bf16.msra.mxu0 0
    %2083 = vmatprep.subr.bf16.mxu0 0
    %2084 = vmatpush1.bf16.msra.mxu0 0
    %2085 = vmatprep.mubr.bf16.mxu0 0
    %2086 = vmatmul.mubr.bf16.gmra.mrb[0].mxu0 %v2027
    %v2087 = vpop.f32.mrb[0].mxu0
    %v2088 = vadd.f32 0.0, %v2087
    %v2089 = vpop.f32.mrb[0].mxu0
    %v2090 = vadd.f32 0.0, %v2089
    %v2091 = vpop.f32.mrb[0].mxu0
    %v2092 = vpop.f32.mrb[0].mxu0
    %2093 = vdwg.mxu0
    %2094 = vmatprep.subr.bf16.mxu0 %v1973
    %2095 = vmatpush1.bf16.msra.mxu0 %v1972
    %2096 = vmatprep.subr.bf16.mxu0 %v1981
    %2097 = vmatpush1.bf16.msra.mxu0 %v1980
    %2098 = vmatprep.subr.bf16.mxu0 %v1989
    %2099 = vmatpush1.bf16.msra.mxu0 %v1988
    %2100 = vmatprep.subr.bf16.mxu0 %v2039
    %2101 = vmatpush1.bf16.msra.mxu0 %v2036
    %2102 = vmatprep.subr.bf16.mxu0 0
    %2103 = vmatpush1.bf16.msra.mxu0 0
    %2104 = vmatprep.subr.bf16.mxu0 0
    %2105 = vmatpush1.bf16.msra.mxu0 0
    %2106 = vmatprep.subr.bf16.mxu0 0
    %2107 = vmatpush1.bf16.msra.mxu0 0
    %2108 = vmatprep.subr.bf16.mxu0 0
    %2109 = vmatpush1.bf16.msra.mxu0 0
    %2110 = vmatprep.subr.bf16.mxu0 0
    %2111 = vmatpush1.bf16.msra.mxu0 0
    %2112 = vmatprep.subr.bf16.mxu0 0
    %2113 = vmatpush1.bf16.msra.mxu0 0
    %2114 = vmatprep.subr.bf16.mxu0 0
    %2115 = vmatpush1.bf16.msra.mxu0 0
    %2116 = vmatprep.subr.bf16.mxu0 0
    %2117 = vmatpush1.bf16.msra.mxu0 0
    %2118 = vmatprep.subr.bf16.mxu0 0
    %2119 = vmatpush1.bf16.msra.mxu0 0
    %2120 = vmatprep.subr.bf16.mxu0 0
    %2121 = vmatpush1.bf16.msra.mxu0 0
    %2122 = vmatprep.subr.bf16.mxu0 0
    %2123 = vmatpush1.bf16.msra.mxu0 0
    %2124 = vmatprep.subr.bf16.mxu0 0
    %2125 = vmatpush1.bf16.msra.mxu0 0
    %2126 = vmatprep.mubr.bf16.mxu0 0
    %2127 = vmatmul.mubr.bf16.gmra.mrb[0].mxu0 %v2027
    %v2128 = vpop.f32.mrb[0].mxu0
    %v2129 = vadd.f32 0.0, %v2128
    %v2130 = vpop.f32.mrb[0].mxu0
    %v2131 = vadd.f32 0.0, %v2130
    %v2132 = vpop.f32.mrb[0].mxu0
    %v2133 = vpop.f32.mrb[0].mxu0
    %2134 = vdwg.mxu0
    %2135 = vmatprep.subr.bf16.mxu0 %v1975
    %2136 = vmatpush1.bf16.msra.mxu0 %v1974
    %2137 = vmatprep.subr.bf16.mxu0 %v1983
    %2138 = vmatpush1.bf16.msra.mxu0 %v1982
    %2139 = vmatprep.subr.bf16.mxu0 %v1991
    %2140 = vmatpush1.bf16.msra.mxu0 %v1990
    %2141 = vmatprep.subr.bf16.mxu0 %v2045
    %2142 = vmatpush1.bf16.msra.mxu0 %v2042
    %2143 = vmatprep.subr.bf16.mxu0 0
    %2144 = vmatpush1.bf16.msra.mxu0 0
    %2145 = vmatprep.subr.bf16.mxu0 0
    %2146 = vmatpush1.bf16.msra.mxu0 0
    %2147 = vmatprep.subr.bf16.mxu0 0
    %2148 = vmatpush1.bf16.msra.mxu0 0
    %2149 = vmatprep.subr.bf16.mxu0 0
    %2150 = vmatpush1.bf16.msra.mxu0 0
    %2151 = vmatprep.subr.bf16.mxu0 0
    %2152 = vmatpush1.bf16.msra.mxu0 0
    %2153 = vmatprep.subr.bf16.mxu0 0
    %2154 = vmatpush1.bf16.msra.mxu0 0
    %2155 = vmatprep.subr.bf16.mxu0 0
    %2156 = vmatpush1.bf16.msra.mxu0 0
    %2157 = vmatprep.subr.bf16.mxu0 0
    %2158 = vmatpush1.bf16.msra.mxu0 0
    %2159 = vmatprep.subr.bf16.mxu0 0
    %2160 = vmatpush1.bf16.msra.mxu0 0
    %2161 = vmatprep.subr.bf16.mxu0 0
    %2162 = vmatpush1.bf16.msra.mxu0 0
    %2163 = vmatprep.subr.bf16.mxu0 0
    %2164 = vmatpush1.bf16.msra.mxu0 0
    %2165 = vmatprep.subr.bf16.mxu0 0
    %2166 = vmatpush1.bf16.msra.mxu0 0
    %2167 = vmatprep.mubr.bf16.mxu0 0
    %2168 = vmatmul.mubr.bf16.gmra.mrb[0].mxu0 %v2027
    %v2169 = vpop.f32.mrb[0].mxu0
    %v2170 = vadd.f32 0.0, %v2169
    %v2171 = vpop.f32.mrb[0].mxu0
    %v2172 = vadd.f32 0.0, %v2171
    %v2173 = vpop.f32.mrb[0].mxu0
    %v2174 = vpop.f32.mrb[0].mxu0
    %2175 = vdwg.mxu0
    %2176 = vmatprep.subr.bf16.mxu0 %v1977
    %2177 = vmatpush1.bf16.msra.mxu0 %v1976
    %2178 = vmatprep.subr.bf16.mxu0 %v1985
    %2179 = vmatpush1.bf16.msra.mxu0 %v1984
    %2180 = vmatprep.subr.bf16.mxu0 %v1993
    %2181 = vmatpush1.bf16.msra.mxu0 %v1992
    %2182 = vmatprep.subr.bf16.mxu0 %v2051
    %2183 = vmatpush1.bf16.msra.mxu0 %v2048
    %2184 = vmatprep.subr.bf16.mxu0 0
    %2185 = vmatpush1.bf16.msra.mxu0 0
    %2186 = vmatprep.subr.bf16.mxu0 0
    %2187 = vmatpush1.bf16.msra.mxu0 0
    %2188 = vmatprep.subr.bf16.mxu0 0
    %2189 = vmatpush1.bf16.msra.mxu0 0
    %2190 = vmatprep.subr.bf16.mxu0 0
    %2191 = vmatpush1.bf16.msra.mxu0 0
    %2192 = vmatprep.subr.bf16.mxu0 0
    %2193 = vmatpush1.bf16.msra.mxu0 0
    %2194 = vmatprep.subr.bf16.mxu0 0
    %2195 = vmatpush1.bf16.msra.mxu0 0
    %2196 = vmatprep.subr.bf16.mxu0 0
    %2197 = vmatpush1.bf16.msra.mxu0 0
    %2198 = vmatprep.subr.bf16.mxu0 0
    %2199 = vmatpush1.bf16.msra.mxu0 0
    %2200 = vmatprep.subr.bf16.mxu0 0
    %2201 = vmatpush1.bf16.msra.mxu0 0
    %2202 = vmatprep.subr.bf16.mxu0 0
    %2203 = vmatpush1.bf16.msra.mxu0 0
    %2204 = vmatprep.subr.bf16.mxu0 0
    %2205 = vmatpush1.bf16.msra.mxu0 0
    %2206 = vmatprep.subr.bf16.mxu0 0
    %2207 = vmatpush1.bf16.msra.mxu0 0
    %2208 = vmatprep.mubr.bf16.mxu0 0
    %2209 = vmatmul.mubr.bf16.gmra.mrb[0].mxu0 %v2027
    %v2210 = vpop.f32.mrb[0].mxu0
    %v2211 = vadd.f32 0.0, %v2210
    %v2212 = vpop.f32.mrb[0].mxu0
    %v2213 = vadd.f32 0.0, %v2212
    %v2214 = vpop.f32.mrb[0].mxu0
    %v2215 = vpop.f32.mrb[0].mxu0
    %2216 = vdwg.mxu0
    %v2217 = vadd.f32 %v1847, %v2088
    %v2218 = vadd.f32 %v1848, %v2090
    %v2219 = vadd.f32 %v1849, %v2129
    %v2220 = vadd.f32 %v1850, %v2131
    %v2221 = vadd.f32 %v1851, %v2170
    %v2222 = vadd.f32 %v1852, %v2172
    %v2223 = vadd.f32 %v1853, %v2211
    %v2224 = vadd.f32 %v1854, %v2213
    %s2225 = scalar_lea.vmem %s1, 1344
    %v2226 = vld [vmem:[%s2225] sm:$0xff]
    %v2227 = vld [vmem:[%s2225 + $0x8] sm:$0xff]
    %v2228 = vld [vmem:[%s2225 + $0x10] sm:$0xff]
    %v2229 = vld [vmem:[%s2225 + $0x18] sm:$0xff]
    %v2230 = vld [vmem:[%s2225 + $0x20] sm:$0xff]
    %v2231 = vld [vmem:[%s2225 + $0x28] sm:$0xff]
    %v2232 = vld [vmem:[%s2225 + $0x30] sm:$0xff]
    %v2233 = vld [vmem:[%s2225 + $0x38] sm:$0xff]
    %v2234 = vld [vmem:[%s2225 + $0x40] sm:$0xff]
    %v2235 = vld [vmem:[%s2225 + $0x48] sm:$0xff]
    %v2236 = vld [vmem:[%s2225 + $0x50] sm:$0xff]
    %v2237 = vld [vmem:[%s2225 + $0x58] sm:$0xff]
    %v2238 = vld [vmem:[%s2225 + $0x60] sm:$0xff]
    %v2239 = vld [vmem:[%s2225 + $0x68] sm:$0xff]
    %v2240 = vld [vmem:[%s2225 + $0x70] sm:$0xff]
    %v2241 = vld [vmem:[%s2225 + $0x78] sm:$0xff]
    %v2242 = vld [vmem:[%s2225 + $0x80] sm:$0xff]
    %v2243 = vld [vmem:[%s2225 + $0x88] sm:$0xff]
    %v2244 = vld [vmem:[%s2225 + $0x90] sm:$0xff]
    %v2245 = vld [vmem:[%s2225 + $0x98] sm:$0xff]
    %v2246 = vld [vmem:[%s2225 + $0xa0] sm:$0xff]
    %v2247 = vld [vmem:[%s2225 + $0xa8] sm:$0xff]
    %v2248 = vld [vmem:[%s2225 + $0xb0] sm:$0xff]
    %v2249 = vld [vmem:[%s2225 + $0xb8] sm:$0xff]
    %v2250 = vld [vmem:[%s2225 + $0xc0] sm:$0xff]
    %v2251 = vld [vmem:[%s2225 + $0xc8] sm:$0xff]
    %v2252 = vld [vmem:[%s2225 + $0xd0] sm:$0xff]
    %v2253 = vld [vmem:[%s2225 + $0xd8] sm:$0xff]
    %v2254 = vrot.slane %v1486, 2
    %v2283 = vunpack.c.l.b16 %v2226
    %v2284 = vunpack.c.h.b16 %v2226
    %v2285 = vunpack.c.l.b16 %v2227
    %v2286 = vunpack.c.h.b16 %v2227
    %v2287 = vunpack.c.l.b16 %v2228
    %v2288 = vunpack.c.h.b16 %v2228
    %v2289 = vunpack.c.l.b16 %v2229
    %v2290 = vunpack.c.h.b16 %v2229
    %v2291 = vunpack.c.l.b16 %v2230
    %v2292 = vunpack.c.h.b16 %v2230
    %v2293 = vunpack.c.l.b16 %v2231
    %v2294 = vunpack.c.h.b16 %v2231
    %v2295 = vunpack.c.l.b16 %v2232
    %v2296 = vunpack.c.h.b16 %v2232
    %v2297 = vunpack.c.l.b16 %v2233
    %v2298 = vunpack.c.h.b16 %v2233
    %v2299 = vunpack.c.l.b16 %v2234
    %v2300 = vunpack.c.h.b16 %v2234
    %v2301 = vunpack.c.l.b16 %v2235
    %v2302 = vunpack.c.h.b16 %v2235
    %v2303 = vunpack.c.l.b16 %v2236
    %v2304 = vunpack.c.h.b16 %v2236
    %v2305 = vunpack.c.l.b16 %v2237
    %v2306 = vunpack.c.h.b16 %v2237
    %v2307 = vunpack.c.l.b16 %v2238
    %v2308 = vunpack.c.h.b16 %v2238
    %v2309 = vunpack.c.l.b16 %v2239
    %v2310 = vunpack.c.h.b16 %v2239
    %v2311 = vunpack.c.l.b16 %v2240
    %v2312 = vunpack.c.h.b16 %v2240
    %v2313 = vunpack.c.l.b16 %v2241
    %v2314 = vunpack.c.h.b16 %v2241
    %v2315 = vunpack.c.l.b16 %v2242
    %v2316 = vunpack.c.h.b16 %v2242
    %v2317 = vunpack.c.l.b16 %v2243
    %v2318 = vunpack.c.h.b16 %v2243
    %v2319 = vunpack.c.l.b16 %v2244
    %v2320 = vunpack.c.h.b16 %v2244
    %v2321 = vunpack.c.l.b16 %v2245
    %v2322 = vunpack.c.h.b16 %v2245
    %v2323 = vunpack.c.l.b16 %v2246
    %v2324 = vunpack.c.h.b16 %v2246
    %v2325 = vunpack.c.l.b16 %v2247
    %v2326 = vunpack.c.h.b16 %v2247
    %v2327 = vunpack.c.l.b16 %v2248
    %v2328 = vunpack.c.h.b16 %v2248
    %v2329 = vunpack.c.l.b16 %v2249
    %v2330 = vunpack.c.h.b16 %v2249
    %v2331 = vunpack.c.l.b16 %v2250
    %v2332 = vunpack.c.h.b16 %v2250
    %v2333 = vunpack.c.l.b16 %v2251
    %v2334 = vunpack.c.h.b16 %v2251
    %v2335 = vunpack.c.l.b16 %v2252
    %v2336 = vunpack.c.h.b16 %v2252
    %v2337 = vunpack.c.l.b16 %v2253
    %v2338 = vunpack.c.h.b16 %v2253
    %v2339 = vpack.c.b16 %v2291, %v2283
    %v2340 = vpack.c.b16 %v2292, %v2284
    %v2341 = vpack.c.b16 %v2293, %v2285
    %v2342 = vpack.c.b16 %v2294, %v2286
    %v2343 = vpack.c.b16 %v2295, %v2287
    %v2344 = vpack.c.b16 %v2296, %v2288
    %v2345 = vpack.c.b16 %v2297, %v2289
    %v2346 = vpack.c.b16 %v2298, %v2290
    %v2347 = vpack.c.b16 %v2307, %v2299
    %v2348 = vpack.c.b16 %v2308, %v2300
    %v2349 = vpack.c.b16 %v2309, %v2301
    %v2350 = vpack.c.b16 %v2310, %v2302
    %v2351 = vpack.c.b16 %v2311, %v2303
    %v2352 = vpack.c.b16 %v2312, %v2304
    %v2353 = vpack.c.b16 %v2313, %v2305
    %v2354 = vpack.c.b16 %v2314, %v2306
    %v2355 = vpack.c.b16 %v2323, %v2315
    %v2356 = vpack.c.b16 %v2324, %v2316
    %v2357 = vpack.c.b16 %v2325, %v2317
    %v2358 = vpack.c.b16 %v2326, %v2318
    %v2359 = vpack.c.b16 %v2327, %v2319
    %v2360 = vpack.c.b16 %v2328, %v2320
    %v2361 = vpack.c.b16 %v2329, %v2321
    %v2362 = vpack.c.b16 %v2330, %v2322
    %v2363 = vpack.c.b16 %v2331, %v2331
    %v2364 = vpack.c.b16 %v2332, %v2332
    %v2365 = vpack.c.b16 %v2333, %v2333
    %v2366 = vpack.c.b16 %v2334, %v2334
    %v2367 = vpack.c.b16 %v2335, %v2335
    %v2368 = vpack.c.b16 %v2336, %v2336
    %v2369 = vpack.c.b16 %v2337, %v2337
    %v2370 = vpack.c.b16 %v2338, %v2338
    %v2396 = vsel %vm224, %v2254, 0
    %v2399 = vsel %vm228, %v2363, 0
    %v2402 = vsel %vm228, %v2364, 0
    %v2405 = vsel %vm228, %v2365, 0
    %v2408 = vsel %vm228, %v2366, 0
    %v2411 = vsel %vm228, %v2367, 0
    %v2414 = vsel %vm228, %v2368, 0
    %v2417 = vsel %vm228, %v2369, 0
    %v2420 = vsel %vm228, %v2370, 0
    %2422 = vmatprep.subr.bf16.mxu0 %v2340
    %2423 = vmatpush1.bf16.msra.mxu0 %v2339
    %2424 = vmatprep.subr.bf16.mxu0 %v2348
    %2425 = vmatpush1.bf16.msra.mxu0 %v2347
    %2426 = vmatprep.subr.bf16.mxu0 %v2356
    %2427 = vmatpush1.bf16.msra.mxu0 %v2355
    %2428 = vmatprep.subr.bf16.mxu0 %v2402
    %2429 = vmatpush1.bf16.msra.mxu0 %v2399
    %2430 = vmatprep.subr.bf16.mxu0 0
    %2431 = vmatpush1.bf16.msra.mxu0 0
    %2432 = vmatprep.subr.bf16.mxu0 0
    %2433 = vmatpush1.bf16.msra.mxu0 0
    %2434 = vmatprep.subr.bf16.mxu0 0
    %2435 = vmatpush1.bf16.msra.mxu0 0
    %2436 = vmatprep.subr.bf16.mxu0 0
    %2437 = vmatpush1.bf16.msra.mxu0 0
    %2438 = vmatprep.subr.bf16.mxu0 0
    %2439 = vmatpush1.bf16.msra.mxu0 0
    %2440 = vmatprep.subr.bf16.mxu0 0
    %2441 = vmatpush1.bf16.msra.mxu0 0
    %2442 = vmatprep.subr.bf16.mxu0 0
    %2443 = vmatpush1.bf16.msra.mxu0 0
    %2444 = vmatprep.subr.bf16.mxu0 0
    %2445 = vmatpush1.bf16.msra.mxu0 0
    %2446 = vmatprep.subr.bf16.mxu0 0
    %2447 = vmatpush1.bf16.msra.mxu0 0
    %2448 = vmatprep.subr.bf16.mxu0 0
    %2449 = vmatpush1.bf16.msra.mxu0 0
    %2450 = vmatprep.subr.bf16.mxu0 0
    %2451 = vmatpush1.bf16.msra.mxu0 0
    %2452 = vmatprep.subr.bf16.mxu0 0
    %2453 = vmatpush1.bf16.msra.mxu0 0
    %2454 = vmatprep.mubr.bf16.mxu0 0
    %2455 = vmatmul.mubr.bf16.gmra.mrb[0].mxu0 %v2396
    %v2456 = vpop.f32.mrb[0].mxu0
    %v2457 = vadd.f32 0.0, %v2456
    %v2458 = vpop.f32.mrb[0].mxu0
    %v2459 = vadd.f32 0.0, %v2458
    %v2460 = vpop.f32.mrb[0].mxu0
    %v2461 = vpop.f32.mrb[0].mxu0
    %2462 = vdwg.mxu0
    %2463 = vmatprep.subr.bf16.mxu0 %v2342
    %2464 = vmatpush1.bf16.msra.mxu0 %v2341
    %2465 = vmatprep.subr.bf16.mxu0 %v2350
    %2466 = vmatpush1.bf16.msra.mxu0 %v2349
    %2467 = vmatprep.subr.bf16.mxu0 %v2358
    %2468 = vmatpush1.bf16.msra.mxu0 %v2357
    %2469 = vmatprep.subr.bf16.mxu0 %v2408
    %2470 = vmatpush1.bf16.msra.mxu0 %v2405
    %2471 = vmatprep.subr.bf16.mxu0 0
    %2472 = vmatpush1.bf16.msra.mxu0 0
    %2473 = vmatprep.subr.bf16.mxu0 0
    %2474 = vmatpush1.bf16.msra.mxu0 0
    %2475 = vmatprep.subr.bf16.mxu0 0
    %2476 = vmatpush1.bf16.msra.mxu0 0
    %2477 = vmatprep.subr.bf16.mxu0 0
    %2478 = vmatpush1.bf16.msra.mxu0 0
    %2479 = vmatprep.subr.bf16.mxu0 0
    %2480 = vmatpush1.bf16.msra.mxu0 0
    %2481 = vmatprep.subr.bf16.mxu0 0
    %2482 = vmatpush1.bf16.msra.mxu0 0
    %2483 = vmatprep.subr.bf16.mxu0 0
    %2484 = vmatpush1.bf16.msra.mxu0 0
    %2485 = vmatprep.subr.bf16.mxu0 0
    %2486 = vmatpush1.bf16.msra.mxu0 0
    %2487 = vmatprep.subr.bf16.mxu0 0
    %2488 = vmatpush1.bf16.msra.mxu0 0
    %2489 = vmatprep.subr.bf16.mxu0 0
    %2490 = vmatpush1.bf16.msra.mxu0 0
    %2491 = vmatprep.subr.bf16.mxu0 0
    %2492 = vmatpush1.bf16.msra.mxu0 0
    %2493 = vmatprep.subr.bf16.mxu0 0
    %2494 = vmatpush1.bf16.msra.mxu0 0
    %2495 = vmatprep.mubr.bf16.mxu0 0
    %2496 = vmatmul.mubr.bf16.gmra.mrb[0].mxu0 %v2396
    %v2497 = vpop.f32.mrb[0].mxu0
    %v2498 = vadd.f32 0.0, %v2497
    %v2499 = vpop.f32.mrb[0].mxu0
    %v2500 = vadd.f32 0.0, %v2499
    %v2501 = vpop.f32.mrb[0].mxu0
    %v2502 = vpop.f32.mrb[0].mxu0
    %2503 = vdwg.mxu0
    %2504 = vmatprep.subr.bf16.mxu0 %v2344
    %2505 = vmatpush1.bf16.msra.mxu0 %v2343
    %2506 = vmatprep.subr.bf16.mxu0 %v2352
    %2507 = vmatpush1.bf16.msra.mxu0 %v2351
    %2508 = vmatprep.subr.bf16.mxu0 %v2360
    %2509 = vmatpush1.bf16.msra.mxu0 %v2359
    %2510 = vmatprep.subr.bf16.mxu0 %v2414
    %2511 = vmatpush1.bf16.msra.mxu0 %v2411
    %2512 = vmatprep.subr.bf16.mxu0 0
    %2513 = vmatpush1.bf16.msra.mxu0 0
    %2514 = vmatprep.subr.bf16.mxu0 0
    %2515 = vmatpush1.bf16.msra.mxu0 0
    %2516 = vmatprep.subr.bf16.mxu0 0
    %2517 = vmatpush1.bf16.msra.mxu0 0
    %2518 = vmatprep.subr.bf16.mxu0 0
    %2519 = vmatpush1.bf16.msra.mxu0 0
    %2520 = vmatprep.subr.bf16.mxu0 0
    %2521 = vmatpush1.bf16.msra.mxu0 0
    %2522 = vmatprep.subr.bf16.mxu0 0
    %2523 = vmatpush1.bf16.msra.mxu0 0
    %2524 = vmatprep.subr.bf16.mxu0 0
    %2525 = vmatpush1.bf16.msra.mxu0 0
    %2526 = vmatprep.subr.bf16.mxu0 0
    %2527 = vmatpush1.bf16.msra.mxu0 0
    %2528 = vmatprep.subr.bf16.mxu0 0
    %2529 = vmatpush1.bf16.msra.mxu0 0
    %2530 = vmatprep.subr.bf16.mxu0 0
    %2531 = vmatpush1.bf16.msra.mxu0 0
    %2532 = vmatprep.subr.bf16.mxu0 0
    %2533 = vmatpush1.bf16.msra.mxu0 0
    %2534 = vmatprep.subr.bf16.mxu0 0
    %2535 = vmatpush1.bf16.msra.mxu0 0
    %2536 = vmatprep.mubr.bf16.mxu0 0
    %2537 = vmatmul.mubr.bf16.gmra.mrb[0].mxu0 %v2396
    %v2538 = vpop.f32.mrb[0].mxu0
    %v2539 = vadd.f32 0.0, %v2538
    %v2540 = vpop.f32.mrb[0].mxu0
    %v2541 = vadd.f32 0.0, %v2540
    %v2542 = vpop.f32.mrb[0].mxu0
    %v2543 = vpop.f32.mrb[0].mxu0
    %2544 = vdwg.mxu0
    %2545 = vmatprep.subr.bf16.mxu0 %v2346
    %2546 = vmatpush1.bf16.msra.mxu0 %v2345
    %2547 = vmatprep.subr.bf16.mxu0 %v2354
    %2548 = vmatpush1.bf16.msra.mxu0 %v2353
    %2549 = vmatprep.subr.bf16.mxu0 %v2362
    %2550 = vmatpush1.bf16.msra.mxu0 %v2361
    %2551 = vmatprep.subr.bf16.mxu0 %v2420
    %2552 = vmatpush1.bf16.msra.mxu0 %v2417
    %2553 = vmatprep.subr.bf16.mxu0 0
    %2554 = vmatpush1.bf16.msra.mxu0 0
    %2555 = vmatprep.subr.bf16.mxu0 0
    %2556 = vmatpush1.bf16.msra.mxu0 0
    %2557 = vmatprep.subr.bf16.mxu0 0
    %2558 = vmatpush1.bf16.msra.mxu0 0
    %2559 = vmatprep.subr.bf16.mxu0 0
    %2560 = vmatpush1.bf16.msra.mxu0 0
    %2561 = vmatprep.subr.bf16.mxu0 0
    %2562 = vmatpush1.bf16.msra.mxu0 0
    %2563 = vmatprep.subr.bf16.mxu0 0
    %2564 = vmatpush1.bf16.msra.mxu0 0
    %2565 = vmatprep.subr.bf16.mxu0 0
    %2566 = vmatpush1.bf16.msra.mxu0 0
    %2567 = vmatprep.subr.bf16.mxu0 0
    %2568 = vmatpush1.bf16.msra.mxu0 0
    %2569 = vmatprep.subr.bf16.mxu0 0
    %2570 = vmatpush1.bf16.msra.mxu0 0
    %2571 = vmatprep.subr.bf16.mxu0 0
    %2572 = vmatpush1.bf16.msra.mxu0 0
    %2573 = vmatprep.subr.bf16.mxu0 0
    %2574 = vmatpush1.bf16.msra.mxu0 0
    %2575 = vmatprep.subr.bf16.mxu0 0
    %2576 = vmatpush1.bf16.msra.mxu0 0
    %2577 = vmatprep.mubr.bf16.mxu0 0
    %2578 = vmatmul.mubr.bf16.gmra.mrb[0].mxu0 %v2396
    %v2579 = vpop.f32.mrb[0].mxu0
    %v2580 = vadd.f32 0.0, %v2579
    %v2581 = vpop.f32.mrb[0].mxu0
    %v2582 = vadd.f32 0.0, %v2581
    %v2583 = vpop.f32.mrb[0].mxu0
    %v2584 = vpop.f32.mrb[0].mxu0
    %2585 = vdwg.mxu0
    %v2586 = vadd.f32 %v2217, %v2457
    %v2587 = vadd.f32 %v2218, %v2459
    %v2588 = vadd.f32 %v2219, %v2498
    %v2589 = vadd.f32 %v2220, %v2500
    %v2590 = vadd.f32 %v2221, %v2539
    %v2591 = vadd.f32 %v2222, %v2541
    %v2592 = vadd.f32 %v2223, %v2580
    %v2593 = vadd.f32 %v2224, %v2582
    %v2594 = vld [vmem:[%s2] sm:$0xff]
    %v2596 = vlaneseq
    %v2597 = vshrl.u32 %v2596, 7
    %v2598 = vsub.s32 0, %v2597
    %v2599 = vrot.slane %v2594, %v2598
    %v2600 = vlaneseq
    %v2601 = vshrl.u32 %v2600, 7
    %v2602 = vsub.s32 1, %v2601
    %v2603 = vrot.slane %v2594, %v2602
    %v2604 = vlaneseq
    %v2605 = vshrl.u32 %v2604, 7
    %v2606 = vsub.s32 2, %v2605
    %v2607 = vrot.slane %v2594, %v2606
    %v2608 = vlaneseq
    %v2609 = vshrl.u32 %v2608, 7
    %v2610 = vsub.s32 3, %v2609
    %v2611 = vrot.slane %v2594, %v2610
    %v2612 = vlaneseq
    %v2613 = vshrl.u32 %v2612, 7
    %v2614 = vsub.s32 4, %v2613
    %v2615 = vrot.slane %v2594, %v2614
    %v2616 = vlaneseq
    %v2617 = vshrl.u32 %v2616, 7
    %v2618 = vsub.s32 5, %v2617
    %v2619 = vrot.slane %v2594, %v2618
    %v2620 = vlaneseq
    %v2621 = vshrl.u32 %v2620, 7
    %v2622 = vsub.s32 6, %v2621
    %v2623 = vrot.slane %v2594, %v2622
    %v2624 = vlaneseq
    %v2625 = vshrl.u32 %v2624, 7
    %v2626 = vsub.s32 7, %v2625
    %v2627 = vrot.slane %v2594, %v2626
    %v2636 = vadd.f32 %v2586, %v2599
    %v2637 = vadd.f32 %v2587, %v2603
    %v2638 = vadd.f32 %v2588, %v2607
    %v2639 = vadd.f32 %v2589, %v2611
    %v2640 = vadd.f32 %v2590, %v2615
    %v2641 = vadd.f32 %v2591, %v2619
    %v2642 = vadd.f32 %v2592, %v2623
    %v2643 = vadd.f32 %v2593, %v2627
    %v2644 = vpack.c.bf16 %v2636, %v2636
    %v2645 = vpack.c.bf16 %v2637, %v2637
    %v2646 = vpack.c.bf16 %v2638, %v2638
    %v2647 = vpack.c.bf16 %v2639, %v2639
    %v2648 = vpack.c.bf16 %v2640, %v2640
    %v2649 = vpack.c.bf16 %v2641, %v2641
    %v2650 = vpack.c.bf16 %v2642, %v2642
    %v2651 = vpack.c.bf16 %v2643, %v2643
    %v2652 = vld [vmem:[%s3] sm:$0xf]
    %v2653 = vld [vmem:[%s3 + $0x4] sm:$0xf]
    %v2654 = vld [vmem:[%s3 + $0x8] sm:$0xf]
    %v2655 = vld [vmem:[%s3 + $0xc] sm:$0xf]
    %v2656 = vld [vmem:[%s3 + $0x10] sm:$0xf]
    %v2657 = vld [vmem:[%s3 + $0x14] sm:$0xf]
    %v2658 = vld [vmem:[%s3 + $0x18] sm:$0xf]
    %v2659 = vld [vmem:[%s3 + $0x1c] sm:$0xf]
    %v2660 = vld [vmem:[%s3 + $0x20] sm:$0xf]
    %v2661 = vld [vmem:[%s3 + $0x24] sm:$0xf]
    %v2662 = vld [vmem:[%s3 + $0x28] sm:$0xf]
    %v2663 = vld [vmem:[%s3 + $0x2c] sm:$0xf]
    %v2664 = vld [vmem:[%s3 + $0x30] sm:$0xf]
    %v2665 = vld [vmem:[%s3 + $0x34] sm:$0xf]
    %v2666 = vld [vmem:[%s3 + $0x38] sm:$0xf]
    %v2667 = vld [vmem:[%s3 + $0x3c] sm:$0xf]
    %v2668 = vld [vmem:[%s3 + $0x40] sm:$0xf]
    %v2669 = vld [vmem:[%s3 + $0x44] sm:$0xf]
    %v2670 = vld [vmem:[%s3 + $0x48] sm:$0xf]
    %v2671 = vld [vmem:[%s3 + $0x4c] sm:$0xf]
    %v2672 = vld [vmem:[%s3 + $0x50] sm:$0xf]
    %v2673 = vld [vmem:[%s3 + $0x54] sm:$0xf]
    %v2674 = vld [vmem:[%s3 + $0x58] sm:$0xf]
    %v2675 = vld [vmem:[%s3 + $0x5c] sm:$0xf]
    %v2676 = vld [vmem:[%s3 + $0x60] sm:$0xf]
    %v2677 = vld [vmem:[%s3 + $0x64] sm:$0xf]
    %v2678 = vld [vmem:[%s3 + $0x68] sm:$0xf]
    %v2679 = vld [vmem:[%s3 + $0x6c] sm:$0xf]
    %v2680 = vld [vmem:[%s3 + $0x70] sm:$0xf]
    %v2681 = vld [vmem:[%s3 + $0x74] sm:$0xf]
    %v2682 = vld [vmem:[%s3 + $0x78] sm:$0xf]
    %v2683 = vld [vmem:[%s3 + $0x7c] sm:$0xf]
    %v2684 = vld [vmem:[%s3 + $0x80] sm:$0xf]
    %v2685 = vld [vmem:[%s3 + $0x84] sm:$0xf]
    %v2686 = vld [vmem:[%s3 + $0x88] sm:$0xf]
    %v2687 = vld [vmem:[%s3 + $0x8c] sm:$0xf]
    %v2688 = vld [vmem:[%s3 + $0x90] sm:$0xf]
    %v2689 = vld [vmem:[%s3 + $0x94] sm:$0xf]
    %v2690 = vld [vmem:[%s3 + $0x98] sm:$0xf]
    %v2691 = vld [vmem:[%s3 + $0x9c] sm:$0xf]
    %v2692 = vld [vmem:[%s3 + $0xa0] sm:$0xf]
    %v2693 = vld [vmem:[%s3 + $0xa4] sm:$0xf]
    %v2694 = vld [vmem:[%s3 + $0xa8] sm:$0xf]
    %v2695 = vld [vmem:[%s3 + $0xac] sm:$0xf]
    %v2696 = vld [vmem:[%s3 + $0xb0] sm:$0xf]
    %v2697 = vld [vmem:[%s3 + $0xb4] sm:$0xf]
    %v2698 = vld [vmem:[%s3 + $0xb8] sm:$0xf]
    %v2699 = vld [vmem:[%s3 + $0xbc] sm:$0xf]
    %v2700 = vld [vmem:[%s3 + $0xc0] sm:$0xf]
    %v2701 = vld [vmem:[%s3 + $0xc4] sm:$0xf]
    %v2702 = vld [vmem:[%s3 + $0xc8] sm:$0xf]
    %v2703 = vld [vmem:[%s3 + $0xcc] sm:$0xf]
    %v2704 = vld [vmem:[%s3 + $0xd0] sm:$0xf]
    %v2705 = vld [vmem:[%s3 + $0xd4] sm:$0xf]
    %v2706 = vld [vmem:[%s3 + $0xd8] sm:$0xf]
    %v2707 = vld [vmem:[%s3 + $0xdc] sm:$0xf]
    %v2708 = vld [vmem:[%s3 + $0xe0] sm:$0xf]
    %v2709 = vld [vmem:[%s3 + $0xe4] sm:$0xf]
    %v2710 = vld [vmem:[%s3 + $0xe8] sm:$0xf]
    %v2711 = vld [vmem:[%s3 + $0xec] sm:$0xf]
    %v2712 = vld [vmem:[%s3 + $0xf0] sm:$0xf]
    %v2713 = vld [vmem:[%s3 + $0xf4] sm:$0xf]
    %v2714 = vld [vmem:[%s3 + $0xf8] sm:$0xf]
    %v2715 = vld [vmem:[%s3 + $0xfc] sm:$0xf]
    %v2716 = vld [vmem:[%s3 + $0x100] sm:$0xf]
    %v2717 = vld [vmem:[%s3 + $0x104] sm:$0xf]
    %v2718 = vld [vmem:[%s3 + $0x108] sm:$0xf]
    %v2719 = vld [vmem:[%s3 + $0x10c] sm:$0xf]
    %v2720 = vld [vmem:[%s3 + $0x110] sm:$0xf]
    %v2721 = vld [vmem:[%s3 + $0x114] sm:$0xf]
    %v2722 = vld [vmem:[%s3 + $0x118] sm:$0xf]
    %v2723 = vld [vmem:[%s3 + $0x11c] sm:$0xf]
    %v2724 = vld [vmem:[%s3 + $0x120] sm:$0xf]
    %v2725 = vld [vmem:[%s3 + $0x124] sm:$0xf]
    %v2726 = vld [vmem:[%s3 + $0x128] sm:$0xf]
    %v2727 = vld [vmem:[%s3 + $0x12c] sm:$0xf]
    %v2728 = vld [vmem:[%s3 + $0x130] sm:$0xf]
    %v2729 = vld [vmem:[%s3 + $0x134] sm:$0xf]
    %v2730 = vld [vmem:[%s3 + $0x138] sm:$0xf]
    %v2731 = vld [vmem:[%s3 + $0x13c] sm:$0xf]
    %v2732 = vld [vmem:[%s3 + $0x140] sm:$0xf]
    %v2733 = vld [vmem:[%s3 + $0x144] sm:$0xf]
    %v2734 = vld [vmem:[%s3 + $0x148] sm:$0xf]
    %v2735 = vld [vmem:[%s3 + $0x14c] sm:$0xf]
    %v2736 = vld [vmem:[%s3 + $0x150] sm:$0xf]
    %v2737 = vld [vmem:[%s3 + $0x154] sm:$0xf]
    %v2738 = vld [vmem:[%s3 + $0x158] sm:$0xf]
    %v2739 = vld [vmem:[%s3 + $0x15c] sm:$0xf]
    %v2740 = vld [vmem:[%s3 + $0x160] sm:$0xf]
    %v2741 = vld [vmem:[%s3 + $0x164] sm:$0xf]
    %v2742 = vld [vmem:[%s3 + $0x168] sm:$0xf]
    %v2743 = vld [vmem:[%s3 + $0x16c] sm:$0xf]
    %v2744 = vld [vmem:[%s3 + $0x170] sm:$0xf]
    %v2745 = vld [vmem:[%s3 + $0x174] sm:$0xf]
    %v2746 = vld [vmem:[%s3 + $0x178] sm:$0xf]
    %v2747 = vld [vmem:[%s3 + $0x17c] sm:$0xf]
    %v2748 = vld [vmem:[%s3 + $0x180] sm:$0xf]
    %v2749 = vld [vmem:[%s3 + $0x184] sm:$0xf]
    %v2750 = vld [vmem:[%s3 + $0x188] sm:$0xf]
    %v2751 = vld [vmem:[%s3 + $0x18c] sm:$0xf]
    %v2752 = vld [vmem:[%s3 + $0x190] sm:$0xf]
    %v2753 = vld [vmem:[%s3 + $0x194] sm:$0xf]
    %v2754 = vld [vmem:[%s3 + $0x198] sm:$0xf]
    %v2755 = vld [vmem:[%s3 + $0x19c] sm:$0xf]
    %v2756 = vld [vmem:[%s3 + $0x1a0] sm:$0xf]
    %v2757 = vld [vmem:[%s3 + $0x1a4] sm:$0xf]
    %v2758 = vld [vmem:[%s3 + $0x1a8] sm:$0xf]
    %v2759 = vld [vmem:[%s3 + $0x1ac] sm:$0xf]
    %v2760 = vld [vmem:[%s3 + $0x1b0] sm:$0xf]
    %v2761 = vld [vmem:[%s3 + $0x1b4] sm:$0xf]
    %v2762 = vld [vmem:[%s3 + $0x1b8] sm:$0xf]
    %v2763 = vld [vmem:[%s3 + $0x1bc] sm:$0xf]
    %v2764 = vld [vmem:[%s3 + $0x1c0] sm:$0xf]
    %v2765 = vld [vmem:[%s3 + $0x1c4] sm:$0xf]
    %v2766 = vld [vmem:[%s3 + $0x1c8] sm:$0xf]
    %v2767 = vld [vmem:[%s3 + $0x1cc] sm:$0xf]
    %v2768 = vld [vmem:[%s3 + $0x1d0] sm:$0xf]
    %v2769 = vld [vmem:[%s3 + $0x1d4] sm:$0xf]
    %v2770 = vld [vmem:[%s3 + $0x1d8] sm:$0xf]
    %v2771 = vld [vmem:[%s3 + $0x1dc] sm:$0xf]
    %v2772 = vld [vmem:[%s3 + $0x1e0] sm:$0xf]
    %v2773 = vld [vmem:[%s3 + $0x1e4] sm:$0xf]
    %v2774 = vld [vmem:[%s3 + $0x1e8] sm:$0xf]
    %v2775 = vld [vmem:[%s3 + $0x1ec] sm:$0xf]
    %v2776 = vld [vmem:[%s3 + $0x1f0] sm:$0xf]
    %v2777 = vld [vmem:[%s4] sm:$0x1]
    %v2779 = vlaneseq
    %v2780 = vshrl.u32 %v2779, 7
    %v2781 = vsub.s32 0, %v2780
    %v2782 = vrot.slane %v2777, %v2781
    %v2909 = vunpack.c.l.b16 %v2652
    %v2910 = vunpack.c.l.b16 %v2653
    %v2911 = vunpack.c.l.b16 %v2654
    %v2912 = vunpack.c.l.b16 %v2655
    %v2913 = vunpack.c.l.b16 %v2656
    %v2914 = vunpack.c.l.b16 %v2657
    %v2915 = vunpack.c.l.b16 %v2658
    %v2916 = vunpack.c.l.b16 %v2659
    %v2917 = vunpack.c.l.b16 %v2660
    %v2918 = vunpack.c.l.b16 %v2661
    %v2919 = vunpack.c.l.b16 %v2662
    %v2920 = vunpack.c.l.b16 %v2663
    %v2921 = vunpack.c.l.b16 %v2664
    %v2922 = vunpack.c.l.b16 %v2665
    %v2923 = vunpack.c.l.b16 %v2666
    %v2924 = vunpack.c.l.b16 %v2667
    %v2925 = vunpack.c.l.b16 %v2668
    %v2926 = vunpack.c.l.b16 %v2669
    %v2927 = vunpack.c.l.b16 %v2670
    %v2928 = vunpack.c.l.b16 %v2671
    %v2929 = vunpack.c.l.b16 %v2672
    %v2930 = vunpack.c.l.b16 %v2673
    %v2931 = vunpack.c.l.b16 %v2674
    %v2932 = vunpack.c.l.b16 %v2675
    %v2933 = vunpack.c.l.b16 %v2676
    %v2934 = vunpack.c.l.b16 %v2677
    %v2935 = vunpack.c.l.b16 %v2678
    %v2936 = vunpack.c.l.b16 %v2679
    %v2937 = vunpack.c.l.b16 %v2680
    %v2938 = vunpack.c.l.b16 %v2681
    %v2939 = vunpack.c.l.b16 %v2682
    %v2940 = vunpack.c.l.b16 %v2683
    %v2941 = vunpack.c.l.b16 %v2684
    %v2942 = vunpack.c.l.b16 %v2685
    %v2943 = vunpack.c.l.b16 %v2686
    %v2944 = vunpack.c.l.b16 %v2687
    %v2945 = vunpack.c.l.b16 %v2688
    %v2946 = vunpack.c.l.b16 %v2689
    %v2947 = vunpack.c.l.b16 %v2690
    %v2948 = vunpack.c.l.b16 %v2691
    %v2949 = vunpack.c.l.b16 %v2692
    %v2950 = vunpack.c.l.b16 %v2693
    %v2951 = vunpack.c.l.b16 %v2694
    %v2952 = vunpack.c.l.b16 %v2695
    %v2953 = vunpack.c.l.b16 %v2696
    %v2954 = vunpack.c.l.b16 %v2697
    %v2955 = vunpack.c.l.b16 %v2698
    %v2956 = vunpack.c.l.b16 %v2699
    %v2957 = vunpack.c.l.b16 %v2700
    %v2958 = vunpack.c.l.b16 %v2701
    %v2959 = vunpack.c.l.b16 %v2702
    %v2960 = vunpack.c.l.b16 %v2703
    %v2961 = vunpack.c.l.b16 %v2704
    %v2962 = vunpack.c.l.b16 %v2705
    %v2963 = vunpack.c.l.b16 %v2706
    %v2964 = vunpack.c.l.b16 %v2707
    %v2965 = vunpack.c.l.b16 %v2708
    %v2966 = vunpack.c.l.b16 %v2709
    %v2967 = vunpack.c.l.b16 %v2710
    %v2968 = vunpack.c.l.b16 %v2711
    %v2969 = vunpack.c.l.b16 %v2712
    %v2970 = vunpack.c.l.b16 %v2713
    %v2971 = vunpack.c.l.b16 %v2714
    %v2972 = vunpack.c.l.b16 %v2715
    %v2973 = vunpack.c.l.b16 %v2716
    %v2974 = vunpack.c.l.b16 %v2717
    %v2975 = vunpack.c.l.b16 %v2718
    %v2976 = vunpack.c.l.b16 %v2719
    %v2977 = vunpack.c.l.b16 %v2720
    %v2978 = vunpack.c.l.b16 %v2721
    %v2979 = vunpack.c.l.b16 %v2722
    %v2980 = vunpack.c.l.b16 %v2723
    %v2981 = vunpack.c.l.b16 %v2724
    %v2982 = vunpack.c.l.b16 %v2725
    %v2983 = vunpack.c.l.b16 %v2726
    %v2984 = vunpack.c.l.b16 %v2727
    %v2985 = vunpack.c.l.b16 %v2728
    %v2986 = vunpack.c.l.b16 %v2729
    %v2987 = vunpack.c.l.b16 %v2730
    %v2988 = vunpack.c.l.b16 %v2731
    %v2989 = vunpack.c.l.b16 %v2732
    %v2990 = vunpack.c.l.b16 %v2733
    %v2991 = vunpack.c.l.b16 %v2734
    %v2992 = vunpack.c.l.b16 %v2735
    %v2993 = vunpack.c.l.b16 %v2736
    %v2994 = vunpack.c.l.b16 %v2737
    %v2995 = vunpack.c.l.b16 %v2738
    %v2996 = vunpack.c.l.b16 %v2739
    %v2997 = vunpack.c.l.b16 %v2740
    %v2998 = vunpack.c.l.b16 %v2741
    %v2999 = vunpack.c.l.b16 %v2742
    %v3000 = vunpack.c.l.b16 %v2743
    %v3001 = vunpack.c.l.b16 %v2744
    %v3002 = vunpack.c.l.b16 %v2745
    %v3003 = vunpack.c.l.b16 %v2746
    %v3004 = vunpack.c.l.b16 %v2747
    %v3005 = vunpack.c.l.b16 %v2748
    %v3006 = vunpack.c.l.b16 %v2749
    %v3007 = vunpack.c.l.b16 %v2750
    %v3008 = vunpack.c.l.b16 %v2751
    %v3009 = vunpack.c.l.b16 %v2752
    %v3010 = vunpack.c.l.b16 %v2753
    %v3011 = vunpack.c.l.b16 %v2754
    %v3012 = vunpack.c.l.b16 %v2755
    %v3013 = vunpack.c.l.b16 %v2756
    %v3014 = vunpack.c.l.b16 %v2757
    %v3015 = vunpack.c.l.b16 %v2758
    %v3016 = vunpack.c.l.b16 %v2759
    %v3017 = vunpack.c.l.b16 %v2760
    %v3018 = vunpack.c.l.b16 %v2761
    %v3019 = vunpack.c.l.b16 %v2762
    %v3020 = vunpack.c.l.b16 %v2763
    %v3021 = vunpack.c.l.b16 %v2764
    %v3022 = vunpack.c.l.b16 %v2765
    %v3023 = vunpack.c.l.b16 %v2766
    %v3024 = vunpack.c.l.b16 %v2767
    %v3025 = vunpack.c.l.b16 %v2768
    %v3026 = vunpack.c.l.b16 %v2769
    %v3027 = vunpack.c.l.b16 %v2770
    %v3028 = vunpack.c.l.b16 %v2771
    %v3029 = vunpack.c.l.b16 %v2772
    %v3030 = vunpack.c.l.b16 %v2773
    %v3031 = vunpack.c.l.b16 %v2774
    %v3032 = vunpack.c.l.b16 %v2775
    %v3033 = vunpack.c.l.b16 %v2776
    %v3034 = vpack.c.b16 %v2910, %v2909
    %v3035 = vpack.c.b16 %v2912, %v2911
    %v3036 = vpack.c.b16 %v2914, %v2913
    %v3037 = vpack.c.b16 %v2916, %v2915
    %v3038 = vpack.c.b16 %v2918, %v2917
    %v3039 = vpack.c.b16 %v2920, %v2919
    %v3040 = vpack.c.b16 %v2922, %v2921
    %v3041 = vpack.c.b16 %v2924, %v2923
    %v3042 = vpack.c.b16 %v2926, %v2925
    %v3043 = vpack.c.b16 %v2928, %v2927
    %v3044 = vpack.c.b16 %v2930, %v2929
    %v3045 = vpack.c.b16 %v2932, %v2931
    %v3046 = vpack.c.b16 %v2934, %v2933
    %v3047 = vpack.c.b16 %v2936, %v2935
    %v3048 = vpack.c.b16 %v2938, %v2937
    %v3049 = vpack.c.b16 %v2940, %v2939
    %v3050 = vpack.c.b16 %v2942, %v2941
    %v3051 = vpack.c.b16 %v2944, %v2943
    %v3052 = vpack.c.b16 %v2946, %v2945
    %v3053 = vpack.c.b16 %v2948, %v2947
    %v3054 = vpack.c.b16 %v2950, %v2949
    %v3055 = vpack.c.b16 %v2952, %v2951
    %v3056 = vpack.c.b16 %v2954, %v2953
    %v3057 = vpack.c.b16 %v2956, %v2955
    %v3058 = vpack.c.b16 %v2958, %v2957
    %v3059 = vpack.c.b16 %v2960, %v2959
    %v3060 = vpack.c.b16 %v2962, %v2961
    %v3061 = vpack.c.b16 %v2964, %v2963
    %v3062 = vpack.c.b16 %v2966, %v2965
    %v3063 = vpack.c.b16 %v2968, %v2967
    %v3064 = vpack.c.b16 %v2970, %v2969
    %v3065 = vpack.c.b16 %v2972, %v2971
    %v3066 = vpack.c.b16 %v2974, %v2973
    %v3067 = vpack.c.b16 %v2976, %v2975
    %v3068 = vpack.c.b16 %v2978, %v2977
    %v3069 = vpack.c.b16 %v2980, %v2979
    %v3070 = vpack.c.b16 %v2982, %v2981
    %v3071 = vpack.c.b16 %v2984, %v2983
    %v3072 = vpack.c.b16 %v2986, %v2985
    %v3073 = vpack.c.b16 %v2988, %v2987
    %v3074 = vpack.c.b16 %v2990, %v2989
    %v3075 = vpack.c.b16 %v2992, %v2991
    %v3076 = vpack.c.b16 %v2994, %v2993
    %v3077 = vpack.c.b16 %v2996, %v2995
    %v3078 = vpack.c.b16 %v2998, %v2997
    %v3079 = vpack.c.b16 %v3000, %v2999
    %v3080 = vpack.c.b16 %v3002, %v3001
    %v3081 = vpack.c.b16 %v3004, %v3003
    %v3082 = vpack.c.b16 %v3006, %v3005
    %v3083 = vpack.c.b16 %v3008, %v3007
    %v3084 = vpack.c.b16 %v3010, %v3009
    %v3085 = vpack.c.b16 %v3012, %v3011
    %v3086 = vpack.c.b16 %v3014, %v3013
    %v3087 = vpack.c.b16 %v3016, %v3015
    %v3088 = vpack.c.b16 %v3018, %v3017
    %v3089 = vpack.c.b16 %v3020, %v3019
    %v3090 = vpack.c.b16 %v3022, %v3021
    %v3091 = vpack.c.b16 %v3024, %v3023
    %v3092 = vpack.c.b16 %v3026, %v3025
    %v3093 = vpack.c.b16 %v3028, %v3027
    %v3094 = vpack.c.b16 %v3030, %v3029
    %v3095 = vpack.c.b16 %v3032, %v3031
    %v3096 = vpack.c.b16 %v3033, %v3033
    %vm3159 = vcmask 850944
    %v3161 = vsel %vm3159, %v2651, 0
    %v3164 = vsel %vm228, %v3096, 0
    %3166 = vmatprep.subr.bf16.mxu0 0
    %3167 = vmatpush1.bf16.msra.mxu0 %v3034
    %3168 = vmatprep.subr.bf16.mxu0 0
    %3169 = vmatpush1.bf16.msra.mxu0 %v3035
    %3170 = vmatprep.subr.bf16.mxu0 0
    %3171 = vmatpush1.bf16.msra.mxu0 %v3036
    %3172 = vmatprep.subr.bf16.mxu0 0
    %3173 = vmatpush1.bf16.msra.mxu0 %v3037
    %3174 = vmatprep.subr.bf16.mxu0 0
    %3175 = vmatpush1.bf16.msra.mxu0 %v3038
    %3176 = vmatprep.subr.bf16.mxu0 0
    %3177 = vmatpush1.bf16.msra.mxu0 %v3039
    %3178 = vmatprep.subr.bf16.mxu0 0
    %3179 = vmatpush1.bf16.msra.mxu0 %v3040
    %3180 = vmatprep.subr.bf16.mxu0 0
    %3181 = vmatpush1.bf16.msra.mxu0 %v3041
    %3182 = vmatprep.subr.bf16.mxu0 0
    %3183 = vmatpush1.bf16.msra.mxu0 %v3042
    %3184 = vmatprep.subr.bf16.mxu0 0
    %3185 = vmatpush1.bf16.msra.mxu0 %v3043
    %3186 = vmatprep.subr.bf16.mxu0 0
    %3187 = vmatpush1.bf16.msra.mxu0 %v3044
    %3188 = vmatprep.subr.bf16.mxu0 0
    %3189 = vmatpush1.bf16.msra.mxu0 %v3045
    %3190 = vmatprep.subr.bf16.mxu0 0
    %3191 = vmatpush1.bf16.msra.mxu0 %v3046
    %3192 = vmatprep.subr.bf16.mxu0 0
    %3193 = vmatpush1.bf16.msra.mxu0 %v3047
    %3194 = vmatprep.subr.bf16.mxu0 0
    %3195 = vmatpush1.bf16.msra.mxu0 %v3048
    %3196 = vmatprep.subr.bf16.mxu0 0
    %3197 = vmatpush1.bf16.msra.mxu0 %v3049
    %3198 = vmatprep.mubr.bf16.mxu0 %v2645
    %3199 = vmatmul.mubr.bf16.gmra.mrb[0].mxu0 %v2644
    %v3200 = vpop.f32.mrb[0].mxu0
    %v3201 = vadd.f32 %v2782, %v3200
    %v3202 = vpop.f32.mrb[0].mxu0
    %v3203 = vpop.f32.mrb[0].mxu0
    %v3204 = vpop.f32.mrb[0].mxu0
    %3205 = vdwg.mxu0
    %3206 = vmatprep.subr.bf16.mxu0 0
    %3207 = vmatpush1.bf16.msra.mxu0 %v3050
    %3208 = vmatprep.subr.bf16.mxu0 0
    %3209 = vmatpush1.bf16.msra.mxu0 %v3051
    %3210 = vmatprep.subr.bf16.mxu0 0
    %3211 = vmatpush1.bf16.msra.mxu0 %v3052
    %3212 = vmatprep.subr.bf16.mxu0 0
    %3213 = vmatpush1.bf16.msra.mxu0 %v3053
    %3214 = vmatprep.subr.bf16.mxu0 0
    %3215 = vmatpush1.bf16.msra.mxu0 %v3054
    %3216 = vmatprep.subr.bf16.mxu0 0
    %3217 = vmatpush1.bf16.msra.mxu0 %v3055
    %3218 = vmatprep.subr.bf16.mxu0 0
    %3219 = vmatpush1.bf16.msra.mxu0 %v3056
    %3220 = vmatprep.subr.bf16.mxu0 0
    %3221 = vmatpush1.bf16.msra.mxu0 %v3057
    %3222 = vmatprep.subr.bf16.mxu0 0
    %3223 = vmatpush1.bf16.msra.mxu0 %v3058
    %3224 = vmatprep.subr.bf16.mxu0 0
    %3225 = vmatpush1.bf16.msra.mxu0 %v3059
    %3226 = vmatprep.subr.bf16.mxu0 0
    %3227 = vmatpush1.bf16.msra.mxu0 %v3060
    %3228 = vmatprep.subr.bf16.mxu0 0
    %3229 = vmatpush1.bf16.msra.mxu0 %v3061
    %3230 = vmatprep.subr.bf16.mxu0 0
    %3231 = vmatpush1.bf16.msra.mxu0 %v3062
    %3232 = vmatprep.subr.bf16.mxu0 0
    %3233 = vmatpush1.bf16.msra.mxu0 %v3063
    %3234 = vmatprep.subr.bf16.mxu0 0
    %3235 = vmatpush1.bf16.msra.mxu0 %v3064
    %3236 = vmatprep.subr.bf16.mxu0 0
    %3237 = vmatpush1.bf16.msra.mxu0 %v3065
    %3238 = vmatprep.mubr.bf16.mxu0 %v2647
    %3239 = vmatmul.mubr.bf16.gmra.mrb[0].mxu0 %v2646
    %v3240 = vpop.f32.mrb[0].mxu0
    %v3241 = vadd.f32 %v3201, %v3240
    %v3242 = vpop.f32.mrb[0].mxu0
    %v3243 = vpop.f32.mrb[0].mxu0
    %v3244 = vpop.f32.mrb[0].mxu0
    %3245 = vdwg.mxu0
    %3246 = vmatprep.subr.bf16.mxu0 0
    %3247 = vmatpush1.bf16.msra.mxu0 %v3066
    %3248 = vmatprep.subr.bf16.mxu0 0
    %3249 = vmatpush1.bf16.msra.mxu0 %v3067
    %3250 = vmatprep.subr.bf16.mxu0 0
    %3251 = vmatpush1.bf16.msra.mxu0 %v3068
    %3252 = vmatprep.subr.bf16.mxu0 0
    %3253 = vmatpush1.bf16.msra.mxu0 %v3069
    %3254 = vmatprep.subr.bf16.mxu0 0
    %3255 = vmatpush1.bf16.msra.mxu0 %v3070
    %3256 = vmatprep.subr.bf16.mxu0 0
    %3257 = vmatpush1.bf16.msra.mxu0 %v3071
    %3258 = vmatprep.subr.bf16.mxu0 0
    %3259 = vmatpush1.bf16.msra.mxu0 %v3072
    %3260 = vmatprep.subr.bf16.mxu0 0
    %3261 = vmatpush1.bf16.msra.mxu0 %v3073
    %3262 = vmatprep.subr.bf16.mxu0 0
    %3263 = vmatpush1.bf16.msra.mxu0 %v3074
    %3264 = vmatprep.subr.bf16.mxu0 0
    %3265 = vmatpush1.bf16.msra.mxu0 %v3075
    %3266 = vmatprep.subr.bf16.mxu0 0
    %3267 = vmatpush1.bf16.msra.mxu0 %v3076
    %3268 = vmatprep.subr.bf16.mxu0 0
    %3269 = vmatpush1.bf16.msra.mxu0 %v3077
    %3270 = vmatprep.subr.bf16.mxu0 0
    %3271 = vmatpush1.bf16.msra.mxu0 %v3078
    %3272 = vmatprep.subr.bf16.mxu0 0
    %3273 = vmatpush1.bf16.msra.mxu0 %v3079
    %3274 = vmatprep.subr.bf16.mxu0 0
    %3275 = vmatpush1.bf16.msra.mxu0 %v3080
    %3276 = vmatprep.subr.bf16.mxu0 0
    %3277 = vmatpush1.bf16.msra.mxu0 %v3081
    %3278 = vmatprep.mubr.bf16.mxu0 %v2649
    %3279 = vmatmul.mubr.bf16.gmra.mrb[0].mxu0 %v2648
    %v3280 = vpop.f32.mrb[0].mxu0
    %v3281 = vadd.f32 %v3241, %v3280
    %v3282 = vpop.f32.mrb[0].mxu0
    %v3283 = vpop.f32.mrb[0].mxu0
    %v3284 = vpop.f32.mrb[0].mxu0
    %3285 = vdwg.mxu0
    %3286 = vmatprep.subr.bf16.mxu0 0
    %3287 = vmatpush1.bf16.msra.mxu0 %v3082
    %3288 = vmatprep.subr.bf16.mxu0 0
    %3289 = vmatpush1.bf16.msra.mxu0 %v3083
    %3290 = vmatprep.subr.bf16.mxu0 0
    %3291 = vmatpush1.bf16.msra.mxu0 %v3084
    %3292 = vmatprep.subr.bf16.mxu0 0
    %3293 = vmatpush1.bf16.msra.mxu0 %v3085
    %3294 = vmatprep.subr.bf16.mxu0 0
    %3295 = vmatpush1.bf16.msra.mxu0 %v3086
    %3296 = vmatprep.subr.bf16.mxu0 0
    %3297 = vmatpush1.bf16.msra.mxu0 %v3087
    %3298 = vmatprep.subr.bf16.mxu0 0
    %3299 = vmatpush1.bf16.msra.mxu0 %v3088
    %3300 = vmatprep.subr.bf16.mxu0 0
    %3301 = vmatpush1.bf16.msra.mxu0 %v3089
    %3302 = vmatprep.subr.bf16.mxu0 0
    %3303 = vmatpush1.bf16.msra.mxu0 %v3090
    %3304 = vmatprep.subr.bf16.mxu0 0
    %3305 = vmatpush1.bf16.msra.mxu0 %v3091
    %3306 = vmatprep.subr.bf16.mxu0 0
    %3307 = vmatpush1.bf16.msra.mxu0 %v3092
    %3308 = vmatprep.subr.bf16.mxu0 0
    %3309 = vmatpush1.bf16.msra.mxu0 %v3093
    %3310 = vmatprep.subr.bf16.mxu0 0
    %3311 = vmatpush1.bf16.msra.mxu0 %v3094
    %3312 = vmatprep.subr.bf16.mxu0 0
    %3313 = vmatpush1.bf16.msra.mxu0 %v3095
    %3314 = vmatprep.subr.bf16.mxu0 0
    %3315 = vmatpush1.bf16.msra.mxu0 %v3164
    %3316 = vmatprep.subr.bf16.mxu0 0
    %3317 = vmatpush1.bf16.msra.mxu0 0
    %3318 = vmatprep.mubr.bf16.mxu0 %v3161
    %3319 = vmatmul.mubr.bf16.gmra.mrb[0].mxu0 %v2650
    %v3320 = vpop.f32.mrb[0].mxu0
    %v3321 = vadd.f32 %v3281, %v3320
    %v3322 = vpop.f32.mrb[0].mxu0
    %v3323 = vpop.f32.mrb[0].mxu0
    %v3324 = vpop.f32.mrb[0].mxu0
    %3325 = vdwg.mxu0
    %vm3326 = vcmask 74752
    %3327 = vst.msk [vmem:[#allocation2] sm:$0x3] %vm3326, %v3321
    // Predicated region
    $region22: #{convnet_forward.5} parent=1 // pred_check
      _
    $region23: #{convnet_forward.5} parent=1 // pred_check_branch
      %3329 = sbr.rel (0) target = $region25
    $region24: #{convnet_forward.5} parent=1 // pred_region
      %s3331 = ssub.s32 32, 32
      %3332 = vsyncadd [#allocation3], %s3331
      %s3334 = sshll.u32 [#allocation2], 4
      %s3335 = int_to_ptr.vmem [resolvable:$true] %s3334
      %3337 = dma.vmem_to_hbm [thread:$0]  %s3335, 32, %s5, [#allocation3]
    $region25: #{convnet_forward.5} parent=1 // pred_fallthru
      _
    // Predicated region
    $region26: #{convnet_forward.5} parent=1 // pred_check
      _
    $region27: #{convnet_forward.5} parent=1 // pred_check_branch
      %3339 = sbr.rel (0) target = $region29
    $region28: #{convnet_forward.5} parent=1 // pred_region
      %3340 = dma.done [#allocation3], 32
    $region29: #{convnet_forward.5} parent=1 // pred_fallthru
      _
    %3341 = vsyncpa [#allocation3], 1

</llo_original>
